<compile_context>
chip_gen: v5e
topology: v5e:2x2
jax: 0.10.0
libtpu: 0.0.40
codegen_flags: <defaults>
</compile_context>

<pallas_src>
import jax
import jax.numpy as jnp
from jax.experimental import pallas as pl
from jax.experimental.pallas import tpu as pltpu


# ---------------------------------------------------------------------------
# Fused Pallas kernel: whole BlockABranch for `nb` batch elements per grid step
# ---------------------------------------------------------------------------
def _block_a_branch_kernel(
    x_ref,                                # (NB, H, W, 384) NHWC input block
    we_ref, se_ref, be_ref,               # fused entry 1x1: (384,96), (1,96)x2
    w01_ref, s01_ref, b01_ref,            # branch0 3x3 #1:  (288,48), (1,48)x2
    w02_ref, s02_ref, b02_ref,            # branch0 3x3 #2:  (432,64), (1,64)x2
    w11_ref, s11_ref, b11_ref,            # branch1 3x3:     (288,32), (1,32)x2
    ws_ref, ss_ref, bs_ref,               # stem 1x1:        (128,384),(1,384)x2
    o_ref,                                # (NB, H, W, 384) output block
    y_sc,                                 # VMEM (M, 96)   merged-entry result
    pad_sc,                               # VMEM (NB, H+2, W+2, 48) padded act
    im_sc,                                # VMEM (M, 432)  im2col buffer
    cat_sc,                               # VMEM (M, 128)  branch concat
):
    NB, H, W, Cin = x_ref.shape
    M = NB * H * W

    def matmul(a, w):
        return jax.lax.dot_general(
            a, w, (((1,), (0,)), ((), ())),
            preferred_element_type=jnp.float32)

    def bn(y, s_ref, b_ref, relu=True):
        y = y * s_ref[...] + b_ref[...]          # folded eval-mode BN
        return jnp.maximum(y, 0.0) if relu else y

    # Zero the padded-activation scratch once; only its interior is written
    # below, so the 1-pixel zero border persists across the three reuses.
    pad_sc[...] = jnp.zeros_like(pad_sc)

    def conv3x3_bn_relu(act, w_ref, s_ref, b_ref):
        # act: (M, cin).  3x3 / stride 1 / pad 1 as ONE (M,9*cin)@(9*cin,cout)
        # MXU matmul; the 9 shifted taps are gathered into the im2col scratch.
        cin = act.shape[-1]
        pad_sc[:, 1:H + 1, 1:W + 1, 0:cin] = act.reshape(NB, H, W, cin)
        for k in range(9):                      # static unroll over taps
            dy, dx = divmod(k, 3)
            tap = pad_sc[:, dy:dy + H, dx:dx + W, 0:cin].reshape(M, cin)
            im_sc[:, k * cin:(k + 1) * cin] = tap
        z = matmul(im_sc[:, 0:9 * cin], w_ref[...])
        return bn(z, s_ref, b_ref)

    x = x_ref[...].reshape(M, Cin)               # (M, 384)

    # Three branch-entry 1x1 convs fused into a single (384 -> 96) matmul.
    y_sc[...] = bn(matmul(x, we_ref[...]), se_ref, be_ref)
    b0 = y_sc[:, 0:32]
    b1 = y_sc[:, 32:64]
    b2 = y_sc[:, 64:96]

    b0 = conv3x3_bn_relu(b0, w01_ref, s01_ref, b01_ref)   # 32 -> 48
    b0 = conv3x3_bn_relu(b0, w02_ref, s02_ref, b02_ref)   # 48 -> 64
    b1 = conv3x3_bn_relu(b1, w11_ref, s11_ref, b11_ref)   # 32 -> 32

    # Channel concat (64 + 32 + 32 = 128) staged through VMEM scratch, then
    # the 1x1 stem (128 -> 384, BN, no ReLU). Only this lane-dense 384-channel
    # result is written to HBM.
    cat_sc[:, 0:64] = b0
    cat_sc[:, 64:96] = b1
    cat_sc[:, 96:128] = b2
    out = bn(matmul(cat_sc[...], ws_ref[...]), ss_ref, bs_ref, relu=False)
    o_ref[...] = out.reshape(NB, H, W, o_ref.shape[-1])


# ---------------------------------------------------------------------------
# Wrapper: NCHW in / NCHW out, weights repacked for the fused kernel
# ---------------------------------------------------------------------------
def _bcast_spec(shape):
    zeros = (0,) * len(shape)
    return pl.BlockSpec(shape, lambda i, _z=zeros: _z)


def block_a_branch(x_nchw, P):
    x = jnp.transpose(x_nchw, (0, 2, 3, 1)).astype(jnp.float32)   # NCHW -> NHWC
    N, H, W, C = x.shape
    assert C == 384, C

    # Fold the batch into the matmul M dimension: largest batch block dividing
    # N with M = nb*H*W around a few hundred rows (M = 128 for the test shape).
    nb = min(N, max(1, 1024 // (H * W)))
    while N % nb:
        nb -= 1
    M = nb * H * W

    # Repack weights: 1x1 convs -> (Cin, Cout) matmul weights, 3x3 convs ->
    # (9*Cin, Cout) im2col weights, three branch entries concatenated.
    we = jnp.concatenate([P["b0c0_w"].reshape(384, 32),
                          P["b1c0_w"].reshape(384, 32),
                          P["b2c0_w"].reshape(384, 32)], axis=1)      # (384, 96)
    se = jnp.concatenate([P["b0c0_s"], P["b1c0_s"], P["b2c0_s"]], axis=1)
    be = jnp.concatenate([P["b0c0_b"], P["b1c0_b"], P["b2c0_b"]], axis=1)
    w01 = P["b0c1_w"].reshape(9 * 32, 48)
    w02 = P["b0c2_w"].reshape(9 * 48, 64)
    w11 = P["b1c1_w"].reshape(9 * 32, 32)
    ws = P["stem_w"].reshape(128, 384)

    args = (x,
            we, se, be,
            w01, P["b0c1_s"], P["b0c1_b"],
            w02, P["b0c2_s"], P["b0c2_b"],
            w11, P["b1c1_s"], P["b1c1_b"],
            ws, P["stem_s"], P["stem_b"])

    in_specs = [pl.BlockSpec((nb, H, W, 384), lambda i: (i, 0, 0, 0))]
    in_specs += [_bcast_spec(a.shape) for a in args[1:]]

    out = pl.pallas_call(
        _block_a_branch_kernel,
        out_shape=jax.ShapeDtypeStruct((N, H, W, 384), jnp.float32),
        grid=(N // nb,),
        in_specs=in_specs,
        out_specs=pl.BlockSpec((nb, H, W, 384), lambda i: (i, 0, 0, 0)),
        scratch_shapes=[
            pltpu.VMEM((M, 96), jnp.float32),               # merged entry out
            pltpu.VMEM((nb, H + 2, W + 2, 48), jnp.float32),  # padded act (max cin)
            pltpu.VMEM((M, 9 * 48), jnp.float32),           # im2col (max 9*cin)
            pltpu.VMEM((M, 128), jnp.float32),              # branch concat
        ],
        compiler_params=pltpu.CompilerParams(
            dimension_semantics=("parallel",)),
    )(*args)
    return jnp.transpose(out, (0, 3, 1, 2))                           # -> NCHW


# ---------------------------------------------------------------------------
# Parameter construction (deterministic, synthetic; BN folded eval-mode)
# ---------------------------------------------------------------------------
def _conv_weight(key, kh, kw, cin, cout):
    fan_in = kh * kw * cin
    return jax.random.normal(key, (kh, kw, cin, cout), jnp.float32) * (2.0 / fan_in) ** 0.5


def _bn_fold(key, c, eps=1e-5):
    k1, k2, k3, k4 = jax.random.split(key, 4)
    gamma = 1.0 + 0.1 * jax.random.normal(k1, (c,), jnp.float32)
    beta = 0.1 * jax.random.normal(k2, (c,), jnp.float32)
    mean = 0.1 * jax.random.normal(k3, (c,), jnp.float32)
    var = jax.nn.softplus(jax.random.normal(k4, (c,), jnp.float32)) + 0.1
    scale = gamma / jnp.sqrt(var + eps)
    shift = beta - mean * scale
    return scale.reshape(1, c), shift.reshape(1, c)


def init_params(key):
    ks = jax.random.split(key, 14)
    p = {}
    # branch0: 1x1 384->32, 3x3 32->48, 3x3 48->64 (each conv+BN+ReLU)
    p["b0c0_w"] = _conv_weight(ks[0], 1, 1, 384, 32); p["b0c0_s"], p["b0c0_b"] = _bn_fold(ks[1], 32)
    p["b0c1_w"] = _conv_weight(ks[2], 3, 3, 32, 48);  p["b0c1_s"], p["b0c1_b"] = _bn_fold(ks[3], 48)
    p["b0c2_w"] = _conv_weight(ks[4], 3, 3, 48, 64);  p["b0c2_s"], p["b0c2_b"] = _bn_fold(ks[5], 64)
    # branch1: 1x1 384->32, 3x3 32->32
    p["b1c0_w"] = _conv_weight(ks[6], 1, 1, 384, 32); p["b1c0_s"], p["b1c0_b"] = _bn_fold(ks[7], 32)
    p["b1c1_w"] = _conv_weight(ks[8], 3, 3, 32, 32);  p["b1c1_s"], p["b1c1_b"] = _bn_fold(ks[9], 32)
    # branch2: 1x1 384->32
    p["b2c0_w"] = _conv_weight(ks[10], 1, 1, 384, 32); p["b2c0_s"], p["b2c0_b"] = _bn_fold(ks[11], 32)
    # stem: 1x1 128->384 conv (no bias) + BN, NO ReLU
    p["stem_w"] = _conv_weight(ks[12], 1, 1, 128, 384); p["stem_s"], p["stem_b"] = _bn_fold(ks[13], 384)
    return p


# ---------------------------------------------------------------------------
# Pure-JAX reference for validation
# ---------------------------------------------------------------------------
def _ref_conv_bn(x, w_hwio, scale, shift, relu, pad):
    y = jax.lax.conv_general_dilated(
        x, w_hwio, window_strides=(1, 1), padding=[(pad, pad), (pad, pad)],
        dimension_numbers=("NHWC", "HWIO", "NHWC"),
        precision=jax.lax.Precision.HIGHEST)
    y = y * scale.reshape(1, 1, 1, -1) + shift.reshape(1, 1, 1, -1)
    if relu:
        y = jnp.maximum(y, 0.0)
    return y


def block_a_branch_ref(x_nchw, P):
    x = jnp.transpose(x_nchw, (0, 2, 3, 1)).astype(jnp.float32)
    b0 = _ref_conv_bn(x, P["b0c0_w"], P["b0c0_s"], P["b0c0_b"], True, 0)
    b0 = _ref_conv_bn(b0, P["b0c1_w"], P["b0c1_s"], P["b0c1_b"], True, 1)
    b0 = _ref_conv_bn(b0, P["b0c2_w"], P["b0c2_s"], P["b0c2_b"], True, 1)
    b1 = _ref_conv_bn(x, P["b1c0_w"], P["b1c0_s"], P["b1c0_b"], True, 0)
    b1 = _ref_conv_bn(b1, P["b1c1_w"], P["b1c1_s"], P["b1c1_b"], True, 1)
    b2 = _ref_conv_bn(x, P["b2c0_w"], P["b2c0_s"], P["b2c0_b"], True, 0)
    out = jnp.concatenate([b0, b1, b2], axis=-1)
    out = _ref_conv_bn(out, P["stem_w"], P["stem_s"], P["stem_b"], False, 0)
    return jnp.transpose(out, (0, 3, 1, 2))


if __name__ == "__main__":
    key = jax.random.PRNGKey(0)
    kx, kp = jax.random.split(key)
    # in_channels=384 is fixed by the module architecture; small spatial/batch.
    N, C, H, W = 2, 384, 8, 8
    x = jax.random.normal(kx, (N, C, H, W), jnp.float32)
    params = init_params(kp)

    out = jax.block_until_ready(block_a_branch(x, params))
    assert out.shape == (N, 384, H, W), out.shape

    ref = jax.block_until_ready(block_a_branch_ref(x, params))
    err = float(jnp.max(jnp.abs(out - ref)))
    # Tolerance accounts for default (non-HIGHEST) MXU precision in the kernel
    # vs. the HIGHEST-precision XLA reference.
    assert err < 5e-2, f"max abs error too large: {err}"

    print("KERNEL_OK")
</pallas_src>

<mosaic_0001>
module attributes {stable_mosaic.version = 11 : i64} {
  func.func @_block_a_branch_kernel(%arg0: i32, %arg1: memref<2x8x8x384xf32, #tpu.memory_space<vmem>>, %arg2: memref<384x96xf32, #tpu.memory_space<vmem>>, %arg3: memref<1x96xf32, #tpu.memory_space<vmem>>, %arg4: memref<1x96xf32, #tpu.memory_space<vmem>>, %arg5: memref<288x48xf32, #tpu.memory_space<vmem>>, %arg6: memref<1x48xf32, #tpu.memory_space<vmem>>, %arg7: memref<1x48xf32, #tpu.memory_space<vmem>>, %arg8: memref<432x64xf32, #tpu.memory_space<vmem>>, %arg9: memref<1x64xf32, #tpu.memory_space<vmem>>, %arg10: memref<1x64xf32, #tpu.memory_space<vmem>>, %arg11: memref<288x32xf32, #tpu.memory_space<vmem>>, %arg12: memref<1x32xf32, #tpu.memory_space<vmem>>, %arg13: memref<1x32xf32, #tpu.memory_space<vmem>>, %arg14: memref<128x384xf32, #tpu.memory_space<vmem>>, %arg15: memref<1x384xf32, #tpu.memory_space<vmem>>, %arg16: memref<1x384xf32, #tpu.memory_space<vmem>>, %arg17: memref<2x8x8x384xf32, #tpu.memory_space<vmem>>, %arg18: memref<128x96xf32, #tpu.memory_space<vmem>>, %arg19: memref<2x10x10x48xf32, #tpu.memory_space<vmem>>, %arg20: memref<128x432xf32, #tpu.memory_space<vmem>>, %arg21: memref<128x128xf32, #tpu.memory_space<vmem>>) attributes {dimension_semantics = [#tpu.dimension_semantics<parallel>], iteration_bounds = array<i64: 1>, scalar_prefetch = 0 : i64, scratch_operands = 4 : i64, tpu.core_type = #tpu.core_type<tc>, window_params = [{transform_indices = @transform_0, window_bounds = array<i64: 2, 8, 8, 384>}, {pipeline_mode = #tpu.pipeline_mode<synchronous>, transform_indices = @transform_1, window_bounds = array<i64: 384, 96>}, {pipeline_mode = #tpu.pipeline_mode<synchronous>, transform_indices = @transform_2, window_bounds = array<i64: 1, 96>}, {pipeline_mode = #tpu.pipeline_mode<synchronous>, transform_indices = @transform_3, window_bounds = array<i64: 1, 96>}, {pipeline_mode = #tpu.pipeline_mode<synchronous>, transform_indices = @transform_4, window_bounds = array<i64: 288, 48>}, {pipeline_mode = #tpu.pipeline_mode<synchronous>, transform_indices = @transform_5, window_bounds = array<i64: 1, 48>}, {pipeline_mode = #tpu.pipeline_mode<synchronous>, transform_indices = @transform_6, window_bounds = array<i64: 1, 48>}, {pipeline_mode = #tpu.pipeline_mode<synchronous>, transform_indices = @transform_7, window_bounds = array<i64: 432, 64>}, {pipeline_mode = #tpu.pipeline_mode<synchronous>, transform_indices = @transform_8, window_bounds = array<i64: 1, 64>}, {pipeline_mode = #tpu.pipeline_mode<synchronous>, transform_indices = @transform_9, window_bounds = array<i64: 1, 64>}, {pipeline_mode = #tpu.pipeline_mode<synchronous>, transform_indices = @transform_10, window_bounds = array<i64: 288, 32>}, {pipeline_mode = #tpu.pipeline_mode<synchronous>, transform_indices = @transform_11, window_bounds = array<i64: 1, 32>}, {pipeline_mode = #tpu.pipeline_mode<synchronous>, transform_indices = @transform_12, window_bounds = array<i64: 1, 32>}, {pipeline_mode = #tpu.pipeline_mode<synchronous>, transform_indices = @transform_13, window_bounds = array<i64: 128, 384>}, {pipeline_mode = #tpu.pipeline_mode<synchronous>, transform_indices = @transform_14, window_bounds = array<i64: 1, 384>}, {pipeline_mode = #tpu.pipeline_mode<synchronous>, transform_indices = @transform_15, window_bounds = array<i64: 1, 384>}, {transform_indices = @transform_16, window_bounds = array<i64: 2, 8, 8, 384>}]} {
    %cst = arith.constant 0.000000e+00 : f32
    %0 = vector.broadcast %cst : f32 to vector<2x10x10x48xf32>
    %c0 = arith.constant 0 : index
    %c0_0 = arith.constant 0 : index
    %c0_1 = arith.constant 0 : index
    %c0_2 = arith.constant 0 : index
    %1 = vector.load %arg19[%c0, %c0_0, %c0_1, %c0_2] : memref<2x10x10x48xf32, #tpu.memory_space<vmem>>, vector<2x10x10x48xf32>
    tpu.vector_store %arg19[%c0, %c0_0, %c0_1, %c0_2], %0 {strides = array<i32>} : memref<2x10x10x48xf32, #tpu.memory_space<vmem>>, vector<2x10x10x48xf32>,
    %c0_3 = arith.constant 0 : index
    %c0_4 = arith.constant 0 : index
    %c0_5 = arith.constant 0 : index
    %c0_6 = arith.constant 0 : index
    %2 = vector.load %arg1[%c0_3, %c0_4, %c0_5, %c0_6] : memref<2x8x8x384xf32, #tpu.memory_space<vmem>>, vector<2x8x8x384xf32>
    %3 = vector.shape_cast %2 : vector<2x8x8x384xf32> to vector<128x384xf32>
    %c0_7 = arith.constant 0 : index
    %c0_8 = arith.constant 0 : index
    %4 = vector.load %arg2[%c0_7, %c0_8] : memref<384x96xf32, #tpu.memory_space<vmem>>, vector<384x96xf32>
    %cst_9 = arith.constant dense<0.000000e+00> : vector<128x96xf32>
    %5 = tpu.matmul %3, %4, %cst_9 {dimension_numbers = #tpu.dot_dimension_numbers<[1], [0], [0], [1], [0, 0, 1, 1], [], []>} : vector<128x384xf32>, vector<384x96xf32>, vector<128x96xf32> -> vector<128x96xf32>
    %c0_10 = arith.constant 0 : index
    %c0_11 = arith.constant 0 : index
    %6 = vector.load %arg3[%c0_10, %c0_11] : memref<1x96xf32, #tpu.memory_space<vmem>>, vector<1x96xf32>
    %7 = vector.broadcast %6 : vector<1x96xf32> to vector<128x96xf32>
    %8 = arith.mulf %5, %7 : vector<128x96xf32>
    %c0_12 = arith.constant 0 : index
    %c0_13 = arith.constant 0 : index
    %9 = vector.load %arg4[%c0_12, %c0_13] : memref<1x96xf32, #tpu.memory_space<vmem>>, vector<1x96xf32>
    %10 = vector.broadcast %9 : vector<1x96xf32> to vector<128x96xf32>
    %11 = arith.addf %8, %10 : vector<128x96xf32>
    %cst_14 = arith.constant 0.000000e+00 : f32
    %12 = vector.broadcast %cst_14 : f32 to vector<128x96xf32>
    %13 = arith.maximumf %11, %12 : vector<128x96xf32>
    %c0_15 = arith.constant 0 : index
    %c0_16 = arith.constant 0 : index
    %14 = vector.load %arg18[%c0_15, %c0_16] : memref<128x96xf32, #tpu.memory_space<vmem>>, vector<128x96xf32>
    tpu.vector_store %arg18[%c0_15, %c0_16], %13 {strides = array<i32>} : memref<128x96xf32, #tpu.memory_space<vmem>>, vector<128x96xf32>,
    %c0_17 = arith.constant 0 : index
    %c0_18 = arith.constant 0 : index
    %15 = vector.load %arg18[%c0_17, %c0_18] : memref<128x96xf32, #tpu.memory_space<vmem>>, vector<128x32xf32>
    %c0_19 = arith.constant 0 : index
    %c32 = arith.constant 32 : index
    %16 = vector.load %arg18[%c0_19, %c32] : memref<128x96xf32, #tpu.memory_space<vmem>>, vector<128x32xf32>
    %c0_20 = arith.constant 0 : index
    %c64 = arith.constant 64 : index
    %17 = vector.load %arg18[%c0_20, %c64] : memref<128x96xf32, #tpu.memory_space<vmem>>, vector<128x32xf32>
    %18 = vector.shape_cast %15 : vector<128x32xf32> to vector<2x8x8x32xf32>
    %c0_21 = arith.constant 0 : index
    %c1 = arith.constant 1 : index
    %c1_22 = arith.constant 1 : index
    %c0_23 = arith.constant 0 : index
    %19 = vector.load %arg19[%c0_21, %c1, %c1_22, %c0_23] : memref<2x10x10x48xf32, #tpu.memory_space<vmem>>, vector<2x8x8x32xf32>
    tpu.vector_store %arg19[%c0_21, %c1, %c1_22, %c0_23], %18 {strides = array<i32>} : memref<2x10x10x48xf32, #tpu.memory_space<vmem>>, vector<2x8x8x32xf32>,
    %c0_24 = arith.constant 0 : index
    %c0_25 = arith.constant 0 : index
    %c0_26 = arith.constant 0 : index
    %c0_27 = arith.constant 0 : index
    %20 = vector.load %arg19[%c0_24, %c0_25, %c0_26, %c0_27] : memref<2x10x10x48xf32, #tpu.memory_space<vmem>>, vector<2x8x8x32xf32>
    %21 = vector.shape_cast %20 : vector<2x8x8x32xf32> to vector<128x32xf32>
    %c0_28 = arith.constant 0 : index
    %c0_29 = arith.constant 0 : index
    %22 = vector.load %arg20[%c0_28, %c0_29] : memref<128x432xf32, #tpu.memory_space<vmem>>, vector<128x32xf32>
    tpu.vector_store %arg20[%c0_28, %c0_29], %21 {strides = array<i32>} : memref<128x432xf32, #tpu.memory_space<vmem>>, vector<128x32xf32>,
    %c0_30 = arith.constant 0 : index
    %c0_31 = arith.constant 0 : index
    %c1_32 = arith.constant 1 : index
    %c0_33 = arith.constant 0 : index
    %23 = vector.load %arg19[%c0_30, %c0_31, %c1_32, %c0_33] : memref<2x10x10x48xf32, #tpu.memory_space<vmem>>, vector<2x8x8x32xf32>
    %24 = vector.shape_cast %23 : vector<2x8x8x32xf32> to vector<128x32xf32>
    %c0_34 = arith.constant 0 : index
    %c32_35 = arith.constant 32 : index
    %25 = vector.load %arg20[%c0_34, %c32_35] : memref<128x432xf32, #tpu.memory_space<vmem>>, vector<128x32xf32>
    tpu.vector_store %arg20[%c0_34, %c32_35], %24 {strides = array<i32>} : memref<128x432xf32, #tpu.memory_space<vmem>>, vector<128x32xf32>,
    %c0_36 = arith.constant 0 : index
    %c0_37 = arith.constant 0 : index
    %c2 = arith.constant 2 : index
    %c0_38 = arith.constant 0 : index
    %26 = vector.load %arg19[%c0_36, %c0_37, %c2, %c0_38] : memref<2x10x10x48xf32, #tpu.memory_space<vmem>>, vector<2x8x8x32xf32>
    %27 = vector.shape_cast %26 : vector<2x8x8x32xf32> to vector<128x32xf32>
    %c0_39 = arith.constant 0 : index
    %c64_40 = arith.constant 64 : index
    %28 = vector.load %arg20[%c0_39, %c64_40] : memref<128x432xf32, #tpu.memory_space<vmem>>, vector<128x32xf32>
    tpu.vector_store %arg20[%c0_39, %c64_40], %27 {strides = array<i32>} : memref<128x432xf32, #tpu.memory_space<vmem>>, vector<128x32xf32>,
    %c0_41 = arith.constant 0 : index
    %c1_42 = arith.constant 1 : index
    %c0_43 = arith.constant 0 : index
    %c0_44 = arith.constant 0 : index
    %29 = vector.load %arg19[%c0_41, %c1_42, %c0_43, %c0_44] : memref<2x10x10x48xf32, #tpu.memory_space<vmem>>, vector<2x8x8x32xf32>
    %30 = vector.shape_cast %29 : vector<2x8x8x32xf32> to vector<128x32xf32>
    %c0_45 = arith.constant 0 : index
    %c96 = arith.constant 96 : index
    %31 = vector.load %arg20[%c0_45, %c96] : memref<128x432xf32, #tpu.memory_space<vmem>>, vector<128x32xf32>
    tpu.vector_store %arg20[%c0_45, %c96], %30 {strides = array<i32>} : memref<128x432xf32, #tpu.memory_space<vmem>>, vector<128x32xf32>,
    %c0_46 = arith.constant 0 : index
    %c1_47 = arith.constant 1 : index
    %c1_48 = arith.constant 1 : index
    %c0_49 = arith.constant 0 : index
    %32 = vector.load %arg19[%c0_46, %c1_47, %c1_48, %c0_49] : memref<2x10x10x48xf32, #tpu.memory_space<vmem>>, vector<2x8x8x32xf32>
    %33 = vector.shape_cast %32 : vector<2x8x8x32xf32> to vector<128x32xf32>
    %c0_50 = arith.constant 0 : index
    %c128 = arith.constant 128 : index
    %34 = vector.load %arg20[%c0_50, %c128] : memref<128x432xf32, #tpu.memory_space<vmem>>, vector<128x32xf32>
    tpu.vector_store %arg20[%c0_50, %c128], %33 {strides = array<i32>} : memref<128x432xf32, #tpu.memory_space<vmem>>, vector<128x32xf32>,
    %c0_51 = arith.constant 0 : index
    %c1_52 = arith.constant 1 : index
    %c2_53 = arith.constant 2 : index
    %c0_54 = arith.constant 0 : index
    %35 = vector.load %arg19[%c0_51, %c1_52, %c2_53, %c0_54] : memref<2x10x10x48xf32, #tpu.memory_space<vmem>>, vector<2x8x8x32xf32>
    %36 = vector.shape_cast %35 : vector<2x8x8x32xf32> to vector<128x32xf32>
    %c0_55 = arith.constant 0 : index
    %c160 = arith.constant 160 : index
    %37 = vector.load %arg20[%c0_55, %c160] : memref<128x432xf32, #tpu.memory_space<vmem>>, vector<128x32xf32>
    tpu.vector_store %arg20[%c0_55, %c160], %36 {strides = array<i32>} : memref<128x432xf32, #tpu.memory_space<vmem>>, vector<128x32xf32>,
    %c0_56 = arith.constant 0 : index
    %c2_57 = arith.constant 2 : index
    %c0_58 = arith.constant 0 : index
    %c0_59 = arith.constant 0 : index
    %38 = vector.load %arg19[%c0_56, %c2_57, %c0_58, %c0_59] : memref<2x10x10x48xf32, #tpu.memory_space<vmem>>, vector<2x8x8x32xf32>
    %39 = vector.shape_cast %38 : vector<2x8x8x32xf32> to vector<128x32xf32>
    %c0_60 = arith.constant 0 : index
    %c192 = arith.constant 192 : index
    %40 = vector.load %arg20[%c0_60, %c192] : memref<128x432xf32, #tpu.memory_space<vmem>>, vector<128x32xf32>
    tpu.vector_store %arg20[%c0_60, %c192], %39 {strides = array<i32>} : memref<128x432xf32, #tpu.memory_space<vmem>>, vector<128x32xf32>,
    %c0_61 = arith.constant 0 : index
    %c2_62 = arith.constant 2 : index
    %c1_63 = arith.constant 1 : index
    %c0_64 = arith.constant 0 : index
    %41 = vector.load %arg19[%c0_61, %c2_62, %c1_63, %c0_64] : memref<2x10x10x48xf32, #tpu.memory_space<vmem>>, vector<2x8x8x32xf32>
    %42 = vector.shape_cast %41 : vector<2x8x8x32xf32> to vector<128x32xf32>
    %c0_65 = arith.constant 0 : index
    %c224 = arith.constant 224 : index
    %43 = vector.load %arg20[%c0_65, %c224] : memref<128x432xf32, #tpu.memory_space<vmem>>, vector<128x32xf32>
    tpu.vector_store %arg20[%c0_65, %c224], %42 {strides = array<i32>} : memref<128x432xf32, #tpu.memory_space<vmem>>, vector<128x32xf32>,
    %c0_66 = arith.constant 0 : index
    %c2_67 = arith.constant 2 : index
    %c2_68 = arith.constant 2 : index
    %c0_69 = arith.constant 0 : index
    %44 = vector.load %arg19[%c0_66, %c2_67, %c2_68, %c0_69] : memref<2x10x10x48xf32, #tpu.memory_space<vmem>>, vector<2x8x8x32xf32>
    %45 = vector.shape_cast %44 : vector<2x8x8x32xf32> to vector<128x32xf32>
    %c0_70 = arith.constant 0 : index
    %c256 = arith.constant 256 : index
    %46 = vector.load %arg20[%c0_70, %c256] : memref<128x432xf32, #tpu.memory_space<vmem>>, vector<128x32xf32>
    tpu.vector_store %arg20[%c0_70, %c256], %45 {strides = array<i32>} : memref<128x432xf32, #tpu.memory_space<vmem>>, vector<128x32xf32>,
    %c0_71 = arith.constant 0 : index
    %c0_72 = arith.constant 0 : index
    %47 = vector.load %arg20[%c0_71, %c0_72] : memref<128x432xf32, #tpu.memory_space<vmem>>, vector<128x288xf32>
    %c0_73 = arith.constant 0 : index
    %c0_74 = arith.constant 0 : index
    %48 = vector.load %arg5[%c0_73, %c0_74] : memref<288x48xf32, #tpu.memory_space<vmem>>, vector<288x48xf32>
    %cst_75 = arith.constant dense<0.000000e+00> : vector<128x48xf32>
    %49 = tpu.matmul %47, %48, %cst_75 {dimension_numbers = #tpu.dot_dimension_numbers<[1], [0], [0], [1], [0, 0, 1, 1], [], []>} : vector<128x288xf32>, vector<288x48xf32>, vector<128x48xf32> -> vector<128x48xf32>
    %c0_76 = arith.constant 0 : index
    %c0_77 = arith.constant 0 : index
    %50 = vector.load %arg6[%c0_76, %c0_77] : memref<1x48xf32, #tpu.memory_space<vmem>>, vector<1x48xf32>
    %51 = vector.broadcast %50 : vector<1x48xf32> to vector<128x48xf32>
    %52 = arith.mulf %49, %51 : vector<128x48xf32>
    %c0_78 = arith.constant 0 : index
    %c0_79 = arith.constant 0 : index
    %53 = vector.load %arg7[%c0_78, %c0_79] : memref<1x48xf32, #tpu.memory_space<vmem>>, vector<1x48xf32>
    %54 = vector.broadcast %53 : vector<1x48xf32> to vector<128x48xf32>
    %55 = arith.addf %52, %54 : vector<128x48xf32>
    %cst_80 = arith.constant 0.000000e+00 : f32
    %56 = vector.broadcast %cst_80 : f32 to vector<128x48xf32>
    %57 = arith.maximumf %55, %56 : vector<128x48xf32>
    %58 = vector.shape_cast %57 : vector<128x48xf32> to vector<2x8x8x48xf32>
    %c0_81 = arith.constant 0 : index
    %c1_82 = arith.constant 1 : index
    %c1_83 = arith.constant 1 : index
    %c0_84 = arith.constant 0 : index
    %59 = vector.load %arg19[%c0_81, %c1_82, %c1_83, %c0_84] : memref<2x10x10x48xf32, #tpu.memory_space<vmem>>, vector<2x8x8x48xf32>
    tpu.vector_store %arg19[%c0_81, %c1_82, %c1_83, %c0_84], %58 {strides = array<i32>} : memref<2x10x10x48xf32, #tpu.memory_space<vmem>>, vector<2x8x8x48xf32>,
    %c0_85 = arith.constant 0 : index
    %c0_86 = arith.constant 0 : index
    %c0_87 = arith.constant 0 : index
    %c0_88 = arith.constant 0 : index
    %60 = vector.load %arg19[%c0_85, %c0_86, %c0_87, %c0_88] : memref<2x10x10x48xf32, #tpu.memory_space<vmem>>, vector<2x8x8x48xf32>
    %61 = vector.shape_cast %60 : vector<2x8x8x48xf32> to vector<128x48xf32>
    %c0_89 = arith.constant 0 : index
    %c0_90 = arith.constant 0 : index
    %62 = vector.load %arg20[%c0_89, %c0_90] : memref<128x432xf32, #tpu.memory_space<vmem>>, vector<128x48xf32>
    tpu.vector_store %arg20[%c0_89, %c0_90], %61 {strides = array<i32>} : memref<128x432xf32, #tpu.memory_space<vmem>>, vector<128x48xf32>,
    %c0_91 = arith.constant 0 : index
    %c0_92 = arith.constant 0 : index
    %c1_93 = arith.constant 1 : index
    %c0_94 = arith.constant 0 : index
    %63 = vector.load %arg19[%c0_91, %c0_92, %c1_93, %c0_94] : memref<2x10x10x48xf32, #tpu.memory_space<vmem>>, vector<2x8x8x48xf32>
    %64 = vector.shape_cast %63 : vector<2x8x8x48xf32> to vector<128x48xf32>
    %c0_95 = arith.constant 0 : index
    %c48 = arith.constant 48 : index
    %65 = vector.load %arg20[%c0_95, %c48] : memref<128x432xf32, #tpu.memory_space<vmem>>, vector<128x48xf32>
    tpu.vector_store %arg20[%c0_95, %c48], %64 {strides = array<i32>} : memref<128x432xf32, #tpu.memory_space<vmem>>, vector<128x48xf32>,
    %c0_96 = arith.constant 0 : index
    %c0_97 = arith.constant 0 : index
    %c2_98 = arith.constant 2 : index
    %c0_99 = arith.constant 0 : index
    %66 = vector.load %arg19[%c0_96, %c0_97, %c2_98, %c0_99] : memref<2x10x10x48xf32, #tpu.memory_space<vmem>>, vector<2x8x8x48xf32>
    %67 = vector.shape_cast %66 : vector<2x8x8x48xf32> to vector<128x48xf32>
    %c0_100 = arith.constant 0 : index
    %c96_101 = arith.constant 96 : index
    %68 = vector.load %arg20[%c0_100, %c96_101] : memref<128x432xf32, #tpu.memory_space<vmem>>, vector<128x48xf32>
    tpu.vector_store %arg20[%c0_100, %c96_101], %67 {strides = array<i32>} : memref<128x432xf32, #tpu.memory_space<vmem>>, vector<128x48xf32>,
    %c0_102 = arith.constant 0 : index
    %c1_103 = arith.constant 1 : index
    %c0_104 = arith.constant 0 : index
    %c0_105 = arith.constant 0 : index
    %69 = vector.load %arg19[%c0_102, %c1_103, %c0_104, %c0_105] : memref<2x10x10x48xf32, #tpu.memory_space<vmem>>, vector<2x8x8x48xf32>
    %70 = vector.shape_cast %69 : vector<2x8x8x48xf32> to vector<128x48xf32>
    %c0_106 = arith.constant 0 : index
    %c144 = arith.constant 144 : index
    %71 = vector.load %arg20[%c0_106, %c144] : memref<128x432xf32, #tpu.memory_space<vmem>>, vector<128x48xf32>
    tpu.vector_store %arg20[%c0_106, %c144], %70 {strides = array<i32>} : memref<128x432xf32, #tpu.memory_space<vmem>>, vector<128x48xf32>,
    %c0_107 = arith.constant 0 : index
    %c1_108 = arith.constant 1 : index
    %c1_109 = arith.constant 1 : index
    %c0_110 = arith.constant 0 : index
    %72 = vector.load %arg19[%c0_107, %c1_108, %c1_109, %c0_110] : memref<2x10x10x48xf32, #tpu.memory_space<vmem>>, vector<2x8x8x48xf32>
    %73 = vector.shape_cast %72 : vector<2x8x8x48xf32> to vector<128x48xf32>
    %c0_111 = arith.constant 0 : index
    %c192_112 = arith.constant 192 : index
    %74 = vector.load %arg20[%c0_111, %c192_112] : memref<128x432xf32, #tpu.memory_space<vmem>>, vector<128x48xf32>
    tpu.vector_store %arg20[%c0_111, %c192_112], %73 {strides = array<i32>} : memref<128x432xf32, #tpu.memory_space<vmem>>, vector<128x48xf32>,
    %c0_113 = arith.constant 0 : index
    %c1_114 = arith.constant 1 : index
    %c2_115 = arith.constant 2 : index
    %c0_116 = arith.constant 0 : index
    %75 = vector.load %arg19[%c0_113, %c1_114, %c2_115, %c0_116] : memref<2x10x10x48xf32, #tpu.memory_space<vmem>>, vector<2x8x8x48xf32>
    %76 = vector.shape_cast %75 : vector<2x8x8x48xf32> to vector<128x48xf32>
    %c0_117 = arith.constant 0 : index
    %c240 = arith.constant 240 : index
    %77 = vector.load %arg20[%c0_117, %c240] : memref<128x432xf32, #tpu.memory_space<vmem>>, vector<128x48xf32>
    tpu.vector_store %arg20[%c0_117, %c240], %76 {strides = array<i32>} : memref<128x432xf32, #tpu.memory_space<vmem>>, vector<128x48xf32>,
    %c0_118 = arith.constant 0 : index
    %c2_119 = arith.constant 2 : index
    %c0_120 = arith.constant 0 : index
    %c0_121 = arith.constant 0 : index
    %78 = vector.load %arg19[%c0_118, %c2_119, %c0_120, %c0_121] : memref<2x10x10x48xf32, #tpu.memory_space<vmem>>, vector<2x8x8x48xf32>
    %79 = vector.shape_cast %78 : vector<2x8x8x48xf32> to vector<128x48xf32>
    %c0_122 = arith.constant 0 : index
    %c288 = arith.constant 288 : index
    %80 = vector.load %arg20[%c0_122, %c288] : memref<128x432xf32, #tpu.memory_space<vmem>>, vector<128x48xf32>
    tpu.vector_store %arg20[%c0_122, %c288], %79 {strides = array<i32>} : memref<128x432xf32, #tpu.memory_space<vmem>>, vector<128x48xf32>,
    %c0_123 = arith.constant 0 : index
    %c2_124 = arith.constant 2 : index
    %c1_125 = arith.constant 1 : index
    %c0_126 = arith.constant 0 : index
    %81 = vector.load %arg19[%c0_123, %c2_124, %c1_125, %c0_126] : memref<2x10x10x48xf32, #tpu.memory_space<vmem>>, vector<2x8x8x48xf32>
    %82 = vector.shape_cast %81 : vector<2x8x8x48xf32> to vector<128x48xf32>
    %c0_127 = arith.constant 0 : index
    %c336 = arith.constant 336 : index
    %83 = vector.load %arg20[%c0_127, %c336] : memref<128x432xf32, #tpu.memory_space<vmem>>, vector<128x48xf32>
    tpu.vector_store %arg20[%c0_127, %c336], %82 {strides = array<i32>} : memref<128x432xf32, #tpu.memory_space<vmem>>, vector<128x48xf32>,
    %c0_128 = arith.constant 0 : index
    %c2_129 = arith.constant 2 : index
    %c2_130 = arith.constant 2 : index
    %c0_131 = arith.constant 0 : index
    %84 = vector.load %arg19[%c0_128, %c2_129, %c2_130, %c0_131] : memref<2x10x10x48xf32, #tpu.memory_space<vmem>>, vector<2x8x8x48xf32>
    %85 = vector.shape_cast %84 : vector<2x8x8x48xf32> to vector<128x48xf32>
    %c0_132 = arith.constant 0 : index
    %c384 = arith.constant 384 : index
    %86 = vector.load %arg20[%c0_132, %c384] : memref<128x432xf32, #tpu.memory_space<vmem>>, vector<128x48xf32>
    tpu.vector_store %arg20[%c0_132, %c384], %85 {strides = array<i32>} : memref<128x432xf32, #tpu.memory_space<vmem>>, vector<128x48xf32>,
    %c0_133 = arith.constant 0 : index
    %c0_134 = arith.constant 0 : index
    %87 = vector.load %arg20[%c0_133, %c0_134] : memref<128x432xf32, #tpu.memory_space<vmem>>, vector<128x432xf32>
    %c0_135 = arith.constant 0 : index
    %c0_136 = arith.constant 0 : index
    %88 = vector.load %arg8[%c0_135, %c0_136] : memref<432x64xf32, #tpu.memory_space<vmem>>, vector<432x64xf32>
    %cst_137 = arith.constant dense<0.000000e+00> : vector<128x64xf32>
    %89 = tpu.matmul %87, %88, %cst_137 {dimension_numbers = #tpu.dot_dimension_numbers<[1], [0], [0], [1], [0, 0, 1, 1], [], []>} : vector<128x432xf32>, vector<432x64xf32>, vector<128x64xf32> -> vector<128x64xf32>
    %c0_138 = arith.constant 0 : index
    %c0_139 = arith.constant 0 : index
    %90 = vector.load %arg9[%c0_138, %c0_139] : memref<1x64xf32, #tpu.memory_space<vmem>>, vector<1x64xf32>
    %91 = vector.broadcast %90 : vector<1x64xf32> to vector<128x64xf32>
    %92 = arith.mulf %89, %91 : vector<128x64xf32>
    %c0_140 = arith.constant 0 : index
    %c0_141 = arith.constant 0 : index
    %93 = vector.load %arg10[%c0_140, %c0_141] : memref<1x64xf32, #tpu.memory_space<vmem>>, vector<1x64xf32>
    %94 = vector.broadcast %93 : vector<1x64xf32> to vector<128x64xf32>
    %95 = arith.addf %92, %94 : vector<128x64xf32>
    %cst_142 = arith.constant 0.000000e+00 : f32
    %96 = vector.broadcast %cst_142 : f32 to vector<128x64xf32>
    %97 = arith.maximumf %95, %96 : vector<128x64xf32>
    %98 = vector.shape_cast %16 : vector<128x32xf32> to vector<2x8x8x32xf32>
    %c0_143 = arith.constant 0 : index
    %c1_144 = arith.constant 1 : index
    %c1_145 = arith.constant 1 : index
    %c0_146 = arith.constant 0 : index
    %99 = vector.load %arg19[%c0_143, %c1_144, %c1_145, %c0_146] : memref<2x10x10x48xf32, #tpu.memory_space<vmem>>, vector<2x8x8x32xf32>
    tpu.vector_store %arg19[%c0_143, %c1_144, %c1_145, %c0_146], %98 {strides = array<i32>} : memref<2x10x10x48xf32, #tpu.memory_space<vmem>>, vector<2x8x8x32xf32>,
    %c0_147 = arith.constant 0 : index
    %c0_148 = arith.constant 0 : index
    %c0_149 = arith.constant 0 : index
    %c0_150 = arith.constant 0 : index
    %100 = vector.load %arg19[%c0_147, %c0_148, %c0_149, %c0_150] : memref<2x10x10x48xf32, #tpu.memory_space<vmem>>, vector<2x8x8x32xf32>
    %101 = vector.shape_cast %100 : vector<2x8x8x32xf32> to vector<128x32xf32>
    %c0_151 = arith.constant 0 : index
    %c0_152 = arith.constant 0 : index
    %102 = vector.load %arg20[%c0_151, %c0_152] : memref<128x432xf32, #tpu.memory_space<vmem>>, vector<128x32xf32>
    tpu.vector_store %arg20[%c0_151, %c0_152], %101 {strides = array<i32>} : memref<128x432xf32, #tpu.memory_space<vmem>>, vector<128x32xf32>,
    %c0_153 = arith.constant 0 : index
    %c0_154 = arith.constant 0 : index
    %c1_155 = arith.constant 1 : index
    %c0_156 = arith.constant 0 : index
    %103 = vector.load %arg19[%c0_153, %c0_154, %c1_155, %c0_156] : memref<2x10x10x48xf32, #tpu.memory_space<vmem>>, vector<2x8x8x32xf32>
    %104 = vector.shape_cast %103 : vector<2x8x8x32xf32> to vector<128x32xf32>
    %c0_157 = arith.constant 0 : index
    %c32_158 = arith.constant 32 : index
    %105 = vector.load %arg20[%c0_157, %c32_158] : memref<128x432xf32, #tpu.memory_space<vmem>>, vector<128x32xf32>
    tpu.vector_store %arg20[%c0_157, %c32_158], %104 {strides = array<i32>} : memref<128x432xf32, #tpu.memory_space<vmem>>, vector<128x32xf32>,
    %c0_159 = arith.constant 0 : index
    %c0_160 = arith.constant 0 : index
    %c2_161 = arith.constant 2 : index
    %c0_162 = arith.constant 0 : index
    %106 = vector.load %arg19[%c0_159, %c0_160, %c2_161, %c0_162] : memref<2x10x10x48xf32, #tpu.memory_space<vmem>>, vector<2x8x8x32xf32>
    %107 = vector.shape_cast %106 : vector<2x8x8x32xf32> to vector<128x32xf32>
    %c0_163 = arith.constant 0 : index
    %c64_164 = arith.constant 64 : index
    %108 = vector.load %arg20[%c0_163, %c64_164] : memref<128x432xf32, #tpu.memory_space<vmem>>, vector<128x32xf32>
    tpu.vector_store %arg20[%c0_163, %c64_164], %107 {strides = array<i32>} : memref<128x432xf32, #tpu.memory_space<vmem>>, vector<128x32xf32>,
    %c0_165 = arith.constant 0 : index
    %c1_166 = arith.constant 1 : index
    %c0_167 = arith.constant 0 : index
    %c0_168 = arith.constant 0 : index
    %109 = vector.load %arg19[%c0_165, %c1_166, %c0_167, %c0_168] : memref<2x10x10x48xf32, #tpu.memory_space<vmem>>, vector<2x8x8x32xf32>
    %110 = vector.shape_cast %109 : vector<2x8x8x32xf32> to vector<128x32xf32>
    %c0_169 = arith.constant 0 : index
    %c96_170 = arith.constant 96 : index
    %111 = vector.load %arg20[%c0_169, %c96_170] : memref<128x432xf32, #tpu.memory_space<vmem>>, vector<128x32xf32>
    tpu.vector_store %arg20[%c0_169, %c96_170], %110 {strides = array<i32>} : memref<128x432xf32, #tpu.memory_space<vmem>>, vector<128x32xf32>,
    %c0_171 = arith.constant 0 : index
    %c1_172 = arith.constant 1 : index
    %c1_173 = arith.constant 1 : index
    %c0_174 = arith.constant 0 : index
    %112 = vector.load %arg19[%c0_171, %c1_172, %c1_173, %c0_174] : memref<2x10x10x48xf32, #tpu.memory_space<vmem>>, vector<2x8x8x32xf32>
    %113 = vector.shape_cast %112 : vector<2x8x8x32xf32> to vector<128x32xf32>
    %c0_175 = arith.constant 0 : index
    %c128_176 = arith.constant 128 : index
    %114 = vector.load %arg20[%c0_175, %c128_176] : memref<128x432xf32, #tpu.memory_space<vmem>>, vector<128x32xf32>
    tpu.vector_store %arg20[%c0_175, %c128_176], %113 {strides = array<i32>} : memref<128x432xf32, #tpu.memory_space<vmem>>, vector<128x32xf32>,
    %c0_177 = arith.constant 0 : index
    %c1_178 = arith.constant 1 : index
    %c2_179 = arith.constant 2 : index
    %c0_180 = arith.constant 0 : index
    %115 = vector.load %arg19[%c0_177, %c1_178, %c2_179, %c0_180] : memref<2x10x10x48xf32, #tpu.memory_space<vmem>>, vector<2x8x8x32xf32>
    %116 = vector.shape_cast %115 : vector<2x8x8x32xf32> to vector<128x32xf32>
    %c0_181 = arith.constant 0 : index
    %c160_182 = arith.constant 160 : index
    %117 = vector.load %arg20[%c0_181, %c160_182] : memref<128x432xf32, #tpu.memory_space<vmem>>, vector<128x32xf32>
    tpu.vector_store %arg20[%c0_181, %c160_182], %116 {strides = array<i32>} : memref<128x432xf32, #tpu.memory_space<vmem>>, vector<128x32xf32>,
    %c0_183 = arith.constant 0 : index
    %c2_184 = arith.constant 2 : index
    %c0_185 = arith.constant 0 : index
    %c0_186 = arith.constant 0 : index
    %118 = vector.load %arg19[%c0_183, %c2_184, %c0_185, %c0_186] : memref<2x10x10x48xf32, #tpu.memory_space<vmem>>, vector<2x8x8x32xf32>
    %119 = vector.shape_cast %118 : vector<2x8x8x32xf32> to vector<128x32xf32>
    %c0_187 = arith.constant 0 : index
    %c192_188 = arith.constant 192 : index
    %120 = vector.load %arg20[%c0_187, %c192_188] : memref<128x432xf32, #tpu.memory_space<vmem>>, vector<128x32xf32>
    tpu.vector_store %arg20[%c0_187, %c192_188], %119 {strides = array<i32>} : memref<128x432xf32, #tpu.memory_space<vmem>>, vector<128x32xf32>,
    %c0_189 = arith.constant 0 : index
    %c2_190 = arith.constant 2 : index
    %c1_191 = arith.constant 1 : index
    %c0_192 = arith.constant 0 : index
    %121 = vector.load %arg19[%c0_189, %c2_190, %c1_191, %c0_192] : memref<2x10x10x48xf32, #tpu.memory_space<vmem>>, vector<2x8x8x32xf32>
    %122 = vector.shape_cast %121 : vector<2x8x8x32xf32> to vector<128x32xf32>
    %c0_193 = arith.constant 0 : index
    %c224_194 = arith.constant 224 : index
    %123 = vector.load %arg20[%c0_193, %c224_194] : memref<128x432xf32, #tpu.memory_space<vmem>>, vector<128x32xf32>
    tpu.vector_store %arg20[%c0_193, %c224_194], %122 {strides = array<i32>} : memref<128x432xf32, #tpu.memory_space<vmem>>, vector<128x32xf32>,
    %c0_195 = arith.constant 0 : index
    %c2_196 = arith.constant 2 : index
    %c2_197 = arith.constant 2 : index
    %c0_198 = arith.constant 0 : index
    %124 = vector.load %arg19[%c0_195, %c2_196, %c2_197, %c0_198] : memref<2x10x10x48xf32, #tpu.memory_space<vmem>>, vector<2x8x8x32xf32>
    %125 = vector.shape_cast %124 : vector<2x8x8x32xf32> to vector<128x32xf32>
    %c0_199 = arith.constant 0 : index
    %c256_200 = arith.constant 256 : index
    %126 = vector.load %arg20[%c0_199, %c256_200] : memref<128x432xf32, #tpu.memory_space<vmem>>, vector<128x32xf32>
    tpu.vector_store %arg20[%c0_199, %c256_200], %125 {strides = array<i32>} : memref<128x432xf32, #tpu.memory_space<vmem>>, vector<128x32xf32>,
    %c0_201 = arith.constant 0 : index
    %c0_202 = arith.constant 0 : index
    %127 = vector.load %arg20[%c0_201, %c0_202] : memref<128x432xf32, #tpu.memory_space<vmem>>, vector<128x288xf32>
    %c0_203 = arith.constant 0 : index
    %c0_204 = arith.constant 0 : index
    %128 = vector.load %arg11[%c0_203, %c0_204] : memref<288x32xf32, #tpu.memory_space<vmem>>, vector<288x32xf32>
    %cst_205 = arith.constant dense<0.000000e+00> : vector<128x32xf32>
    %129 = tpu.matmul %127, %128, %cst_205 {dimension_numbers = #tpu.dot_dimension_numbers<[1], [0], [0], [1], [0, 0, 1, 1], [], []>} : vector<128x288xf32>, vector<288x32xf32>, vector<128x32xf32> -> vector<128x32xf32>
    %c0_206 = arith.constant 0 : index
    %c0_207 = arith.constant 0 : index
    %130 = vector.load %arg12[%c0_206, %c0_207] : memref<1x32xf32, #tpu.memory_space<vmem>>, vector<1x32xf32>
    %131 = vector.broadcast %130 : vector<1x32xf32> to vector<128x32xf32>
    %132 = arith.mulf %129, %131 : vector<128x32xf32>
    %c0_208 = arith.constant 0 : index
    %c0_209 = arith.constant 0 : index
    %133 = vector.load %arg13[%c0_208, %c0_209] : memref<1x32xf32, #tpu.memory_space<vmem>>, vector<1x32xf32>
    %134 = vector.broadcast %133 : vector<1x32xf32> to vector<128x32xf32>
    %135 = arith.addf %132, %134 : vector<128x32xf32>
    %cst_210 = arith.constant 0.000000e+00 : f32
    %136 = vector.broadcast %cst_210 : f32 to vector<128x32xf32>
    %137 = arith.maximumf %135, %136 : vector<128x32xf32>
    %c0_211 = arith.constant 0 : index
    %c0_212 = arith.constant 0 : index
    %138 = vector.load %arg21[%c0_211, %c0_212] : memref<128x128xf32, #tpu.memory_space<vmem>>, vector<128x64xf32>
    tpu.vector_store %arg21[%c0_211, %c0_212], %97 {strides = array<i32>} : memref<128x128xf32, #tpu.memory_space<vmem>>, vector<128x64xf32>,
    %c0_213 = arith.constant 0 : index
    %c64_214 = arith.constant 64 : index
    %139 = vector.load %arg21[%c0_213, %c64_214] : memref<128x128xf32, #tpu.memory_space<vmem>>, vector<128x32xf32>
    tpu.vector_store %arg21[%c0_213, %c64_214], %137 {strides = array<i32>} : memref<128x128xf32, #tpu.memory_space<vmem>>, vector<128x32xf32>,
    %c0_215 = arith.constant 0 : index
    %c96_216 = arith.constant 96 : index
    %140 = vector.load %arg21[%c0_215, %c96_216] : memref<128x128xf32, #tpu.memory_space<vmem>>, vector<128x32xf32>
    tpu.vector_store %arg21[%c0_215, %c96_216], %17 {strides = array<i32>} : memref<128x128xf32, #tpu.memory_space<vmem>>, vector<128x32xf32>,
    %c0_217 = arith.constant 0 : index
    %c0_218 = arith.constant 0 : index
    %141 = vector.load %arg21[%c0_217, %c0_218] : memref<128x128xf32, #tpu.memory_space<vmem>>, vector<128x128xf32>
    %c0_219 = arith.constant 0 : index
    %c0_220 = arith.constant 0 : index
    %142 = vector.load %arg14[%c0_219, %c0_220] : memref<128x384xf32, #tpu.memory_space<vmem>>, vector<128x384xf32>
    %cst_221 = arith.constant dense<0.000000e+00> : vector<128x384xf32>
    %143 = tpu.matmul %141, %142, %cst_221 {dimension_numbers = #tpu.dot_dimension_numbers<[1], [0], [0], [1], [0, 0, 1, 1], [], []>} : vector<128x128xf32>, vector<128x384xf32>, vector<128x384xf32> -> vector<128x384xf32>
    %c0_222 = arith.constant 0 : index
    %c0_223 = arith.constant 0 : index
    %144 = vector.load %arg15[%c0_222, %c0_223] : memref<1x384xf32, #tpu.memory_space<vmem>>, vector<1x384xf32>
    %145 = vector.broadcast %144 : vector<1x384xf32> to vector<128x384xf32>
    %146 = arith.mulf %143, %145 : vector<128x384xf32>
    %c0_224 = arith.constant 0 : index
    %c0_225 = arith.constant 0 : index
    %147 = vector.load %arg16[%c0_224, %c0_225] : memref<1x384xf32, #tpu.memory_space<vmem>>, vector<1x384xf32>
    %148 = vector.broadcast %147 : vector<1x384xf32> to vector<128x384xf32>
    %149 = arith.addf %146, %148 : vector<128x384xf32>
    %150 = vector.shape_cast %149 : vector<128x384xf32> to vector<2x8x8x384xf32>
    %c0_226 = arith.constant 0 : index
    %c0_227 = arith.constant 0 : index
    %c0_228 = arith.constant 0 : index
    %c0_229 = arith.constant 0 : index
    %151 = vector.load %arg17[%c0_226, %c0_227, %c0_228, %c0_229] : memref<2x8x8x384xf32, #tpu.memory_space<vmem>>, vector<2x8x8x384xf32>
    tpu.vector_store %arg17[%c0_226, %c0_227, %c0_228, %c0_229], %150 {strides = array<i32>} : memref<2x8x8x384xf32, #tpu.memory_space<vmem>>, vector<2x8x8x384xf32>,
    return
  }
  func.func @transform_0(%arg0: i32) -> (i32, i32, i32, i32) {
    %c0_i32 = arith.constant 0 : i32
    %c0_i32_0 = arith.constant 0 : i32
    %c0_i32_1 = arith.constant 0 : i32
    %c0_i32_2 = arith.constant 0 : i32
    return %arg0, %c0_i32, %c0_i32_0, %c0_i32_1 : i32, i32, i32, i32
  }
  func.func @transform_1(%arg0: i32) -> (i32, i32) {
    %c0_i32 = arith.constant 0 : i32
    %c0_i32_0 = arith.constant 0 : i32
    %c0_i32_1 = arith.constant 0 : i32
    return %c0_i32, %c0_i32_0 : i32, i32
  }
  func.func @transform_2(%arg0: i32) -> (i32, i32) {
    %c0_i32 = arith.constant 0 : i32
    %c0_i32_0 = arith.constant 0 : i32
    %c0_i32_1 = arith.constant 0 : i32
    return %c0_i32, %c0_i32_0 : i32, i32
  }
  func.func @transform_3(%arg0: i32) -> (i32, i32) {
    %c0_i32 = arith.constant 0 : i32
    %c0_i32_0 = arith.constant 0 : i32
    %c0_i32_1 = arith.constant 0 : i32
    return %c0_i32, %c0_i32_0 : i32, i32
  }
  func.func @transform_4(%arg0: i32) -> (i32, i32) {
    %c0_i32 = arith.constant 0 : i32
    %c0_i32_0 = arith.constant 0 : i32
    %c0_i32_1 = arith.constant 0 : i32
    return %c0_i32, %c0_i32_0 : i32, i32
  }
  func.func @transform_5(%arg0: i32) -> (i32, i32) {
    %c0_i32 = arith.constant 0 : i32
    %c0_i32_0 = arith.constant 0 : i32
    %c0_i32_1 = arith.constant 0 : i32
    return %c0_i32, %c0_i32_0 : i32, i32
  }
  func.func @transform_6(%arg0: i32) -> (i32, i32) {
    %c0_i32 = arith.constant 0 : i32
    %c0_i32_0 = arith.constant 0 : i32
    %c0_i32_1 = arith.constant 0 : i32
    return %c0_i32, %c0_i32_0 : i32, i32
  }
  func.func @transform_7(%arg0: i32) -> (i32, i32) {
    %c0_i32 = arith.constant 0 : i32
    %c0_i32_0 = arith.constant 0 : i32
    %c0_i32_1 = arith.constant 0 : i32
    return %c0_i32, %c0_i32_0 : i32, i32
  }
  func.func @transform_8(%arg0: i32) -> (i32, i32) {
    %c0_i32 = arith.constant 0 : i32
    %c0_i32_0 = arith.constant 0 : i32
    %c0_i32_1 = arith.constant 0 : i32
    return %c0_i32, %c0_i32_0 : i32, i32
  }
  func.func @transform_9(%arg0: i32) -> (i32, i32) {
    %c0_i32 = arith.constant 0 : i32
    %c0_i32_0 = arith.constant 0 : i32
    %c0_i32_1 = arith.constant 0 : i32
    return %c0_i32, %c0_i32_0 : i32, i32
  }
  func.func @transform_10(%arg0: i32) -> (i32, i32) {
    %c0_i32 = arith.constant 0 : i32
    %c0_i32_0 = arith.constant 0 : i32
    %c0_i32_1 = arith.constant 0 : i32
    return %c0_i32, %c0_i32_0 : i32, i32
  }
  func.func @transform_11(%arg0: i32) -> (i32, i32) {
    %c0_i32 = arith.constant 0 : i32
    %c0_i32_0 = arith.constant 0 : i32
    %c0_i32_1 = arith.constant 0 : i32
    return %c0_i32, %c0_i32_0 : i32, i32
  }
  func.func @transform_12(%arg0: i32) -> (i32, i32) {
    %c0_i32 = arith.constant 0 : i32
    %c0_i32_0 = arith.constant 0 : i32
    %c0_i32_1 = arith.constant 0 : i32
    return %c0_i32, %c0_i32_0 : i32, i32
  }
  func.func @transform_13(%arg0: i32) -> (i32, i32) {
    %c0_i32 = arith.constant 0 : i32
    %c0_i32_0 = arith.constant 0 : i32
    %c0_i32_1 = arith.constant 0 : i32
    return %c0_i32, %c0_i32_0 : i32, i32
  }
  func.func @transform_14(%arg0: i32) -> (i32, i32) {
    %c0_i32 = arith.constant 0 : i32
    %c0_i32_0 = arith.constant 0 : i32
    %c0_i32_1 = arith.constant 0 : i32
    return %c0_i32, %c0_i32_0 : i32, i32
  }
  func.func @transform_15(%arg0: i32) -> (i32, i32) {
    %c0_i32 = arith.constant 0 : i32
    %c0_i32_0 = arith.constant 0 : i32
    %c0_i32_1 = arith.constant 0 : i32
    return %c0_i32, %c0_i32_0 : i32, i32
  }
  func.func @transform_16(%arg0: i32) -> (i32, i32, i32, i32) {
    %c0_i32 = arith.constant 0 : i32
    %c0_i32_0 = arith.constant 0 : i32
    %c0_i32_1 = arith.constant 0 : i32
    %c0_i32_2 = arith.constant 0 : i32
    return %arg0, %c0_i32, %c0_i32_0, %c0_i32_1 : i32, i32, i32, i32
  }
}

</mosaic_0001>

<llo_original>
// kernel: tpu_custom_call.1
$region0: #{tpu_custom_call.1}
  #allocation0 [shape = 'u32[]', space=smem, size = 0x4, offset = 0x4, fixed_abs, tag = 'smem constant byte address 0x4 - core index']
  #allocation1 [shape = 'u32[72,128]{1,0:T(1,128)}', space=vmem, size = 0x9000, scoped, tag = 'internal scratch']
  #allocation2 [shape = 'f32[128,96]{1,0:T(8,128)}', space=vmem, size = 0x10000, scoped, tag = 'scratch operand']
  #allocation3 [shape = 'f32[2,10,10,48]{3,2,1,0:T(8,128)}', space=vmem, size = 0x28000, scoped, tag = 'scratch operand']
  #allocation4 [shape = 'f32[128,432]{1,0:T(8,128)}', space=vmem, size = 0x40000, scoped, tag = 'scratch operand']
  #allocation5 [shape = 'f32[128,128]{1,0:T(8,128)}', space=vmem, size = 0x10000, scoped, tag = 'scratch operand']
  %s0 = inlined_call_operand.vmem [shape: f32[2,8,8,384], index: 0, kind: input, shape index: {}]
  %s1 = inlined_call_operand.vmem [shape: f32[384,96], index: 1, kind: input, shape index: {}]
  %s2 = inlined_call_operand.vmem [shape: f32[1,96], index: 2, kind: input, shape index: {}]
  %s3 = inlined_call_operand.vmem [shape: f32[1,96], index: 3, kind: input, shape index: {}]
  %s4 = inlined_call_operand.vmem [shape: f32[288,48], index: 4, kind: input, shape index: {}]
  %s5 = inlined_call_operand.vmem [shape: f32[1,48], index: 5, kind: input, shape index: {}]
  %s6 = inlined_call_operand.vmem [shape: f32[1,48], index: 6, kind: input, shape index: {}]
  %s7 = inlined_call_operand.vmem [shape: f32[432,64], index: 7, kind: input, shape index: {}]
  %s8 = inlined_call_operand.vmem [shape: f32[1,64], index: 8, kind: input, shape index: {}]
  %s9 = inlined_call_operand.vmem [shape: f32[1,64], index: 9, kind: input, shape index: {}]
  %s10 = inlined_call_operand.vmem [shape: f32[288,32], index: 10, kind: input, shape index: {}]
  %s11 = inlined_call_operand.vmem [shape: f32[1,32], index: 11, kind: input, shape index: {}]
  %s12 = inlined_call_operand.vmem [shape: f32[1,32], index: 12, kind: input, shape index: {}]
  %s13 = inlined_call_operand.vmem [shape: f32[128,384], index: 13, kind: input, shape index: {}]
  %s14 = inlined_call_operand.vmem [shape: f32[1,384], index: 14, kind: input, shape index: {}]
  %s15 = inlined_call_operand.vmem [shape: f32[1,384], index: 15, kind: input, shape index: {}]
  %s16 = inlined_call_operand.hbm [shape: f32[2,8,8,384], index: 16, kind: output, shape index: {}]
  %s17 = sld [smem:[#allocation0]]
  $region74: #{tpu_custom_call.1} parent=0
    _
  %s19 = ssub.s32 1, %s17
  %s20 = scalar_select 0, %s19, %s17
  $region1: #{tpu_custom_call.1} parent=0
    #allocation6 [shape = 'u8[196608]{0}', space=vmem, size = 0x30000, scoped, tag = 'output window, operand 0, single buffered']
    #allocation7 [shape = 's32[1]{0}', space=sflag, size = 0x4, scoped, tag = 'scoped memory for tpu_custom_call.1']
    %21 = vsyncpa [#allocation7], 0
    // Predicated region
    $region2: #{tpu_custom_call.1} parent=1 // pred_check
      _
    $region3: #{tpu_custom_call.1} parent=1 // pred_check_branch
      %23 = sbr.rel (0) target = $region5
    $region4: #{tpu_custom_call.1} parent=1 // pred_region
      _
    $region5: #{tpu_custom_call.1} parent=1 // pred_fallthru
      _
    // Predicated region
    $region6: #{tpu_custom_call.1} parent=1 // pred_check
      _
    $region7: #{tpu_custom_call.1} parent=1 // pred_check_branch
      %25 = sbr.rel (0) target = $region9
    $region8: #{tpu_custom_call.1} parent=1 // pred_region
      _
    $region9: #{tpu_custom_call.1} parent=1 // pred_fallthru
      _
    // Predicated region
    $region10: #{tpu_custom_call.1} parent=1 // pred_check
      _
    $region11: #{tpu_custom_call.1} parent=1 // pred_check_branch
      %27 = sbr.rel (0) target = $region13
    $region12: #{tpu_custom_call.1} parent=1 // pred_region
      _
    $region13: #{tpu_custom_call.1} parent=1 // pred_fallthru
      _
    // Predicated region
    $region14: #{tpu_custom_call.1} parent=1 // pred_check
      _
    $region15: #{tpu_custom_call.1} parent=1 // pred_check_branch
      %29 = sbr.rel (0) target = $region17
    $region16: #{tpu_custom_call.1} parent=1 // pred_region
      _
    $region17: #{tpu_custom_call.1} parent=1 // pred_fallthru
      _
    // Predicated region
    $region18: #{tpu_custom_call.1} parent=1 // pred_check
      _
    $region19: #{tpu_custom_call.1} parent=1 // pred_check_branch
      %31 = sbr.rel (0) target = $region21
    $region20: #{tpu_custom_call.1} parent=1 // pred_region
      _
    $region21: #{tpu_custom_call.1} parent=1 // pred_fallthru
      _
    // Predicated region
    $region22: #{tpu_custom_call.1} parent=1 // pred_check
      _
    $region23: #{tpu_custom_call.1} parent=1 // pred_check_branch
      %33 = sbr.rel (0) target = $region25
    $region24: #{tpu_custom_call.1} parent=1 // pred_region
      _
    $region25: #{tpu_custom_call.1} parent=1 // pred_fallthru
      _
    // Predicated region
    $region26: #{tpu_custom_call.1} parent=1 // pred_check
      _
    $region27: #{tpu_custom_call.1} parent=1 // pred_check_branch
      %35 = sbr.rel (0) target = $region29
    $region28: #{tpu_custom_call.1} parent=1 // pred_region
      _
    $region29: #{tpu_custom_call.1} parent=1 // pred_fallthru
      _
    // Predicated region
    $region30: #{tpu_custom_call.1} parent=1 // pred_check
      _
    $region31: #{tpu_custom_call.1} parent=1 // pred_check_branch
      %37 = sbr.rel (0) target = $region33
    $region32: #{tpu_custom_call.1} parent=1 // pred_region
      _
    $region33: #{tpu_custom_call.1} parent=1 // pred_fallthru
      _
    // Predicated region
    $region34: #{tpu_custom_call.1} parent=1 // pred_check
      _
    $region35: #{tpu_custom_call.1} parent=1 // pred_check_branch
      %39 = sbr.rel (0) target = $region37
    $region36: #{tpu_custom_call.1} parent=1 // pred_region
      _
    $region37: #{tpu_custom_call.1} parent=1 // pred_fallthru
      _
    // Predicated region
    $region38: #{tpu_custom_call.1} parent=1 // pred_check
      _
    $region39: #{tpu_custom_call.1} parent=1 // pred_check_branch
      %41 = sbr.rel (0) target = $region41
    $region40: #{tpu_custom_call.1} parent=1 // pred_region
      _
    $region41: #{tpu_custom_call.1} parent=1 // pred_fallthru
      _
    // Predicated region
    $region42: #{tpu_custom_call.1} parent=1 // pred_check
      _
    $region43: #{tpu_custom_call.1} parent=1 // pred_check_branch
      %43 = sbr.rel (0) target = $region45
    $region44: #{tpu_custom_call.1} parent=1 // pred_region
      _
    $region45: #{tpu_custom_call.1} parent=1 // pred_fallthru
      _
    // Predicated region
    $region46: #{tpu_custom_call.1} parent=1 // pred_check
      _
    $region47: #{tpu_custom_call.1} parent=1 // pred_check_branch
      %45 = sbr.rel (0) target = $region49
    $region48: #{tpu_custom_call.1} parent=1 // pred_region
      _
    $region49: #{tpu_custom_call.1} parent=1 // pred_fallthru
      _
    // Predicated region
    $region50: #{tpu_custom_call.1} parent=1 // pred_check
      _
    $region51: #{tpu_custom_call.1} parent=1 // pred_check_branch
      %47 = sbr.rel (0) target = $region53
    $region52: #{tpu_custom_call.1} parent=1 // pred_region
      _
    $region53: #{tpu_custom_call.1} parent=1 // pred_fallthru
      _
    // Predicated region
    $region54: #{tpu_custom_call.1} parent=1 // pred_check
      _
    $region55: #{tpu_custom_call.1} parent=1 // pred_check_branch
      %49 = sbr.rel (0) target = $region57
    $region56: #{tpu_custom_call.1} parent=1 // pred_region
      _
    $region57: #{tpu_custom_call.1} parent=1 // pred_fallthru
      _
    // Predicated region
    $region58: #{tpu_custom_call.1} parent=1 // pred_check
      _
    $region59: #{tpu_custom_call.1} parent=1 // pred_check_branch
      %51 = sbr.rel (0) target = $region61
    $region60: #{tpu_custom_call.1} parent=1 // pred_region
      _
    $region61: #{tpu_custom_call.1} parent=1 // pred_fallthru
      _
    // Predicated region
    $region62: #{tpu_custom_call.1} parent=1 // pred_check
      _
    $region63: #{tpu_custom_call.1} parent=1 // pred_check_branch
      %53 = sbr.rel (0) target = $region65
    $region64: #{tpu_custom_call.1} parent=1 // pred_region
      _
    $region65: #{tpu_custom_call.1} parent=1 // pred_fallthru
      _
    %vm54 = vcmask 392192
    %55 = vst.msk [vmem:[#allocation3] sm:$0xff] %vm54, 0.0
    %vm56 = vcmask 386048
    %57 = vst.msk [vmem:[#allocation3 + $0x8] sm:$0x3] %vm56, 0.0
    %58 = vst.msk [vmem:[#allocation3 + $0x10] sm:$0xff] %vm54, 0.0
    %59 = vst.msk [vmem:[#allocation3 + $0x18] sm:$0x3] %vm56, 0.0
    %60 = vst.msk [vmem:[#allocation3 + $0x20] sm:$0xff] %vm54, 0.0
    %61 = vst.msk [vmem:[#allocation3 + $0x28] sm:$0x3] %vm56, 0.0
    %62 = vst.msk [vmem:[#allocation3 + $0x30] sm:$0xff] %vm54, 0.0
    %63 = vst.msk [vmem:[#allocation3 + $0x38] sm:$0x3] %vm56, 0.0
    %64 = vst.msk [vmem:[#allocation3 + $0x40] sm:$0xff] %vm54, 0.0
    %65 = vst.msk [vmem:[#allocation3 + $0x48] sm:$0x3] %vm56, 0.0
    %66 = vst.msk [vmem:[#allocation3 + $0x50] sm:$0xff] %vm54, 0.0
    %67 = vst.msk [vmem:[#allocation3 + $0x58] sm:$0x3] %vm56, 0.0
    %68 = vst.msk [vmem:[#allocation3 + $0x60] sm:$0xff] %vm54, 0.0
    %69 = vst.msk [vmem:[#allocation3 + $0x68] sm:$0x3] %vm56, 0.0
    %70 = vst.msk [vmem:[#allocation3 + $0x70] sm:$0xff] %vm54, 0.0
    %71 = vst.msk [vmem:[#allocation3 + $0x78] sm:$0x3] %vm56, 0.0
    %72 = vst.msk [vmem:[#allocation3 + $0x80] sm:$0xff] %vm54, 0.0
    %73 = vst.msk [vmem:[#allocation3 + $0x88] sm:$0x3] %vm56, 0.0
    %74 = vst.msk [vmem:[#allocation3 + $0x90] sm:$0xff] %vm54, 0.0
    %75 = vst.msk [vmem:[#allocation3 + $0x98] sm:$0x3] %vm56, 0.0
    %76 = vst.msk [vmem:[#allocation3 + $0xa0] sm:$0xff] %vm54, 0.0
    %77 = vst.msk [vmem:[#allocation3 + $0xa8] sm:$0x3] %vm56, 0.0
    %78 = vst.msk [vmem:[#allocation3 + $0xb0] sm:$0xff] %vm54, 0.0
    %79 = vst.msk [vmem:[#allocation3 + $0xb8] sm:$0x3] %vm56, 0.0
    %80 = vst.msk [vmem:[#allocation3 + $0xc0] sm:$0xff] %vm54, 0.0
    %81 = vst.msk [vmem:[#allocation3 + $0xc8] sm:$0x3] %vm56, 0.0
    %82 = vst.msk [vmem:[#allocation3 + $0xd0] sm:$0xff] %vm54, 0.0
    %83 = vst.msk [vmem:[#allocation3 + $0xd8] sm:$0x3] %vm56, 0.0
    %84 = vst.msk [vmem:[#allocation3 + $0xe0] sm:$0xff] %vm54, 0.0
    %85 = vst.msk [vmem:[#allocation3 + $0xe8] sm:$0x3] %vm56, 0.0
    %86 = vst.msk [vmem:[#allocation3 + $0xf0] sm:$0xff] %vm54, 0.0
    %87 = vst.msk [vmem:[#allocation3 + $0xf8] sm:$0x3] %vm56, 0.0
    %88 = vst.msk [vmem:[#allocation3 + $0x100] sm:$0xff] %vm54, 0.0
    %89 = vst.msk [vmem:[#allocation3 + $0x108] sm:$0x3] %vm56, 0.0
    %90 = vst.msk [vmem:[#allocation3 + $0x110] sm:$0xff] %vm54, 0.0
    %91 = vst.msk [vmem:[#allocation3 + $0x118] sm:$0x3] %vm56, 0.0
    %92 = vst.msk [vmem:[#allocation3 + $0x120] sm:$0xff] %vm54, 0.0
    %93 = vst.msk [vmem:[#allocation3 + $0x128] sm:$0x3] %vm56, 0.0
    %94 = vst.msk [vmem:[#allocation3 + $0x130] sm:$0xff] %vm54, 0.0
    %95 = vst.msk [vmem:[#allocation3 + $0x138] sm:$0x3] %vm56, 0.0
    %v96 = vld [vmem:[%s0] sm:$0xff]
    %v97 = vld [vmem:[%s0 + $0x8] sm:$0xff]
    %v98 = vld [vmem:[%s0 + $0x10] sm:$0xff]
    %v99 = vld [vmem:[%s0 + $0x18] sm:$0xff]
    %v100 = vld [vmem:[%s0 + $0x20] sm:$0xff]
    %v101 = vld [vmem:[%s0 + $0x28] sm:$0xff]
    %v102 = vld [vmem:[%s0 + $0x30] sm:$0xff]
    %v103 = vld [vmem:[%s0 + $0x38] sm:$0xff]
    %v104 = vld [vmem:[%s0 + $0x40] sm:$0xff]
    %v105 = vld [vmem:[%s0 + $0x48] sm:$0xff]
    %v106 = vld [vmem:[%s0 + $0x50] sm:$0xff]
    %v107 = vld [vmem:[%s0 + $0x58] sm:$0xff]
    %v108 = vld [vmem:[%s0 + $0x60] sm:$0xff]
    %v109 = vld [vmem:[%s0 + $0x68] sm:$0xff]
    %v110 = vld [vmem:[%s0 + $0x70] sm:$0xff]
    %v111 = vld [vmem:[%s0 + $0x78] sm:$0xff]
    %v112 = vld [vmem:[%s0 + $0x80] sm:$0xff]
    %v113 = vld [vmem:[%s0 + $0x88] sm:$0xff]
    %v114 = vld [vmem:[%s0 + $0x90] sm:$0xff]
    %v115 = vld [vmem:[%s0 + $0x98] sm:$0xff]
    %v116 = vld [vmem:[%s0 + $0xa0] sm:$0xff]
    %v117 = vld [vmem:[%s0 + $0xa8] sm:$0xff]
    %v118 = vld [vmem:[%s0 + $0xb0] sm:$0xff]
    %v119 = vld [vmem:[%s0 + $0xb8] sm:$0xff]
    %v120 = vld [vmem:[%s0 + $0xc0] sm:$0xff]
    %v121 = vld [vmem:[%s0 + $0xc8] sm:$0xff]
    %v122 = vld [vmem:[%s0 + $0xd0] sm:$0xff]
    %v123 = vld [vmem:[%s0 + $0xd8] sm:$0xff]
    %v124 = vld [vmem:[%s0 + $0xe0] sm:$0xff]
    %v125 = vld [vmem:[%s0 + $0xe8] sm:$0xff]
    %v126 = vld [vmem:[%s0 + $0xf0] sm:$0xff]
    %v127 = vld [vmem:[%s0 + $0xf8] sm:$0xff]
    %v128 = vld [vmem:[%s0 + $0x100] sm:$0xff]
    %v129 = vld [vmem:[%s0 + $0x108] sm:$0xff]
    %v130 = vld [vmem:[%s0 + $0x110] sm:$0xff]
    %v131 = vld [vmem:[%s0 + $0x118] sm:$0xff]
    %v132 = vld [vmem:[%s0 + $0x120] sm:$0xff]
    %v133 = vld [vmem:[%s0 + $0x128] sm:$0xff]
    %v134 = vld [vmem:[%s0 + $0x130] sm:$0xff]
    %v135 = vld [vmem:[%s0 + $0x138] sm:$0xff]
    %v136 = vld [vmem:[%s0 + $0x140] sm:$0xff]
    %v137 = vld [vmem:[%s0 + $0x148] sm:$0xff]
    %v138 = vld [vmem:[%s0 + $0x150] sm:$0xff]
    %v139 = vld [vmem:[%s0 + $0x158] sm:$0xff]
    %v140 = vld [vmem:[%s0 + $0x160] sm:$0xff]
    %v141 = vld [vmem:[%s0 + $0x168] sm:$0xff]
    %v142 = vld [vmem:[%s0 + $0x170] sm:$0xff]
    %v143 = vld [vmem:[%s0 + $0x178] sm:$0xff]
    %v144 = vld [vmem:[%s1] sm:$0xff]
    %v145 = vld [vmem:[%s1 + $0x8] sm:$0xff]
    %v146 = vld [vmem:[%s1 + $0x10] sm:$0xff]
    %v147 = vld [vmem:[%s1 + $0x18] sm:$0xff]
    %v148 = vld [vmem:[%s1 + $0x20] sm:$0xff]
    %v149 = vld [vmem:[%s1 + $0x28] sm:$0xff]
    %v150 = vld [vmem:[%s1 + $0x30] sm:$0xff]
    %v151 = vld [vmem:[%s1 + $0x38] sm:$0xff]
    %v152 = vld [vmem:[%s1 + $0x40] sm:$0xff]
    %v153 = vld [vmem:[%s1 + $0x48] sm:$0xff]
    %v154 = vld [vmem:[%s1 + $0x50] sm:$0xff]
    %v155 = vld [vmem:[%s1 + $0x58] sm:$0xff]
    %v156 = vld [vmem:[%s1 + $0x60] sm:$0xff]
    %v157 = vld [vmem:[%s1 + $0x68] sm:$0xff]
    %v158 = vld [vmem:[%s1 + $0x70] sm:$0xff]
    %v159 = vld [vmem:[%s1 + $0x78] sm:$0xff]
    %v160 = vld [vmem:[%s1 + $0x80] sm:$0xff]
    %v161 = vld [vmem:[%s1 + $0x88] sm:$0xff]
    %v162 = vld [vmem:[%s1 + $0x90] sm:$0xff]
    %v163 = vld [vmem:[%s1 + $0x98] sm:$0xff]
    %v164 = vld [vmem:[%s1 + $0xa0] sm:$0xff]
    %v165 = vld [vmem:[%s1 + $0xa8] sm:$0xff]
    %v166 = vld [vmem:[%s1 + $0xb0] sm:$0xff]
    %v167 = vld [vmem:[%s1 + $0xb8] sm:$0xff]
    %v168 = vld [vmem:[%s1 + $0xc0] sm:$0xff]
    %v169 = vld [vmem:[%s1 + $0xc8] sm:$0xff]
    %v170 = vld [vmem:[%s1 + $0xd0] sm:$0xff]
    %v171 = vld [vmem:[%s1 + $0xd8] sm:$0xff]
    %v172 = vld [vmem:[%s1 + $0xe0] sm:$0xff]
    %v173 = vld [vmem:[%s1 + $0xe8] sm:$0xff]
    %v174 = vld [vmem:[%s1 + $0xf0] sm:$0xff]
    %v175 = vld [vmem:[%s1 + $0xf8] sm:$0xff]
    %v176 = vld [vmem:[%s1 + $0x100] sm:$0xff]
    %v177 = vld [vmem:[%s1 + $0x108] sm:$0xff]
    %v178 = vld [vmem:[%s1 + $0x110] sm:$0xff]
    %v179 = vld [vmem:[%s1 + $0x118] sm:$0xff]
    %v180 = vld [vmem:[%s1 + $0x120] sm:$0xff]
    %v181 = vld [vmem:[%s1 + $0x128] sm:$0xff]
    %v182 = vld [vmem:[%s1 + $0x130] sm:$0xff]
    %v183 = vld [vmem:[%s1 + $0x138] sm:$0xff]
    %v184 = vld [vmem:[%s1 + $0x140] sm:$0xff]
    %v185 = vld [vmem:[%s1 + $0x148] sm:$0xff]
    %v186 = vld [vmem:[%s1 + $0x150] sm:$0xff]
    %v187 = vld [vmem:[%s1 + $0x158] sm:$0xff]
    %v188 = vld [vmem:[%s1 + $0x160] sm:$0xff]
    %v189 = vld [vmem:[%s1 + $0x168] sm:$0xff]
    %v190 = vld [vmem:[%s1 + $0x170] sm:$0xff]
    %v191 = vld [vmem:[%s1 + $0x178] sm:$0xff]
    %192 = vmatpush.msra.mxu0 %v159
    %193 = vmatpush.msra.mxu0 %v158
    %194 = vmatpush.msra.mxu0 %v157
    %195 = vmatpush.msra.mxu0 %v156
    %196 = vmatpush.msra.mxu0 %v155
    %197 = vmatpush.msra.mxu0 %v154
    %198 = vmatpush.msra.mxu0 %v153
    %199 = vmatpush.msra.mxu0 %v152
    %200 = vmatpush.msra.mxu0 %v151
    %201 = vmatpush.msra.mxu0 %v150
    %202 = vmatpush.msra.mxu0 %v149
    %203 = vmatpush.msra.mxu0 %v148
    %204 = vmatpush.msra.mxu0 %v147
    %205 = vmatpush.msra.mxu0 %v146
    %206 = vmatpush.msra.mxu0 %v145
    %207 = vmatpush.msra.mxu0 %v144
    %208 = vmatmul.f32.gmra.mxu0 %v96
    %v209 = vpop.f32.mrf.mxu0
    %v210 = vadd.f32 0.0, %v209
    %211 = vmatmul.f32.gmra.mxu0 %v99
    %v212 = vpop.f32.mrf.mxu0
    %v213 = vadd.f32 0.0, %v212
    %214 = vmatmul.f32.gmra.mxu0 %v102
    %v215 = vpop.f32.mrf.mxu0
    %v216 = vadd.f32 0.0, %v215
    %217 = vmatmul.f32.gmra.mxu0 %v105
    %v218 = vpop.f32.mrf.mxu0
    %v219 = vadd.f32 0.0, %v218
    %220 = vmatmul.f32.gmra.mxu0 %v108
    %v221 = vpop.f32.mrf.mxu0
    %v222 = vadd.f32 0.0, %v221
    %223 = vmatmul.f32.gmra.mxu0 %v111
    %v224 = vpop.f32.mrf.mxu0
    %v225 = vadd.f32 0.0, %v224
    %226 = vmatmul.f32.gmra.mxu0 %v114
    %v227 = vpop.f32.mrf.mxu0
    %v228 = vadd.f32 0.0, %v227
    %229 = vmatmul.f32.gmra.mxu0 %v117
    %v230 = vpop.f32.mrf.mxu0
    %v231 = vadd.f32 0.0, %v230
    %232 = vmatmul.f32.gmra.mxu0 %v120
    %v233 = vpop.f32.mrf.mxu0
    %v234 = vadd.f32 0.0, %v233
    %235 = vmatmul.f32.gmra.mxu0 %v123
    %v236 = vpop.f32.mrf.mxu0
    %v237 = vadd.f32 0.0, %v236
    %238 = vmatmul.f32.gmra.mxu0 %v126
    %v239 = vpop.f32.mrf.mxu0
    %v240 = vadd.f32 0.0, %v239
    %241 = vmatmul.f32.gmra.mxu0 %v129
    %v242 = vpop.f32.mrf.mxu0
    %v243 = vadd.f32 0.0, %v242
    %244 = vmatmul.f32.gmra.mxu0 %v132
    %v245 = vpop.f32.mrf.mxu0
    %v246 = vadd.f32 0.0, %v245
    %247 = vmatmul.f32.gmra.mxu0 %v135
    %v248 = vpop.f32.mrf.mxu0
    %v249 = vadd.f32 0.0, %v248
    %250 = vmatmul.f32.gmra.mxu0 %v138
    %v251 = vpop.f32.mrf.mxu0
    %v252 = vadd.f32 0.0, %v251
    %253 = vmatmul.f32.gmra.mxu0 %v141
    %v254 = vpop.f32.mrf.mxu0
    %v255 = vadd.f32 0.0, %v254
    %256 = vdwg.mxu0
    %257 = vmatpush.msra.mxu0 %v175
    %258 = vmatpush.msra.mxu0 %v174
    %259 = vmatpush.msra.mxu0 %v173
    %260 = vmatpush.msra.mxu0 %v172
    %261 = vmatpush.msra.mxu0 %v171
    %262 = vmatpush.msra.mxu0 %v170
    %263 = vmatpush.msra.mxu0 %v169
    %264 = vmatpush.msra.mxu0 %v168
    %265 = vmatpush.msra.mxu0 %v167
    %266 = vmatpush.msra.mxu0 %v166
    %267 = vmatpush.msra.mxu0 %v165
    %268 = vmatpush.msra.mxu0 %v164
    %269 = vmatpush.msra.mxu0 %v163
    %270 = vmatpush.msra.mxu0 %v162
    %271 = vmatpush.msra.mxu0 %v161
    %272 = vmatpush.msra.mxu0 %v160
    %273 = vmatmul.f32.gmra.mxu0 %v97
    %v274 = vpop.f32.mrf.mxu0
    %v275 = vadd.f32 %v210, %v274
    %276 = vmatmul.f32.gmra.mxu0 %v100
    %v277 = vpop.f32.mrf.mxu0
    %v278 = vadd.f32 %v213, %v277
    %279 = vmatmul.f32.gmra.mxu0 %v103
    %v280 = vpop.f32.mrf.mxu0
    %v281 = vadd.f32 %v216, %v280
    %282 = vmatmul.f32.gmra.mxu0 %v106
    %v283 = vpop.f32.mrf.mxu0
    %v284 = vadd.f32 %v219, %v283
    %285 = vmatmul.f32.gmra.mxu0 %v109
    %v286 = vpop.f32.mrf.mxu0
    %v287 = vadd.f32 %v222, %v286
    %288 = vmatmul.f32.gmra.mxu0 %v112
    %v289 = vpop.f32.mrf.mxu0
    %v290 = vadd.f32 %v225, %v289
    %291 = vmatmul.f32.gmra.mxu0 %v115
    %v292 = vpop.f32.mrf.mxu0
    %v293 = vadd.f32 %v228, %v292
    %294 = vmatmul.f32.gmra.mxu0 %v118
    %v295 = vpop.f32.mrf.mxu0
    %v296 = vadd.f32 %v231, %v295
    %297 = vmatmul.f32.gmra.mxu0 %v121
    %v298 = vpop.f32.mrf.mxu0
    %v299 = vadd.f32 %v234, %v298
    %300 = vmatmul.f32.gmra.mxu0 %v124
    %v301 = vpop.f32.mrf.mxu0
    %v302 = vadd.f32 %v237, %v301
    %303 = vmatmul.f32.gmra.mxu0 %v127
    %v304 = vpop.f32.mrf.mxu0
    %v305 = vadd.f32 %v240, %v304
    %306 = vmatmul.f32.gmra.mxu0 %v130
    %v307 = vpop.f32.mrf.mxu0
    %v308 = vadd.f32 %v243, %v307
    %309 = vmatmul.f32.gmra.mxu0 %v133
    %v310 = vpop.f32.mrf.mxu0
    %v311 = vadd.f32 %v246, %v310
    %312 = vmatmul.f32.gmra.mxu0 %v136
    %v313 = vpop.f32.mrf.mxu0
    %v314 = vadd.f32 %v249, %v313
    %315 = vmatmul.f32.gmra.mxu0 %v139
    %v316 = vpop.f32.mrf.mxu0
    %v317 = vadd.f32 %v252, %v316
    %318 = vmatmul.f32.gmra.mxu0 %v142
    %v319 = vpop.f32.mrf.mxu0
    %v320 = vadd.f32 %v255, %v319
    %321 = vdwg.mxu0
    %322 = vmatpush.msra.mxu0 %v191
    %323 = vmatpush.msra.mxu0 %v190
    %324 = vmatpush.msra.mxu0 %v189
    %325 = vmatpush.msra.mxu0 %v188
    %326 = vmatpush.msra.mxu0 %v187
    %327 = vmatpush.msra.mxu0 %v186
    %328 = vmatpush.msra.mxu0 %v185
    %329 = vmatpush.msra.mxu0 %v184
    %330 = vmatpush.msra.mxu0 %v183
    %331 = vmatpush.msra.mxu0 %v182
    %332 = vmatpush.msra.mxu0 %v181
    %333 = vmatpush.msra.mxu0 %v180
    %334 = vmatpush.msra.mxu0 %v179
    %335 = vmatpush.msra.mxu0 %v178
    %336 = vmatpush.msra.mxu0 %v177
    %337 = vmatpush.msra.mxu0 %v176
    %338 = vmatmul.f32.gmra.mxu0 %v98
    %v339 = vpop.f32.mrf.mxu0
    %v340 = vadd.f32 %v275, %v339
    %341 = vmatmul.f32.gmra.mxu0 %v101
    %v342 = vpop.f32.mrf.mxu0
    %v343 = vadd.f32 %v278, %v342
    %344 = vmatmul.f32.gmra.mxu0 %v104
    %v345 = vpop.f32.mrf.mxu0
    %v346 = vadd.f32 %v281, %v345
    %347 = vmatmul.f32.gmra.mxu0 %v107
    %v348 = vpop.f32.mrf.mxu0
    %v349 = vadd.f32 %v284, %v348
    %350 = vmatmul.f32.gmra.mxu0 %v110
    %v351 = vpop.f32.mrf.mxu0
    %v352 = vadd.f32 %v287, %v351
    %353 = vmatmul.f32.gmra.mxu0 %v113
    %v354 = vpop.f32.mrf.mxu0
    %v355 = vadd.f32 %v290, %v354
    %356 = vmatmul.f32.gmra.mxu0 %v116
    %v357 = vpop.f32.mrf.mxu0
    %v358 = vadd.f32 %v293, %v357
    %359 = vmatmul.f32.gmra.mxu0 %v119
    %v360 = vpop.f32.mrf.mxu0
    %v361 = vadd.f32 %v296, %v360
    %362 = vmatmul.f32.gmra.mxu0 %v122
    %v363 = vpop.f32.mrf.mxu0
    %v364 = vadd.f32 %v299, %v363
    %365 = vmatmul.f32.gmra.mxu0 %v125
    %v366 = vpop.f32.mrf.mxu0
    %v367 = vadd.f32 %v302, %v366
    %368 = vmatmul.f32.gmra.mxu0 %v128
    %v369 = vpop.f32.mrf.mxu0
    %v370 = vadd.f32 %v305, %v369
    %371 = vmatmul.f32.gmra.mxu0 %v131
    %v372 = vpop.f32.mrf.mxu0
    %v373 = vadd.f32 %v308, %v372
    %374 = vmatmul.f32.gmra.mxu0 %v134
    %v375 = vpop.f32.mrf.mxu0
    %v376 = vadd.f32 %v311, %v375
    %377 = vmatmul.f32.gmra.mxu0 %v137
    %v378 = vpop.f32.mrf.mxu0
    %v379 = vadd.f32 %v314, %v378
    %380 = vmatmul.f32.gmra.mxu0 %v140
    %v381 = vpop.f32.mrf.mxu0
    %v382 = vadd.f32 %v317, %v381
    %383 = vmatmul.f32.gmra.mxu0 %v143
    %v384 = vpop.f32.mrf.mxu0
    %v385 = vadd.f32 %v320, %v384
    %386 = vdwg.mxu0
    %v387 = vld [vmem:[%s2] sm:$0x1]
    %v389 = vperm.slane %v387, 0
    %v391 = vmul.f32 %v340, %v389
    %v392 = vmul.f32 %v343, %v389
    %v393 = vmul.f32 %v346, %v389
    %v394 = vmul.f32 %v349, %v389
    %v395 = vmul.f32 %v352, %v389
    %v396 = vmul.f32 %v355, %v389
    %v397 = vmul.f32 %v358, %v389
    %v398 = vmul.f32 %v361, %v389
    %v399 = vmul.f32 %v364, %v389
    %v400 = vmul.f32 %v367, %v389
    %v401 = vmul.f32 %v370, %v389
    %v402 = vmul.f32 %v373, %v389
    %v403 = vmul.f32 %v376, %v389
    %v404 = vmul.f32 %v379, %v389
    %v405 = vmul.f32 %v382, %v389
    %v406 = vmul.f32 %v385, %v389
    %v407 = vld [vmem:[%s3] sm:$0x1]
    %v409 = vperm.slane %v407, 0
    %v411 = vadd.f32 %v391, %v409
    %v412 = vadd.f32 %v392, %v409
    %v413 = vadd.f32 %v393, %v409
    %v414 = vadd.f32 %v394, %v409
    %v415 = vadd.f32 %v395, %v409
    %v416 = vadd.f32 %v396, %v409
    %v417 = vadd.f32 %v397, %v409
    %v418 = vadd.f32 %v398, %v409
    %v419 = vadd.f32 %v399, %v409
    %v420 = vadd.f32 %v400, %v409
    %v421 = vadd.f32 %v401, %v409
    %v422 = vadd.f32 %v402, %v409
    %v423 = vadd.f32 %v403, %v409
    %v424 = vadd.f32 %v404, %v409
    %v425 = vadd.f32 %v405, %v409
    %v426 = vadd.f32 %v406, %v409
    %v427 = vmax.f32 %v411, 0.0
    %v428 = vmax.f32 %v412, 0.0
    %v429 = vmax.f32 %v413, 0.0
    %v430 = vmax.f32 %v414, 0.0
    %v431 = vmax.f32 %v415, 0.0
    %v432 = vmax.f32 %v416, 0.0
    %v433 = vmax.f32 %v417, 0.0
    %v434 = vmax.f32 %v418, 0.0
    %v435 = vmax.f32 %v419, 0.0
    %v436 = vmax.f32 %v420, 0.0
    %v437 = vmax.f32 %v421, 0.0
    %v438 = vmax.f32 %v422, 0.0
    %v439 = vmax.f32 %v423, 0.0
    %v440 = vmax.f32 %v424, 0.0
    %v441 = vmax.f32 %v425, 0.0
    %v442 = vmax.f32 %v426, 0.0
    %vm443 = vcmask 785408
    %444 = vst.msk [vmem:[#allocation2] sm:$0xff] %vm443, %v427
    %445 = vst.msk [vmem:[#allocation2 + $0x8] sm:$0xff] %vm443, %v428
    %446 = vst.msk [vmem:[#allocation2 + $0x10] sm:$0xff] %vm443, %v429
    %447 = vst.msk [vmem:[#allocation2 + $0x18] sm:$0xff] %vm443, %v430
    %448 = vst.msk [vmem:[#allocation2 + $0x20] sm:$0xff] %vm443, %v431
    %449 = vst.msk [vmem:[#allocation2 + $0x28] sm:$0xff] %vm443, %v432
    %450 = vst.msk [vmem:[#allocation2 + $0x30] sm:$0xff] %vm443, %v433
    %451 = vst.msk [vmem:[#allocation2 + $0x38] sm:$0xff] %vm443, %v434
    %452 = vst.msk [vmem:[#allocation2 + $0x40] sm:$0xff] %vm443, %v435
    %453 = vst.msk [vmem:[#allocation2 + $0x48] sm:$0xff] %vm443, %v436
    %454 = vst.msk [vmem:[#allocation2 + $0x50] sm:$0xff] %vm443, %v437
    %455 = vst.msk [vmem:[#allocation2 + $0x58] sm:$0xff] %vm443, %v438
    %456 = vst.msk [vmem:[#allocation2 + $0x60] sm:$0xff] %vm443, %v439
    %457 = vst.msk [vmem:[#allocation2 + $0x68] sm:$0xff] %vm443, %v440
    %458 = vst.msk [vmem:[#allocation2 + $0x70] sm:$0xff] %vm443, %v441
    %459 = vst.msk [vmem:[#allocation2 + $0x78] sm:$0xff] %vm443, %v442
    %v460 = vld [vmem:[#allocation2] sm:$0xff]
    %v461 = vld [vmem:[#allocation2 + $0x8] sm:$0xff]
    %v462 = vld [vmem:[#allocation2 + $0x10] sm:$0xff]
    %v463 = vld [vmem:[#allocation2 + $0x18] sm:$0xff]
    %v464 = vld [vmem:[#allocation2 + $0x20] sm:$0xff]
    %v465 = vld [vmem:[#allocation2 + $0x28] sm:$0xff]
    %v466 = vld [vmem:[#allocation2 + $0x30] sm:$0xff]
    %v467 = vld [vmem:[#allocation2 + $0x38] sm:$0xff]
    %v468 = vld [vmem:[#allocation2 + $0x40] sm:$0xff]
    %v469 = vld [vmem:[#allocation2 + $0x48] sm:$0xff]
    %v470 = vld [vmem:[#allocation2 + $0x50] sm:$0xff]
    %v471 = vld [vmem:[#allocation2 + $0x58] sm:$0xff]
    %v472 = vld [vmem:[#allocation2 + $0x60] sm:$0xff]
    %v473 = vld [vmem:[#allocation2 + $0x68] sm:$0xff]
    %v474 = vld [vmem:[#allocation2 + $0x70] sm:$0xff]
    %v475 = vld [vmem:[#allocation2 + $0x78] sm:$0xff]
    %s476 = scalar_lea.vmem [#allocation3], 16
    %vm477 = vcmask 261120
    %478 = vst.msk [vmem:[%s476 + $0x1] sm:$0xff] %vm477, %v460
    %479 = vst.msk [vmem:[%s476 + $0x11] sm:$0xff] %vm477, %v461
    %480 = vst.msk [vmem:[%s476 + $0x21] sm:$0xff] %vm477, %v462
    %481 = vst.msk [vmem:[%s476 + $0x31] sm:$0xff] %vm477, %v463
    %482 = vst.msk [vmem:[%s476 + $0x41] sm:$0xff] %vm477, %v464
    %483 = vst.msk [vmem:[%s476 + $0x51] sm:$0xff] %vm477, %v465
    %484 = vst.msk [vmem:[%s476 + $0x61] sm:$0xff] %vm477, %v466
    %485 = vst.msk [vmem:[%s476 + $0x71] sm:$0xff] %vm477, %v467
    %486 = vst.msk [vmem:[%s476 + $0xa1] sm:$0xff] %vm477, %v468
    %487 = vst.msk [vmem:[%s476 + $0xb1] sm:$0xff] %vm477, %v469
    %488 = vst.msk [vmem:[%s476 + $0xc1] sm:$0xff] %vm477, %v470
    %489 = vst.msk [vmem:[%s476 + $0xd1] sm:$0xff] %vm477, %v471
    %490 = vst.msk [vmem:[%s476 + $0xe1] sm:$0xff] %vm477, %v472
    %491 = vst.msk [vmem:[%s476 + $0xf1] sm:$0xff] %vm477, %v473
    %492 = vst.msk [vmem:[%s476 + $0x101] sm:$0xff] %vm477, %v474
    %493 = vst.msk [vmem:[%s476 + $0x111] sm:$0xff] %vm477, %v475
    %v494 = vld [vmem:[#allocation3] sm:$0xff]
    %v495 = vld [vmem:[#allocation3 + $0x10] sm:$0xff]
    %v496 = vld [vmem:[#allocation3 + $0x20] sm:$0xff]
    %v497 = vld [vmem:[#allocation3 + $0x30] sm:$0xff]
    %v498 = vld [vmem:[#allocation3 + $0x40] sm:$0xff]
    %v499 = vld [vmem:[#allocation3 + $0x50] sm:$0xff]
    %v500 = vld [vmem:[#allocation3 + $0x60] sm:$0xff]
    %v501 = vld [vmem:[#allocation3 + $0x70] sm:$0xff]
    %v502 = vld [vmem:[#allocation3 + $0xa0] sm:$0xff]
    %v503 = vld [vmem:[#allocation3 + $0xb0] sm:$0xff]
    %v504 = vld [vmem:[#allocation3 + $0xc0] sm:$0xff]
    %v505 = vld [vmem:[#allocation3 + $0xd0] sm:$0xff]
    %v506 = vld [vmem:[#allocation3 + $0xe0] sm:$0xff]
    %v507 = vld [vmem:[#allocation3 + $0xf0] sm:$0xff]
    %v508 = vld [vmem:[#allocation3 + $0x100] sm:$0xff]
    %v509 = vld [vmem:[#allocation3 + $0x110] sm:$0xff]
    %510 = vst.msk [vmem:[#allocation4] sm:$0xff] %vm477, %v494
    %511 = vst.msk [vmem:[#allocation4 + $0x20] sm:$0xff] %vm477, %v495
    %512 = vst.msk [vmem:[#allocation4 + $0x40] sm:$0xff] %vm477, %v496
    %513 = vst.msk [vmem:[#allocation4 + $0x60] sm:$0xff] %vm477, %v497
    %514 = vst.msk [vmem:[#allocation4 + $0x80] sm:$0xff] %vm477, %v498
    %515 = vst.msk [vmem:[#allocation4 + $0xa0] sm:$0xff] %vm477, %v499
    %516 = vst.msk [vmem:[#allocation4 + $0xc0] sm:$0xff] %vm477, %v500
    %517 = vst.msk [vmem:[#allocation4 + $0xe0] sm:$0xff] %vm477, %v501
    %518 = vst.msk [vmem:[#allocation4 + $0x100] sm:$0xff] %vm477, %v502
    %519 = vst.msk [vmem:[#allocation4 + $0x120] sm:$0xff] %vm477, %v503
    %520 = vst.msk [vmem:[#allocation4 + $0x140] sm:$0xff] %vm477, %v504
    %521 = vst.msk [vmem:[#allocation4 + $0x160] sm:$0xff] %vm477, %v505
    %522 = vst.msk [vmem:[#allocation4 + $0x180] sm:$0xff] %vm477, %v506
    %523 = vst.msk [vmem:[#allocation4 + $0x1a0] sm:$0xff] %vm477, %v507
    %524 = vst.msk [vmem:[#allocation4 + $0x1c0] sm:$0xff] %vm477, %v508
    %525 = vst.msk [vmem:[#allocation4 + $0x1e0] sm:$0xff] %vm477, %v509
    %v526 = vld [vmem:[#allocation3 + $0x1] sm:$0xff]
    %v527 = vld [vmem:[#allocation3 + $0x11] sm:$0xff]
    %v528 = vld [vmem:[#allocation3 + $0x21] sm:$0xff]
    %v529 = vld [vmem:[#allocation3 + $0x31] sm:$0xff]
    %v530 = vld [vmem:[#allocation3 + $0x41] sm:$0xff]
    %v531 = vld [vmem:[#allocation3 + $0x51] sm:$0xff]
    %v532 = vld [vmem:[#allocation3 + $0x61] sm:$0xff]
    %v533 = vld [vmem:[#allocation3 + $0x71] sm:$0xff]
    %v534 = vld [vmem:[#allocation3 + $0xa1] sm:$0xff]
    %v535 = vld [vmem:[#allocation3 + $0xb1] sm:$0xff]
    %v536 = vld [vmem:[#allocation3 + $0xc1] sm:$0xff]
    %v537 = vld [vmem:[#allocation3 + $0xd1] sm:$0xff]
    %v538 = vld [vmem:[#allocation3 + $0xe1] sm:$0xff]
    %v539 = vld [vmem:[#allocation3 + $0xf1] sm:$0xff]
    %v540 = vld [vmem:[#allocation3 + $0x101] sm:$0xff]
    %v541 = vld [vmem:[#allocation3 + $0x111] sm:$0xff]
    %558 = vrot.lane.b32.xlu0 %v526, 32
    %v559 = vpop.permute.xlu0 %558
    %560 = vrot.lane.b32.xlu0 %v527, 32
    %v561 = vpop.permute.xlu0 %560
    %562 = vrot.lane.b32.xlu0 %v528, 32
    %v563 = vpop.permute.xlu0 %562
    %564 = vrot.lane.b32.xlu0 %v529, 32
    %v565 = vpop.permute.xlu0 %564
    %566 = vrot.lane.b32.xlu0 %v530, 32
    %v567 = vpop.permute.xlu0 %566
    %568 = vrot.lane.b32.xlu0 %v531, 32
    %v569 = vpop.permute.xlu0 %568
    %570 = vrot.lane.b32.xlu0 %v532, 32
    %v571 = vpop.permute.xlu0 %570
    %572 = vrot.lane.b32.xlu0 %v533, 32
    %v573 = vpop.permute.xlu0 %572
    %574 = vrot.lane.b32.xlu0 %v534, 32
    %v575 = vpop.permute.xlu0 %574
    %576 = vrot.lane.b32.xlu0 %v535, 32
    %v577 = vpop.permute.xlu0 %576
    %578 = vrot.lane.b32.xlu0 %v536, 32
    %v579 = vpop.permute.xlu0 %578
    %580 = vrot.lane.b32.xlu0 %v537, 32
    %v581 = vpop.permute.xlu0 %580
    %582 = vrot.lane.b32.xlu0 %v538, 32
    %v583 = vpop.permute.xlu0 %582
    %584 = vrot.lane.b32.xlu0 %v539, 32
    %v585 = vpop.permute.xlu0 %584
    %586 = vrot.lane.b32.xlu0 %v540, 32
    %v587 = vpop.permute.xlu0 %586
    %588 = vrot.lane.b32.xlu0 %v541, 32
    %v589 = vpop.permute.xlu0 %588
    %vm606 = vcmask 523520
    %607 = vst.msk [vmem:[#allocation4] sm:$0xff] %vm606, %v559
    %608 = vst.msk [vmem:[#allocation4 + $0x20] sm:$0xff] %vm606, %v561
    %609 = vst.msk [vmem:[#allocation4 + $0x40] sm:$0xff] %vm606, %v563
    %610 = vst.msk [vmem:[#allocation4 + $0x60] sm:$0xff] %vm606, %v565
    %611 = vst.msk [vmem:[#allocation4 + $0x80] sm:$0xff] %vm606, %v567
    %612 = vst.msk [vmem:[#allocation4 + $0xa0] sm:$0xff] %vm606, %v569
    %613 = vst.msk [vmem:[#allocation4 + $0xc0] sm:$0xff] %vm606, %v571
    %614 = vst.msk [vmem:[#allocation4 + $0xe0] sm:$0xff] %vm606, %v573
    %615 = vst.msk [vmem:[#allocation4 + $0x100] sm:$0xff] %vm606, %v575
    %616 = vst.msk [vmem:[#allocation4 + $0x120] sm:$0xff] %vm606, %v577
    %617 = vst.msk [vmem:[#allocation4 + $0x140] sm:$0xff] %vm606, %v579
    %618 = vst.msk [vmem:[#allocation4 + $0x160] sm:$0xff] %vm606, %v581
    %619 = vst.msk [vmem:[#allocation4 + $0x180] sm:$0xff] %vm606, %v583
    %620 = vst.msk [vmem:[#allocation4 + $0x1a0] sm:$0xff] %vm606, %v585
    %621 = vst.msk [vmem:[#allocation4 + $0x1c0] sm:$0xff] %vm606, %v587
    %622 = vst.msk [vmem:[#allocation4 + $0x1e0] sm:$0xff] %vm606, %v589
    %v623 = vld [vmem:[#allocation3 + $0x2] sm:$0xff]
    %v624 = vld [vmem:[#allocation3 + $0x12] sm:$0xff]
    %v625 = vld [vmem:[#allocation3 + $0x22] sm:$0xff]
    %v626 = vld [vmem:[#allocation3 + $0x32] sm:$0xff]
    %v627 = vld [vmem:[#allocation3 + $0x42] sm:$0xff]
    %v628 = vld [vmem:[#allocation3 + $0x52] sm:$0xff]
    %v629 = vld [vmem:[#allocation3 + $0x62] sm:$0xff]
    %v630 = vld [vmem:[#allocation3 + $0x72] sm:$0xff]
    %v631 = vld [vmem:[#allocation3 + $0xa2] sm:$0xff]
    %v632 = vld [vmem:[#allocation3 + $0xb2] sm:$0xff]
    %v633 = vld [vmem:[#allocation3 + $0xc2] sm:$0xff]
    %v634 = vld [vmem:[#allocation3 + $0xd2] sm:$0xff]
    %v635 = vld [vmem:[#allocation3 + $0xe2] sm:$0xff]
    %v636 = vld [vmem:[#allocation3 + $0xf2] sm:$0xff]
    %v637 = vld [vmem:[#allocation3 + $0x102] sm:$0xff]
    %v638 = vld [vmem:[#allocation3 + $0x112] sm:$0xff]
    %655 = vrot.lane.b32.xlu0 %v623, 64
    %v656 = vpop.permute.xlu0 %655
    %657 = vrot.lane.b32.xlu0 %v624, 64
    %v658 = vpop.permute.xlu0 %657
    %659 = vrot.lane.b32.xlu0 %v625, 64
    %v660 = vpop.permute.xlu0 %659
    %661 = vrot.lane.b32.xlu0 %v626, 64
    %v662 = vpop.permute.xlu0 %661
    %663 = vrot.lane.b32.xlu0 %v627, 64
    %v664 = vpop.permute.xlu0 %663
    %665 = vrot.lane.b32.xlu0 %v628, 64
    %v666 = vpop.permute.xlu0 %665
    %667 = vrot.lane.b32.xlu0 %v629, 64
    %v668 = vpop.permute.xlu0 %667
    %669 = vrot.lane.b32.xlu0 %v630, 64
    %v670 = vpop.permute.xlu0 %669
    %671 = vrot.lane.b32.xlu0 %v631, 64
    %v672 = vpop.permute.xlu0 %671
    %673 = vrot.lane.b32.xlu0 %v632, 64
    %v674 = vpop.permute.xlu0 %673
    %675 = vrot.lane.b32.xlu0 %v633, 64
    %v676 = vpop.permute.xlu0 %675
    %677 = vrot.lane.b32.xlu0 %v634, 64
    %v678 = vpop.permute.xlu0 %677
    %679 = vrot.lane.b32.xlu0 %v635, 64
    %v680 = vpop.permute.xlu0 %679
    %681 = vrot.lane.b32.xlu0 %v636, 64
    %v682 = vpop.permute.xlu0 %681
    %683 = vrot.lane.b32.xlu0 %v637, 64
    %v684 = vpop.permute.xlu0 %683
    %685 = vrot.lane.b32.xlu0 %v638, 64
    %v686 = vpop.permute.xlu0 %685
    %vm703 = vcmask 785920
    %704 = vst.msk [vmem:[#allocation4] sm:$0xff] %vm703, %v656
    %705 = vst.msk [vmem:[#allocation4 + $0x20] sm:$0xff] %vm703, %v658
    %706 = vst.msk [vmem:[#allocation4 + $0x40] sm:$0xff] %vm703, %v660
    %707 = vst.msk [vmem:[#allocation4 + $0x60] sm:$0xff] %vm703, %v662
    %708 = vst.msk [vmem:[#allocation4 + $0x80] sm:$0xff] %vm703, %v664
    %709 = vst.msk [vmem:[#allocation4 + $0xa0] sm:$0xff] %vm703, %v666
    %710 = vst.msk [vmem:[#allocation4 + $0xc0] sm:$0xff] %vm703, %v668
    %711 = vst.msk [vmem:[#allocation4 + $0xe0] sm:$0xff] %vm703, %v670
    %712 = vst.msk [vmem:[#allocation4 + $0x100] sm:$0xff] %vm703, %v672
    %713 = vst.msk [vmem:[#allocation4 + $0x120] sm:$0xff] %vm703, %v674
    %714 = vst.msk [vmem:[#allocation4 + $0x140] sm:$0xff] %vm703, %v676
    %715 = vst.msk [vmem:[#allocation4 + $0x160] sm:$0xff] %vm703, %v678
    %716 = vst.msk [vmem:[#allocation4 + $0x180] sm:$0xff] %vm703, %v680
    %717 = vst.msk [vmem:[#allocation4 + $0x1a0] sm:$0xff] %vm703, %v682
    %718 = vst.msk [vmem:[#allocation4 + $0x1c0] sm:$0xff] %vm703, %v684
    %719 = vst.msk [vmem:[#allocation4 + $0x1e0] sm:$0xff] %vm703, %v686
    %v720 = vld [vmem:[%s476] sm:$0xff]
    %v721 = vld [vmem:[%s476 + $0x10] sm:$0xff]
    %v722 = vld [vmem:[%s476 + $0x20] sm:$0xff]
    %v723 = vld [vmem:[%s476 + $0x30] sm:$0xff]
    %v724 = vld [vmem:[%s476 + $0x40] sm:$0xff]
    %v725 = vld [vmem:[%s476 + $0x50] sm:$0xff]
    %v726 = vld [vmem:[%s476 + $0x60] sm:$0xff]
    %v727 = vld [vmem:[%s476 + $0x70] sm:$0xff]
    %v728 = vld [vmem:[%s476 + $0xa0] sm:$0xff]
    %v729 = vld [vmem:[%s476 + $0xb0] sm:$0xff]
    %v730 = vld [vmem:[%s476 + $0xc0] sm:$0xff]
    %v731 = vld [vmem:[%s476 + $0xd0] sm:$0xff]
    %v732 = vld [vmem:[%s476 + $0xe0] sm:$0xff]
    %v733 = vld [vmem:[%s476 + $0xf0] sm:$0xff]
    %v734 = vld [vmem:[%s476 + $0x100] sm:$0xff]
    %v735 = vld [vmem:[%s476 + $0x110] sm:$0xff]
    %752 = vrot.lane.b32.xlu0 %v720, 96
    %v753 = vpop.permute.xlu0 %752
    %754 = vrot.lane.b32.xlu0 %v721, 96
    %v755 = vpop.permute.xlu0 %754
    %756 = vrot.lane.b32.xlu0 %v722, 96
    %v757 = vpop.permute.xlu0 %756
    %758 = vrot.lane.b32.xlu0 %v723, 96
    %v759 = vpop.permute.xlu0 %758
    %760 = vrot.lane.b32.xlu0 %v724, 96
    %v761 = vpop.permute.xlu0 %760
    %762 = vrot.lane.b32.xlu0 %v725, 96
    %v763 = vpop.permute.xlu0 %762
    %764 = vrot.lane.b32.xlu0 %v726, 96
    %v765 = vpop.permute.xlu0 %764
    %766 = vrot.lane.b32.xlu0 %v727, 96
    %v767 = vpop.permute.xlu0 %766
    %768 = vrot.lane.b32.xlu0 %v728, 96
    %v769 = vpop.permute.xlu0 %768
    %770 = vrot.lane.b32.xlu0 %v729, 96
    %v771 = vpop.permute.xlu0 %770
    %772 = vrot.lane.b32.xlu0 %v730, 96
    %v773 = vpop.permute.xlu0 %772
    %774 = vrot.lane.b32.xlu0 %v731, 96
    %v775 = vpop.permute.xlu0 %774
    %776 = vrot.lane.b32.xlu0 %v732, 96
    %v777 = vpop.permute.xlu0 %776
    %778 = vrot.lane.b32.xlu0 %v733, 96
    %v779 = vpop.permute.xlu0 %778
    %780 = vrot.lane.b32.xlu0 %v734, 96
    %v781 = vpop.permute.xlu0 %780
    %782 = vrot.lane.b32.xlu0 %v735, 96
    %v783 = vpop.permute.xlu0 %782
    %vm800 = vcmask 1048320
    %801 = vst.msk [vmem:[#allocation4] sm:$0xff] %vm800, %v753
    %802 = vst.msk [vmem:[#allocation4 + $0x20] sm:$0xff] %vm800, %v755
    %803 = vst.msk [vmem:[#allocation4 + $0x40] sm:$0xff] %vm800, %v757
    %804 = vst.msk [vmem:[#allocation4 + $0x60] sm:$0xff] %vm800, %v759
    %805 = vst.msk [vmem:[#allocation4 + $0x80] sm:$0xff] %vm800, %v761
    %806 = vst.msk [vmem:[#allocation4 + $0xa0] sm:$0xff] %vm800, %v763
    %807 = vst.msk [vmem:[#allocation4 + $0xc0] sm:$0xff] %vm800, %v765
    %808 = vst.msk [vmem:[#allocation4 + $0xe0] sm:$0xff] %vm800, %v767
    %809 = vst.msk [vmem:[#allocation4 + $0x100] sm:$0xff] %vm800, %v769
    %810 = vst.msk [vmem:[#allocation4 + $0x120] sm:$0xff] %vm800, %v771
    %811 = vst.msk [vmem:[#allocation4 + $0x140] sm:$0xff] %vm800, %v773
    %812 = vst.msk [vmem:[#allocation4 + $0x160] sm:$0xff] %vm800, %v775
    %813 = vst.msk [vmem:[#allocation4 + $0x180] sm:$0xff] %vm800, %v777
    %814 = vst.msk [vmem:[#allocation4 + $0x1a0] sm:$0xff] %vm800, %v779
    %815 = vst.msk [vmem:[#allocation4 + $0x1c0] sm:$0xff] %vm800, %v781
    %816 = vst.msk [vmem:[#allocation4 + $0x1e0] sm:$0xff] %vm800, %v783
    %v817 = vld [vmem:[%s476 + $0x1] sm:$0xff]
    %v818 = vld [vmem:[%s476 + $0x11] sm:$0xff]
    %v819 = vld [vmem:[%s476 + $0x21] sm:$0xff]
    %v820 = vld [vmem:[%s476 + $0x31] sm:$0xff]
    %v821 = vld [vmem:[%s476 + $0x41] sm:$0xff]
    %v822 = vld [vmem:[%s476 + $0x51] sm:$0xff]
    %v823 = vld [vmem:[%s476 + $0x61] sm:$0xff]
    %v824 = vld [vmem:[%s476 + $0x71] sm:$0xff]
    %v825 = vld [vmem:[%s476 + $0xa1] sm:$0xff]
    %v826 = vld [vmem:[%s476 + $0xb1] sm:$0xff]
    %v827 = vld [vmem:[%s476 + $0xc1] sm:$0xff]
    %v828 = vld [vmem:[%s476 + $0xd1] sm:$0xff]
    %v829 = vld [vmem:[%s476 + $0xe1] sm:$0xff]
    %v830 = vld [vmem:[%s476 + $0xf1] sm:$0xff]
    %v831 = vld [vmem:[%s476 + $0x101] sm:$0xff]
    %v832 = vld [vmem:[%s476 + $0x111] sm:$0xff]
    %833 = vst.msk [vmem:[#allocation4 + $0x8] sm:$0xff] %vm477, %v817
    %834 = vst.msk [vmem:[#allocation4 + $0x28] sm:$0xff] %vm477, %v818
    %835 = vst.msk [vmem:[#allocation4 + $0x48] sm:$0xff] %vm477, %v819
    %836 = vst.msk [vmem:[#allocation4 + $0x68] sm:$0xff] %vm477, %v820
    %837 = vst.msk [vmem:[#allocation4 + $0x88] sm:$0xff] %vm477, %v821
    %838 = vst.msk [vmem:[#allocation4 + $0xa8] sm:$0xff] %vm477, %v822
    %839 = vst.msk [vmem:[#allocation4 + $0xc8] sm:$0xff] %vm477, %v823
    %840 = vst.msk [vmem:[#allocation4 + $0xe8] sm:$0xff] %vm477, %v824
    %841 = vst.msk [vmem:[#allocation4 + $0x108] sm:$0xff] %vm477, %v825
    %842 = vst.msk [vmem:[#allocation4 + $0x128] sm:$0xff] %vm477, %v826
    %843 = vst.msk [vmem:[#allocation4 + $0x148] sm:$0xff] %vm477, %v827
    %844 = vst.msk [vmem:[#allocation4 + $0x168] sm:$0xff] %vm477, %v828
    %845 = vst.msk [vmem:[#allocation4 + $0x188] sm:$0xff] %vm477, %v829
    %846 = vst.msk [vmem:[#allocation4 + $0x1a8] sm:$0xff] %vm477, %v830
    %847 = vst.msk [vmem:[#allocation4 + $0x1c8] sm:$0xff] %vm477, %v831
    %848 = vst.msk [vmem:[#allocation4 + $0x1e8] sm:$0xff] %vm477, %v832
    %v849 = vld [vmem:[%s476 + $0x2] sm:$0xff]
    %v850 = vld [vmem:[%s476 + $0x12] sm:$0xff]
    %v851 = vld [vmem:[%s476 + $0x22] sm:$0xff]
    %v852 = vld [vmem:[%s476 + $0x32] sm:$0xff]
    %v853 = vld [vmem:[%s476 + $0x42] sm:$0xff]
    %v854 = vld [vmem:[%s476 + $0x52] sm:$0xff]
    %v855 = vld [vmem:[%s476 + $0x62] sm:$0xff]
    %v856 = vld [vmem:[%s476 + $0x72] sm:$0xff]
    %v857 = vld [vmem:[%s476 + $0xa2] sm:$0xff]
    %v858 = vld [vmem:[%s476 + $0xb2] sm:$0xff]
    %v859 = vld [vmem:[%s476 + $0xc2] sm:$0xff]
    %v860 = vld [vmem:[%s476 + $0xd2] sm:$0xff]
    %v861 = vld [vmem:[%s476 + $0xe2] sm:$0xff]
    %v862 = vld [vmem:[%s476 + $0xf2] sm:$0xff]
    %v863 = vld [vmem:[%s476 + $0x102] sm:$0xff]
    %v864 = vld [vmem:[%s476 + $0x112] sm:$0xff]
    %881 = vrot.lane.b32.xlu0 %v849, 32
    %v882 = vpop.permute.xlu0 %881
    %883 = vrot.lane.b32.xlu0 %v850, 32
    %v884 = vpop.permute.xlu0 %883
    %885 = vrot.lane.b32.xlu0 %v851, 32
    %v886 = vpop.permute.xlu0 %885
    %887 = vrot.lane.b32.xlu0 %v852, 32
    %v888 = vpop.permute.xlu0 %887
    %889 = vrot.lane.b32.xlu0 %v853, 32
    %v890 = vpop.permute.xlu0 %889
    %891 = vrot.lane.b32.xlu0 %v854, 32
    %v892 = vpop.permute.xlu0 %891
    %893 = vrot.lane.b32.xlu0 %v855, 32
    %v894 = vpop.permute.xlu0 %893
    %895 = vrot.lane.b32.xlu0 %v856, 32
    %v896 = vpop.permute.xlu0 %895
    %897 = vrot.lane.b32.xlu0 %v857, 32
    %v898 = vpop.permute.xlu0 %897
    %899 = vrot.lane.b32.xlu0 %v858, 32
    %v900 = vpop.permute.xlu0 %899
    %901 = vrot.lane.b32.xlu0 %v859, 32
    %v902 = vpop.permute.xlu0 %901
    %903 = vrot.lane.b32.xlu0 %v860, 32
    %v904 = vpop.permute.xlu0 %903
    %905 = vrot.lane.b32.xlu0 %v861, 32
    %v906 = vpop.permute.xlu0 %905
    %907 = vrot.lane.b32.xlu0 %v862, 32
    %v908 = vpop.permute.xlu0 %907
    %909 = vrot.lane.b32.xlu0 %v863, 32
    %v910 = vpop.permute.xlu0 %909
    %911 = vrot.lane.b32.xlu0 %v864, 32
    %v912 = vpop.permute.xlu0 %911
    %929 = vst.msk [vmem:[#allocation4 + $0x8] sm:$0xff] %vm606, %v882
    %930 = vst.msk [vmem:[#allocation4 + $0x28] sm:$0xff] %vm606, %v884
    %931 = vst.msk [vmem:[#allocation4 + $0x48] sm:$0xff] %vm606, %v886
    %932 = vst.msk [vmem:[#allocation4 + $0x68] sm:$0xff] %vm606, %v888
    %933 = vst.msk [vmem:[#allocation4 + $0x88] sm:$0xff] %vm606, %v890
    %934 = vst.msk [vmem:[#allocation4 + $0xa8] sm:$0xff] %vm606, %v892
    %935 = vst.msk [vmem:[#allocation4 + $0xc8] sm:$0xff] %vm606, %v894
    %936 = vst.msk [vmem:[#allocation4 + $0xe8] sm:$0xff] %vm606, %v896
    %937 = vst.msk [vmem:[#allocation4 + $0x108] sm:$0xff] %vm606, %v898
    %938 = vst.msk [vmem:[#allocation4 + $0x128] sm:$0xff] %vm606, %v900
    %939 = vst.msk [vmem:[#allocation4 + $0x148] sm:$0xff] %vm606, %v902
    %940 = vst.msk [vmem:[#allocation4 + $0x168] sm:$0xff] %vm606, %v904
    %941 = vst.msk [vmem:[#allocation4 + $0x188] sm:$0xff] %vm606, %v906
    %942 = vst.msk [vmem:[#allocation4 + $0x1a8] sm:$0xff] %vm606, %v908
    %943 = vst.msk [vmem:[#allocation4 + $0x1c8] sm:$0xff] %vm606, %v910
    %944 = vst.msk [vmem:[#allocation4 + $0x1e8] sm:$0xff] %vm606, %v912
    %s945 = scalar_lea.vmem [#allocation3], 32
    %v946 = vld [vmem:[%s945] sm:$0xff]
    %v947 = vld [vmem:[%s945 + $0x10] sm:$0xff]
    %v948 = vld [vmem:[%s945 + $0x20] sm:$0xff]
    %v949 = vld [vmem:[%s945 + $0x30] sm:$0xff]
    %v950 = vld [vmem:[%s945 + $0x40] sm:$0xff]
    %v951 = vld [vmem:[%s945 + $0x50] sm:$0xff]
    %v952 = vld [vmem:[%s945 + $0x60] sm:$0xff]
    %v953 = vld [vmem:[%s945 + $0x70] sm:$0xff]
    %v954 = vld [vmem:[%s945 + $0xa0] sm:$0xff]
    %v955 = vld [vmem:[%s945 + $0xb0] sm:$0xff]
    %v956 = vld [vmem:[%s945 + $0xc0] sm:$0xff]
    %v957 = vld [vmem:[%s945 + $0xd0] sm:$0xff]
    %v958 = vld [vmem:[%s945 + $0xe0] sm:$0xff]
    %v959 = vld [vmem:[%s945 + $0xf0] sm:$0xff]
    %v960 = vld [vmem:[%s945 + $0x100] sm:$0xff]
    %v961 = vld [vmem:[%s945 + $0x110] sm:$0xff]
    %978 = vrot.lane.b32.xlu0 %v946, 64
    %v979 = vpop.permute.xlu0 %978
    %980 = vrot.lane.b32.xlu0 %v947, 64
    %v981 = vpop.permute.xlu0 %980
    %982 = vrot.lane.b32.xlu0 %v948, 64
    %v983 = vpop.permute.xlu0 %982
    %984 = vrot.lane.b32.xlu0 %v949, 64
    %v985 = vpop.permute.xlu0 %984
    %986 = vrot.lane.b32.xlu0 %v950, 64
    %v987 = vpop.permute.xlu0 %986
    %988 = vrot.lane.b32.xlu0 %v951, 64
    %v989 = vpop.permute.xlu0 %988
    %990 = vrot.lane.b32.xlu0 %v952, 64
    %v991 = vpop.permute.xlu0 %990
    %992 = vrot.lane.b32.xlu0 %v953, 64
    %v993 = vpop.permute.xlu0 %992
    %994 = vrot.lane.b32.xlu0 %v954, 64
    %v995 = vpop.permute.xlu0 %994
    %996 = vrot.lane.b32.xlu0 %v955, 64
    %v997 = vpop.permute.xlu0 %996
    %998 = vrot.lane.b32.xlu0 %v956, 64
    %v999 = vpop.permute.xlu0 %998
    %1000 = vrot.lane.b32.xlu0 %v957, 64
    %v1001 = vpop.permute.xlu0 %1000
    %1002 = vrot.lane.b32.xlu0 %v958, 64
    %v1003 = vpop.permute.xlu0 %1002
    %1004 = vrot.lane.b32.xlu0 %v959, 64
    %v1005 = vpop.permute.xlu0 %1004
    %1006 = vrot.lane.b32.xlu0 %v960, 64
    %v1007 = vpop.permute.xlu0 %1006
    %1008 = vrot.lane.b32.xlu0 %v961, 64
    %v1009 = vpop.permute.xlu0 %1008
    %1026 = vst.msk [vmem:[#allocation4 + $0x8] sm:$0xff] %vm703, %v979
    %1027 = vst.msk [vmem:[#allocation4 + $0x28] sm:$0xff] %vm703, %v981
    %1028 = vst.msk [vmem:[#allocation4 + $0x48] sm:$0xff] %vm703, %v983
    %1029 = vst.msk [vmem:[#allocation4 + $0x68] sm:$0xff] %vm703, %v985
    %1030 = vst.msk [vmem:[#allocation4 + $0x88] sm:$0xff] %vm703, %v987
    %1031 = vst.msk [vmem:[#allocation4 + $0xa8] sm:$0xff] %vm703, %v989
    %1032 = vst.msk [vmem:[#allocation4 + $0xc8] sm:$0xff] %vm703, %v991
    %1033 = vst.msk [vmem:[#allocation4 + $0xe8] sm:$0xff] %vm703, %v993
    %1034 = vst.msk [vmem:[#allocation4 + $0x108] sm:$0xff] %vm703, %v995
    %1035 = vst.msk [vmem:[#allocation4 + $0x128] sm:$0xff] %vm703, %v997
    %1036 = vst.msk [vmem:[#allocation4 + $0x148] sm:$0xff] %vm703, %v999
    %1037 = vst.msk [vmem:[#allocation4 + $0x168] sm:$0xff] %vm703, %v1001
    %1038 = vst.msk [vmem:[#allocation4 + $0x188] sm:$0xff] %vm703, %v1003
    %1039 = vst.msk [vmem:[#allocation4 + $0x1a8] sm:$0xff] %vm703, %v1005
    %1040 = vst.msk [vmem:[#allocation4 + $0x1c8] sm:$0xff] %vm703, %v1007
    %1041 = vst.msk [vmem:[#allocation4 + $0x1e8] sm:$0xff] %vm703, %v1009
    %v1042 = vld [vmem:[%s945 + $0x1] sm:$0xff]
    %v1043 = vld [vmem:[%s945 + $0x11] sm:$0xff]
    %v1044 = vld [vmem:[%s945 + $0x21] sm:$0xff]
    %v1045 = vld [vmem:[%s945 + $0x31] sm:$0xff]
    %v1046 = vld [vmem:[%s945 + $0x41] sm:$0xff]
    %v1047 = vld [vmem:[%s945 + $0x51] sm:$0xff]
    %v1048 = vld [vmem:[%s945 + $0x61] sm:$0xff]
    %v1049 = vld [vmem:[%s945 + $0x71] sm:$0xff]
    %v1050 = vld [vmem:[%s945 + $0xa1] sm:$0xff]
    %v1051 = vld [vmem:[%s945 + $0xb1] sm:$0xff]
    %v1052 = vld [vmem:[%s945 + $0xc1] sm:$0xff]
    %v1053 = vld [vmem:[%s945 + $0xd1] sm:$0xff]
    %v1054 = vld [vmem:[%s945 + $0xe1] sm:$0xff]
    %v1055 = vld [vmem:[%s945 + $0xf1] sm:$0xff]
    %v1056 = vld [vmem:[%s945 + $0x101] sm:$0xff]
    %v1057 = vld [vmem:[%s945 + $0x111] sm:$0xff]
    %1074 = vrot.lane.b32.xlu0 %v1042, 96
    %v1075 = vpop.permute.xlu0 %1074
    %1076 = vrot.lane.b32.xlu0 %v1043, 96
    %v1077 = vpop.permute.xlu0 %1076
    %1078 = vrot.lane.b32.xlu0 %v1044, 96
    %v1079 = vpop.permute.xlu0 %1078
    %1080 = vrot.lane.b32.xlu0 %v1045, 96
    %v1081 = vpop.permute.xlu0 %1080
    %1082 = vrot.lane.b32.xlu0 %v1046, 96
    %v1083 = vpop.permute.xlu0 %1082
    %1084 = vrot.lane.b32.xlu0 %v1047, 96
    %v1085 = vpop.permute.xlu0 %1084
    %1086 = vrot.lane.b32.xlu0 %v1048, 96
    %v1087 = vpop.permute.xlu0 %1086
    %1088 = vrot.lane.b32.xlu0 %v1049, 96
    %v1089 = vpop.permute.xlu0 %1088
    %1090 = vrot.lane.b32.xlu0 %v1050, 96
    %v1091 = vpop.permute.xlu0 %1090
    %1092 = vrot.lane.b32.xlu0 %v1051, 96
    %v1093 = vpop.permute.xlu0 %1092
    %1094 = vrot.lane.b32.xlu0 %v1052, 96
    %v1095 = vpop.permute.xlu0 %1094
    %1096 = vrot.lane.b32.xlu0 %v1053, 96
    %v1097 = vpop.permute.xlu0 %1096
    %1098 = vrot.lane.b32.xlu0 %v1054, 96
    %v1099 = vpop.permute.xlu0 %1098
    %1100 = vrot.lane.b32.xlu0 %v1055, 96
    %v1101 = vpop.permute.xlu0 %1100
    %1102 = vrot.lane.b32.xlu0 %v1056, 96
    %v1103 = vpop.permute.xlu0 %1102
    %1104 = vrot.lane.b32.xlu0 %v1057, 96
    %v1105 = vpop.permute.xlu0 %1104
    %1122 = vst.msk [vmem:[#allocation4 + $0x8] sm:$0xff] %vm800, %v1075
    %1123 = vst.msk [vmem:[#allocation4 + $0x28] sm:$0xff] %vm800, %v1077
    %1124 = vst.msk [vmem:[#allocation4 + $0x48] sm:$0xff] %vm800, %v1079
    %1125 = vst.msk [vmem:[#allocation4 + $0x68] sm:$0xff] %vm800, %v1081
    %1126 = vst.msk [vmem:[#allocation4 + $0x88] sm:$0xff] %vm800, %v1083
    %1127 = vst.msk [vmem:[#allocation4 + $0xa8] sm:$0xff] %vm800, %v1085
    %1128 = vst.msk [vmem:[#allocation4 + $0xc8] sm:$0xff] %vm800, %v1087
    %1129 = vst.msk [vmem:[#allocation4 + $0xe8] sm:$0xff] %vm800, %v1089
    %1130 = vst.msk [vmem:[#allocation4 + $0x108] sm:$0xff] %vm800, %v1091
    %1131 = vst.msk [vmem:[#allocation4 + $0x128] sm:$0xff] %vm800, %v1093
    %1132 = vst.msk [vmem:[#allocation4 + $0x148] sm:$0xff] %vm800, %v1095
    %1133 = vst.msk [vmem:[#allocation4 + $0x168] sm:$0xff] %vm800, %v1097
    %1134 = vst.msk [vmem:[#allocation4 + $0x188] sm:$0xff] %vm800, %v1099
    %1135 = vst.msk [vmem:[#allocation4 + $0x1a8] sm:$0xff] %vm800, %v1101
    %1136 = vst.msk [vmem:[#allocation4 + $0x1c8] sm:$0xff] %vm800, %v1103
    %1137 = vst.msk [vmem:[#allocation4 + $0x1e8] sm:$0xff] %vm800, %v1105
    %v1138 = vld [vmem:[%s945 + $0x2] sm:$0xff]
    %v1139 = vld [vmem:[%s945 + $0x12] sm:$0xff]
    %v1140 = vld [vmem:[%s945 + $0x22] sm:$0xff]
    %v1141 = vld [vmem:[%s945 + $0x32] sm:$0xff]
    %v1142 = vld [vmem:[%s945 + $0x42] sm:$0xff]
    %v1143 = vld [vmem:[%s945 + $0x52] sm:$0xff]
    %v1144 = vld [vmem:[%s945 + $0x62] sm:$0xff]
    %v1145 = vld [vmem:[%s945 + $0x72] sm:$0xff]
    %v1146 = vld [vmem:[%s945 + $0xa2] sm:$0xff]
    %v1147 = vld [vmem:[%s945 + $0xb2] sm:$0xff]
    %v1148 = vld [vmem:[%s945 + $0xc2] sm:$0xff]
    %v1149 = vld [vmem:[%s945 + $0xd2] sm:$0xff]
    %v1150 = vld [vmem:[%s945 + $0xe2] sm:$0xff]
    %v1151 = vld [vmem:[%s945 + $0xf2] sm:$0xff]
    %v1152 = vld [vmem:[%s945 + $0x102] sm:$0xff]
    %v1153 = vld [vmem:[%s945 + $0x112] sm:$0xff]
    %1154 = vst.msk [vmem:[#allocation4 + $0x10] sm:$0xff] %vm477, %v1138
    %1155 = vst.msk [vmem:[#allocation4 + $0x30] sm:$0xff] %vm477, %v1139
    %1156 = vst.msk [vmem:[#allocation4 + $0x50] sm:$0xff] %vm477, %v1140
    %1157 = vst.msk [vmem:[#allocation4 + $0x70] sm:$0xff] %vm477, %v1141
    %1158 = vst.msk [vmem:[#allocation4 + $0x90] sm:$0xff] %vm477, %v1142
    %1159 = vst.msk [vmem:[#allocation4 + $0xb0] sm:$0xff] %vm477, %v1143
    %1160 = vst.msk [vmem:[#allocation4 + $0xd0] sm:$0xff] %vm477, %v1144
    %1161 = vst.msk [vmem:[#allocation4 + $0xf0] sm:$0xff] %vm477, %v1145
    %1162 = vst.msk [vmem:[#allocation4 + $0x110] sm:$0xff] %vm477, %v1146
    %1163 = vst.msk [vmem:[#allocation4 + $0x130] sm:$0xff] %vm477, %v1147
    %1164 = vst.msk [vmem:[#allocation4 + $0x150] sm:$0xff] %vm477, %v1148
    %1165 = vst.msk [vmem:[#allocation4 + $0x170] sm:$0xff] %vm477, %v1149
    %1166 = vst.msk [vmem:[#allocation4 + $0x190] sm:$0xff] %vm477, %v1150
    %1167 = vst.msk [vmem:[#allocation4 + $0x1b0] sm:$0xff] %vm477, %v1151
    %1168 = vst.msk [vmem:[#allocation4 + $0x1d0] sm:$0xff] %vm477, %v1152
    %1169 = vst.msk [vmem:[#allocation4 + $0x1f0] sm:$0xff] %vm477, %v1153
    %v1170 = vld [vmem:[#allocation4] sm:$0xff]
    %v1171 = vld [vmem:[#allocation4 + $0x8] sm:$0xff]
    %v1172 = vld [vmem:[#allocation4 + $0x10] sm:$0xff]
    %v1173 = vld [vmem:[#allocation4 + $0x20] sm:$0xff]
    %v1174 = vld [vmem:[#allocation4 + $0x28] sm:$0xff]
    %v1175 = vld [vmem:[#allocation4 + $0x30] sm:$0xff]
    %v1176 = vld [vmem:[#allocation4 + $0x40] sm:$0xff]
    %v1177 = vld [vmem:[#allocation4 + $0x48] sm:$0xff]
    %v1178 = vld [vmem:[#allocation4 + $0x50] sm:$0xff]
    %v1179 = vld [vmem:[#allocation4 + $0x60] sm:$0xff]
    %v1180 = vld [vmem:[#allocation4 + $0x68] sm:$0xff]
    %v1181 = vld [vmem:[#allocation4 + $0x70] sm:$0xff]
    %v1182 = vld [vmem:[#allocation4 + $0x80] sm:$0xff]
    %v1183 = vld [vmem:[#allocation4 + $0x88] sm:$0xff]
    %v1184 = vld [vmem:[#allocation4 + $0x90] sm:$0xff]
    %v1185 = vld [vmem:[#allocation4 + $0xa0] sm:$0xff]
    %v1186 = vld [vmem:[#allocation4 + $0xa8] sm:$0xff]
    %v1187 = vld [vmem:[#allocation4 + $0xb0] sm:$0xff]
    %v1188 = vld [vmem:[#allocation4 + $0xc0] sm:$0xff]
    %v1189 = vld [vmem:[#allocation4 + $0xc8] sm:$0xff]
    %v1190 = vld [vmem:[#allocation4 + $0xd0] sm:$0xff]
    %v1191 = vld [vmem:[#allocation4 + $0xe0] sm:$0xff]
    %v1192 = vld [vmem:[#allocation4 + $0xe8] sm:$0xff]
    %v1193 = vld [vmem:[#allocation4 + $0xf0] sm:$0xff]
    %v1194 = vld [vmem:[#allocation4 + $0x100] sm:$0xff]
    %v1195 = vld [vmem:[#allocation4 + $0x108] sm:$0xff]
    %v1196 = vld [vmem:[#allocation4 + $0x110] sm:$0xff]
    %v1197 = vld [vmem:[#allocation4 + $0x120] sm:$0xff]
    %v1198 = vld [vmem:[#allocation4 + $0x128] sm:$0xff]
    %v1199 = vld [vmem:[#allocation4 + $0x130] sm:$0xff]
    %v1200 = vld [vmem:[#allocation4 + $0x140] sm:$0xff]
    %v1201 = vld [vmem:[#allocation4 + $0x148] sm:$0xff]
    %v1202 = vld [vmem:[#allocation4 + $0x150] sm:$0xff]
    %v1203 = vld [vmem:[#allocation4 + $0x160] sm:$0xff]
    %v1204 = vld [vmem:[#allocation4 + $0x168] sm:$0xff]
    %v1205 = vld [vmem:[#allocation4 + $0x170] sm:$0xff]
    %v1206 = vld [vmem:[#allocation4 + $0x180] sm:$0xff]
    %v1207 = vld [vmem:[#allocation4 + $0x188] sm:$0xff]
    %v1208 = vld [vmem:[#allocation4 + $0x190] sm:$0xff]
    %v1209 = vld [vmem:[#allocation4 + $0x1a0] sm:$0xff]
    %v1210 = vld [vmem:[#allocation4 + $0x1a8] sm:$0xff]
    %v1211 = vld [vmem:[#allocation4 + $0x1b0] sm:$0xff]
    %v1212 = vld [vmem:[#allocation4 + $0x1c0] sm:$0xff]
    %v1213 = vld [vmem:[#allocation4 + $0x1c8] sm:$0xff]
    %v1214 = vld [vmem:[#allocation4 + $0x1d0] sm:$0xff]
    %v1215 = vld [vmem:[#allocation4 + $0x1e0] sm:$0xff]
    %v1216 = vld [vmem:[#allocation4 + $0x1e8] sm:$0xff]
    %v1217 = vld [vmem:[#allocation4 + $0x1f0] sm:$0xff]
    %v1218 = vld [vmem:[%s4] sm:$0xff]
    %v1219 = vld [vmem:[%s4 + $0x8] sm:$0xff]
    %v1220 = vld [vmem:[%s4 + $0x10] sm:$0xff]
    %v1221 = vld [vmem:[%s4 + $0x18] sm:$0xff]
    %v1222 = vld [vmem:[%s4 + $0x20] sm:$0xff]
    %v1223 = vld [vmem:[%s4 + $0x28] sm:$0xff]
    %v1224 = vld [vmem:[%s4 + $0x30] sm:$0xff]
    %v1225 = vld [vmem:[%s4 + $0x38] sm:$0xff]
    %v1226 = vld [vmem:[%s4 + $0x40] sm:$0xff]
    %v1227 = vld [vmem:[%s4 + $0x48] sm:$0xff]
    %v1228 = vld [vmem:[%s4 + $0x50] sm:$0xff]
    %v1229 = vld [vmem:[%s4 + $0x58] sm:$0xff]
    %v1230 = vld [vmem:[%s4 + $0x60] sm:$0xff]
    %v1231 = vld [vmem:[%s4 + $0x68] sm:$0xff]
    %v1232 = vld [vmem:[%s4 + $0x70] sm:$0xff]
    %v1233 = vld [vmem:[%s4 + $0x78] sm:$0xff]
    %v1234 = vld [vmem:[%s4 + $0x80] sm:$0xff]
    %v1235 = vld [vmem:[%s4 + $0x88] sm:$0xff]
    %v1236 = vld [vmem:[%s4 + $0x90] sm:$0xff]
    %v1237 = vld [vmem:[%s4 + $0x98] sm:$0xff]
    %v1238 = vld [vmem:[%s4 + $0xa0] sm:$0xff]
    %v1239 = vld [vmem:[%s4 + $0xa8] sm:$0xff]
    %v1240 = vld [vmem:[%s4 + $0xb0] sm:$0xff]
    %v1241 = vld [vmem:[%s4 + $0xb8] sm:$0xff]
    %v1242 = vld [vmem:[%s4 + $0xc0] sm:$0xff]
    %v1243 = vld [vmem:[%s4 + $0xc8] sm:$0xff]
    %v1244 = vld [vmem:[%s4 + $0xd0] sm:$0xff]
    %v1245 = vld [vmem:[%s4 + $0xd8] sm:$0xff]
    %v1246 = vld [vmem:[%s4 + $0xe0] sm:$0xff]
    %v1247 = vld [vmem:[%s4 + $0xe8] sm:$0xff]
    %v1248 = vld [vmem:[%s4 + $0xf0] sm:$0xff]
    %v1249 = vld [vmem:[%s4 + $0xf8] sm:$0xff]
    %v1250 = vld [vmem:[%s4 + $0x100] sm:$0xff]
    %v1251 = vld [vmem:[%s4 + $0x108] sm:$0xff]
    %v1252 = vld [vmem:[%s4 + $0x110] sm:$0xff]
    %v1253 = vld [vmem:[%s4 + $0x118] sm:$0xff]
    %v1255 = vsel %vm477, %v1172, 0
    %v1258 = vsel %vm477, %v1175, 0
    %v1261 = vsel %vm477, %v1178, 0
    %v1264 = vsel %vm477, %v1181, 0
    %v1267 = vsel %vm477, %v1184, 0
    %v1270 = vsel %vm477, %v1187, 0
    %v1273 = vsel %vm477, %v1190, 0
    %v1276 = vsel %vm477, %v1193, 0
    %v1279 = vsel %vm477, %v1196, 0
    %v1282 = vsel %vm477, %v1199, 0
    %v1285 = vsel %vm477, %v1202, 0
    %v1288 = vsel %vm477, %v1205, 0
    %v1291 = vsel %vm477, %v1208, 0
    %v1294 = vsel %vm477, %v1211, 0
    %v1297 = vsel %vm477, %v1214, 0
    %v1300 = vsel %vm477, %v1217, 0
    %1302 = vmatpush.msra.mxu0 %v1233
    %1303 = vmatpush.msra.mxu0 %v1232
    %1304 = vmatpush.msra.mxu0 %v1231
    %1305 = vmatpush.msra.mxu0 %v1230
    %1306 = vmatpush.msra.mxu0 %v1229
    %1307 = vmatpush.msra.mxu0 %v1228
    %1308 = vmatpush.msra.mxu0 %v1227
    %1309 = vmatpush.msra.mxu0 %v1226
    %1310 = vmatpush.msra.mxu0 %v1225
    %1311 = vmatpush.msra.mxu0 %v1224
    %1312 = vmatpush.msra.mxu0 %v1223
    %1313 = vmatpush.msra.mxu0 %v1222
    %1314 = vmatpush.msra.mxu0 %v1221
    %1315 = vmatpush.msra.mxu0 %v1220
    %1316 = vmatpush.msra.mxu0 %v1219
    %1317 = vmatpush.msra.mxu0 %v1218
    %1318 = vmatmul.f32.gmra.mxu0 %v1170
    %v1319 = vpop.f32.mrf.mxu0
    %v1320 = vadd.f32 0.0, %v1319
    %1321 = vmatmul.f32.gmra.mxu0 %v1173
    %v1322 = vpop.f32.mrf.mxu0
    %v1323 = vadd.f32 0.0, %v1322
    %1324 = vmatmul.f32.gmra.mxu0 %v1176
    %v1325 = vpop.f32.mrf.mxu0
    %v1326 = vadd.f32 0.0, %v1325
    %1327 = vmatmul.f32.gmra.mxu0 %v1179
    %v1328 = vpop.f32.mrf.mxu0
    %v1329 = vadd.f32 0.0, %v1328
    %1330 = vmatmul.f32.gmra.mxu0 %v1182
    %v1331 = vpop.f32.mrf.mxu0
    %v1332 = vadd.f32 0.0, %v1331
    %1333 = vmatmul.f32.gmra.mxu0 %v1185
    %v1334 = vpop.f32.mrf.mxu0
    %v1335 = vadd.f32 0.0, %v1334
    %1336 = vmatmul.f32.gmra.mxu0 %v1188
    %v1337 = vpop.f32.mrf.mxu0
    %v1338 = vadd.f32 0.0, %v1337
    %1339 = vmatmul.f32.gmra.mxu0 %v1191
    %v1340 = vpop.f32.mrf.mxu0
    %v1341 = vadd.f32 0.0, %v1340
    %1342 = vmatmul.f32.gmra.mxu0 %v1194
    %v1343 = vpop.f32.mrf.mxu0
    %v1344 = vadd.f32 0.0, %v1343
    %1345 = vmatmul.f32.gmra.mxu0 %v1197
    %v1346 = vpop.f32.mrf.mxu0
    %v1347 = vadd.f32 0.0, %v1346
    %1348 = vmatmul.f32.gmra.mxu0 %v1200
    %v1349 = vpop.f32.mrf.mxu0
    %v1350 = vadd.f32 0.0, %v1349
    %1351 = vmatmul.f32.gmra.mxu0 %v1203
    %v1352 = vpop.f32.mrf.mxu0
    %v1353 = vadd.f32 0.0, %v1352
    %1354 = vmatmul.f32.gmra.mxu0 %v1206
    %v1355 = vpop.f32.mrf.mxu0
    %v1356 = vadd.f32 0.0, %v1355
    %1357 = vmatmul.f32.gmra.mxu0 %v1209
    %v1358 = vpop.f32.mrf.mxu0
    %v1359 = vadd.f32 0.0, %v1358
    %1360 = vmatmul.f32.gmra.mxu0 %v1212
    %v1361 = vpop.f32.mrf.mxu0
    %v1362 = vadd.f32 0.0, %v1361
    %1363 = vmatmul.f32.gmra.mxu0 %v1215
    %v1364 = vpop.f32.mrf.mxu0
    %v1365 = vadd.f32 0.0, %v1364
    %1366 = vdwg.mxu0
    %1367 = vmatpush.msra.mxu0 %v1249
    %1368 = vmatpush.msra.mxu0 %v1248
    %1369 = vmatpush.msra.mxu0 %v1247
    %1370 = vmatpush.msra.mxu0 %v1246
    %1371 = vmatpush.msra.mxu0 %v1245
    %1372 = vmatpush.msra.mxu0 %v1244
    %1373 = vmatpush.msra.mxu0 %v1243
    %1374 = vmatpush.msra.mxu0 %v1242
    %1375 = vmatpush.msra.mxu0 %v1241
    %1376 = vmatpush.msra.mxu0 %v1240
    %1377 = vmatpush.msra.mxu0 %v1239
    %1378 = vmatpush.msra.mxu0 %v1238
    %1379 = vmatpush.msra.mxu0 %v1237
    %1380 = vmatpush.msra.mxu0 %v1236
    %1381 = vmatpush.msra.mxu0 %v1235
    %1382 = vmatpush.msra.mxu0 %v1234
    %1383 = vmatmul.f32.gmra.mxu0 %v1171
    %v1384 = vpop.f32.mrf.mxu0
    %v1385 = vadd.f32 %v1320, %v1384
    %1386 = vmatmul.f32.gmra.mxu0 %v1174
    %v1387 = vpop.f32.mrf.mxu0
    %v1388 = vadd.f32 %v1323, %v1387
    %1389 = vmatmul.f32.gmra.mxu0 %v1177
    %v1390 = vpop.f32.mrf.mxu0
    %v1391 = vadd.f32 %v1326, %v1390
    %1392 = vmatmul.f32.gmra.mxu0 %v1180
    %v1393 = vpop.f32.mrf.mxu0
    %v1394 = vadd.f32 %v1329, %v1393
    %1395 = vmatmul.f32.gmra.mxu0 %v1183
    %v1396 = vpop.f32.mrf.mxu0
    %v1397 = vadd.f32 %v1332, %v1396
    %1398 = vmatmul.f32.gmra.mxu0 %v1186
    %v1399 = vpop.f32.mrf.mxu0
    %v1400 = vadd.f32 %v1335, %v1399
    %1401 = vmatmul.f32.gmra.mxu0 %v1189
    %v1402 = vpop.f32.mrf.mxu0
    %v1403 = vadd.f32 %v1338, %v1402
    %1404 = vmatmul.f32.gmra.mxu0 %v1192
    %v1405 = vpop.f32.mrf.mxu0
    %v1406 = vadd.f32 %v1341, %v1405
    %1407 = vmatmul.f32.gmra.mxu0 %v1195
    %v1408 = vpop.f32.mrf.mxu0
    %v1409 = vadd.f32 %v1344, %v1408
    %1410 = vmatmul.f32.gmra.mxu0 %v1198
    %v1411 = vpop.f32.mrf.mxu0
    %v1412 = vadd.f32 %v1347, %v1411
    %1413 = vmatmul.f32.gmra.mxu0 %v1201
    %v1414 = vpop.f32.mrf.mxu0
    %v1415 = vadd.f32 %v1350, %v1414
    %1416 = vmatmul.f32.gmra.mxu0 %v1204
    %v1417 = vpop.f32.mrf.mxu0
    %v1418 = vadd.f32 %v1353, %v1417
    %1419 = vmatmul.f32.gmra.mxu0 %v1207
    %v1420 = vpop.f32.mrf.mxu0
    %v1421 = vadd.f32 %v1356, %v1420
    %1422 = vmatmul.f32.gmra.mxu0 %v1210
    %v1423 = vpop.f32.mrf.mxu0
    %v1424 = vadd.f32 %v1359, %v1423
    %1425 = vmatmul.f32.gmra.mxu0 %v1213
    %v1426 = vpop.f32.mrf.mxu0
    %v1427 = vadd.f32 %v1362, %v1426
    %1428 = vmatmul.f32.gmra.mxu0 %v1216
    %v1429 = vpop.f32.mrf.mxu0
    %v1430 = vadd.f32 %v1365, %v1429
    %1431 = vdwg.mxu0
    %1432 = vmatpush.msra.mxu0 0.0
    %1433 = vmatpush.msra.mxu0 0.0
    %1434 = vmatpush.msra.mxu0 0.0
    %1435 = vmatpush.msra.mxu0 0.0
    %1436 = vmatpush.msra.mxu0 0.0
    %1437 = vmatpush.msra.mxu0 0.0
    %1438 = vmatpush.msra.mxu0 0.0
    %1439 = vmatpush.msra.mxu0 0.0
    %1440 = vmatpush.msra.mxu0 0.0
    %1441 = vmatpush.msra.mxu0 0.0
    %1442 = vmatpush.msra.mxu0 0.0
    %1443 = vmatpush.msra.mxu0 0.0
    %1444 = vmatpush.msra.mxu0 %v1253
    %1445 = vmatpush.msra.mxu0 %v1252
    %1446 = vmatpush.msra.mxu0 %v1251
    %1447 = vmatpush.msra.mxu0 %v1250
    %1448 = vmatmul.f32.gmra.mxu0 %v1255
    %v1449 = vpop.f32.mrf.mxu0
    %v1450 = vadd.f32 %v1385, %v1449
    %1451 = vmatmul.f32.gmra.mxu0 %v1258
    %v1452 = vpop.f32.mrf.mxu0
    %v1453 = vadd.f32 %v1388, %v1452
    %1454 = vmatmul.f32.gmra.mxu0 %v1261
    %v1455 = vpop.f32.mrf.mxu0
    %v1456 = vadd.f32 %v1391, %v1455
    %1457 = vmatmul.f32.gmra.mxu0 %v1264
    %v1458 = vpop.f32.mrf.mxu0
    %v1459 = vadd.f32 %v1394, %v1458
    %1460 = vmatmul.f32.gmra.mxu0 %v1267
    %v1461 = vpop.f32.mrf.mxu0
    %v1462 = vadd.f32 %v1397, %v1461
    %1463 = vmatmul.f32.gmra.mxu0 %v1270
    %v1464 = vpop.f32.mrf.mxu0
    %v1465 = vadd.f32 %v1400, %v1464
    %1466 = vmatmul.f32.gmra.mxu0 %v1273
    %v1467 = vpop.f32.mrf.mxu0
    %v1468 = vadd.f32 %v1403, %v1467
    %1469 = vmatmul.f32.gmra.mxu0 %v1276
    %v1470 = vpop.f32.mrf.mxu0
    %v1471 = vadd.f32 %v1406, %v1470
    %1472 = vmatmul.f32.gmra.mxu0 %v1279
    %v1473 = vpop.f32.mrf.mxu0
    %v1474 = vadd.f32 %v1409, %v1473
    %1475 = vmatmul.f32.gmra.mxu0 %v1282
    %v1476 = vpop.f32.mrf.mxu0
    %v1477 = vadd.f32 %v1412, %v1476
    %1478 = vmatmul.f32.gmra.mxu0 %v1285
    %v1479 = vpop.f32.mrf.mxu0
    %v1480 = vadd.f32 %v1415, %v1479
    %1481 = vmatmul.f32.gmra.mxu0 %v1288
    %v1482 = vpop.f32.mrf.mxu0
    %v1483 = vadd.f32 %v1418, %v1482
    %1484 = vmatmul.f32.gmra.mxu0 %v1291
    %v1485 = vpop.f32.mrf.mxu0
    %v1486 = vadd.f32 %v1421, %v1485
    %1487 = vmatmul.f32.gmra.mxu0 %v1294
    %v1488 = vpop.f32.mrf.mxu0
    %v1489 = vadd.f32 %v1424, %v1488
    %1490 = vmatmul.f32.gmra.mxu0 %v1297
    %v1491 = vpop.f32.mrf.mxu0
    %v1492 = vadd.f32 %v1427, %v1491
    %1493 = vmatmul.f32.gmra.mxu0 %v1300
    %v1494 = vpop.f32.mrf.mxu0
    %v1495 = vadd.f32 %v1430, %v1494
    %1496 = vdwg.mxu0
    %v1497 = vld [vmem:[%s5] sm:$0x1]
    %v1499 = vperm.slane %v1497, 0
    %v1501 = vmul.f32 %v1450, %v1499
    %v1502 = vmul.f32 %v1453, %v1499
    %v1503 = vmul.f32 %v1456, %v1499
    %v1504 = vmul.f32 %v1459, %v1499
    %v1505 = vmul.f32 %v1462, %v1499
    %v1506 = vmul.f32 %v1465, %v1499
    %v1507 = vmul.f32 %v1468, %v1499
    %v1508 = vmul.f32 %v1471, %v1499
    %v1509 = vmul.f32 %v1474, %v1499
    %v1510 = vmul.f32 %v1477, %v1499
    %v1511 = vmul.f32 %v1480, %v1499
    %v1512 = vmul.f32 %v1483, %v1499
    %v1513 = vmul.f32 %v1486, %v1499
    %v1514 = vmul.f32 %v1489, %v1499
    %v1515 = vmul.f32 %v1492, %v1499
    %v1516 = vmul.f32 %v1495, %v1499
    %v1517 = vld [vmem:[%s6] sm:$0x1]
    %v1519 = vperm.slane %v1517, 0
    %v1521 = vadd.f32 %v1501, %v1519
    %v1522 = vadd.f32 %v1502, %v1519
    %v1523 = vadd.f32 %v1503, %v1519
    %v1524 = vadd.f32 %v1504, %v1519
    %v1525 = vadd.f32 %v1505, %v1519
    %v1526 = vadd.f32 %v1506, %v1519
    %v1527 = vadd.f32 %v1507, %v1519
    %v1528 = vadd.f32 %v1508, %v1519
    %v1529 = vadd.f32 %v1509, %v1519
    %v1530 = vadd.f32 %v1510, %v1519
    %v1531 = vadd.f32 %v1511, %v1519
    %v1532 = vadd.f32 %v1512, %v1519
    %v1533 = vadd.f32 %v1513, %v1519
    %v1534 = vadd.f32 %v1514, %v1519
    %v1535 = vadd.f32 %v1515, %v1519
    %v1536 = vadd.f32 %v1516, %v1519
    %v1537 = vmax.f32 %v1521, 0.0
    %v1538 = vmax.f32 %v1522, 0.0
    %v1539 = vmax.f32 %v1523, 0.0
    %v1540 = vmax.f32 %v1524, 0.0
    %v1541 = vmax.f32 %v1525, 0.0
    %v1542 = vmax.f32 %v1526, 0.0
    %v1543 = vmax.f32 %v1527, 0.0
    %v1544 = vmax.f32 %v1528, 0.0
    %v1545 = vmax.f32 %v1529, 0.0
    %v1546 = vmax.f32 %v1530, 0.0
    %v1547 = vmax.f32 %v1531, 0.0
    %v1548 = vmax.f32 %v1532, 0.0
    %v1549 = vmax.f32 %v1533, 0.0
    %v1550 = vmax.f32 %v1534, 0.0
    %v1551 = vmax.f32 %v1535, 0.0
    %v1552 = vmax.f32 %v1536, 0.0
    %1553 = vst.msk [vmem:[%s476 + $0x1] sm:$0xff] %vm54, %v1537
    %1554 = vst.msk [vmem:[%s476 + $0x11] sm:$0xff] %vm54, %v1538
    %1555 = vst.msk [vmem:[%s476 + $0x21] sm:$0xff] %vm54, %v1539
    %1556 = vst.msk [vmem:[%s476 + $0x31] sm:$0xff] %vm54, %v1540
    %1557 = vst.msk [vmem:[%s476 + $0x41] sm:$0xff] %vm54, %v1541
    %1558 = vst.msk [vmem:[%s476 + $0x51] sm:$0xff] %vm54, %v1542
    %1559 = vst.msk [vmem:[%s476 + $0x61] sm:$0xff] %vm54, %v1543
    %1560 = vst.msk [vmem:[%s476 + $0x71] sm:$0xff] %vm54, %v1544
    %1561 = vst.msk [vmem:[%s476 + $0xa1] sm:$0xff] %vm54, %v1545
    %1562 = vst.msk [vmem:[%s476 + $0xb1] sm:$0xff] %vm54, %v1546
    %1563 = vst.msk [vmem:[%s476 + $0xc1] sm:$0xff] %vm54, %v1547
    %1564 = vst.msk [vmem:[%s476 + $0xd1] sm:$0xff] %vm54, %v1548
    %1565 = vst.msk [vmem:[%s476 + $0xe1] sm:$0xff] %vm54, %v1549
    %1566 = vst.msk [vmem:[%s476 + $0xf1] sm:$0xff] %vm54, %v1550
    %1567 = vst.msk [vmem:[%s476 + $0x101] sm:$0xff] %vm54, %v1551
    %1568 = vst.msk [vmem:[%s476 + $0x111] sm:$0xff] %vm54, %v1552
    %v1569 = vld [vmem:[#allocation3] sm:$0xff]
    %v1570 = vld [vmem:[#allocation3 + $0x10] sm:$0xff]
    %v1571 = vld [vmem:[#allocation3 + $0x20] sm:$0xff]
    %v1572 = vld [vmem:[#allocation3 + $0x30] sm:$0xff]
    %v1573 = vld [vmem:[#allocation3 + $0x40] sm:$0xff]
    %v1574 = vld [vmem:[#allocation3 + $0x50] sm:$0xff]
    %v1575 = vld [vmem:[#allocation3 + $0x60] sm:$0xff]
    %v1576 = vld [vmem:[#allocation3 + $0x70] sm:$0xff]
    %v1577 = vld [vmem:[#allocation3 + $0xa0] sm:$0xff]
    %v1578 = vld [vmem:[#allocation3 + $0xb0] sm:$0xff]
    %v1579 = vld [vmem:[#allocation3 + $0xc0] sm:$0xff]
    %v1580 = vld [vmem:[#allocation3 + $0xd0] sm:$0xff]
    %v1581 = vld [vmem:[#allocation3 + $0xe0] sm:$0xff]
    %v1582 = vld [vmem:[#allocation3 + $0xf0] sm:$0xff]
    %v1583 = vld [vmem:[#allocation3 + $0x100] sm:$0xff]
    %v1584 = vld [vmem:[#allocation3 + $0x110] sm:$0xff]
    %1585 = vst.msk [vmem:[#allocation4] sm:$0xff] %vm54, %v1569
    %1586 = vst.msk [vmem:[#allocation4 + $0x20] sm:$0xff] %vm54, %v1570
    %1587 = vst.msk [vmem:[#allocation4 + $0x40] sm:$0xff] %vm54, %v1571
    %1588 = vst.msk [vmem:[#allocation4 + $0x60] sm:$0xff] %vm54, %v1572
    %1589 = vst.msk [vmem:[#allocation4 + $0x80] sm:$0xff] %vm54, %v1573
    %1590 = vst.msk [vmem:[#allocation4 + $0xa0] sm:$0xff] %vm54, %v1574
    %1591 = vst.msk [vmem:[#allocation4 + $0xc0] sm:$0xff] %vm54, %v1575
    %1592 = vst.msk [vmem:[#allocation4 + $0xe0] sm:$0xff] %vm54, %v1576
    %1593 = vst.msk [vmem:[#allocation4 + $0x100] sm:$0xff] %vm54, %v1577
    %1594 = vst.msk [vmem:[#allocation4 + $0x120] sm:$0xff] %vm54, %v1578
    %1595 = vst.msk [vmem:[#allocation4 + $0x140] sm:$0xff] %vm54, %v1579
    %1596 = vst.msk [vmem:[#allocation4 + $0x160] sm:$0xff] %vm54, %v1580
    %1597 = vst.msk [vmem:[#allocation4 + $0x180] sm:$0xff] %vm54, %v1581
    %1598 = vst.msk [vmem:[#allocation4 + $0x1a0] sm:$0xff] %vm54, %v1582
    %1599 = vst.msk [vmem:[#allocation4 + $0x1c0] sm:$0xff] %vm54, %v1583
    %1600 = vst.msk [vmem:[#allocation4 + $0x1e0] sm:$0xff] %vm54, %v1584
    %v1601 = vld [vmem:[#allocation3 + $0x1] sm:$0xff]
    %v1602 = vld [vmem:[#allocation3 + $0x11] sm:$0xff]
    %v1603 = vld [vmem:[#allocation3 + $0x21] sm:$0xff]
    %v1604 = vld [vmem:[#allocation3 + $0x31] sm:$0xff]
    %v1605 = vld [vmem:[#allocation3 + $0x41] sm:$0xff]
    %v1606 = vld [vmem:[#allocation3 + $0x51] sm:$0xff]
    %v1607 = vld [vmem:[#allocation3 + $0x61] sm:$0xff]
    %v1608 = vld [vmem:[#allocation3 + $0x71] sm:$0xff]
    %v1609 = vld [vmem:[#allocation3 + $0xa1] sm:$0xff]
    %v1610 = vld [vmem:[#allocation3 + $0xb1] sm:$0xff]
    %v1611 = vld [vmem:[#allocation3 + $0xc1] sm:$0xff]
    %v1612 = vld [vmem:[#allocation3 + $0xd1] sm:$0xff]
    %v1613 = vld [vmem:[#allocation3 + $0xe1] sm:$0xff]
    %v1614 = vld [vmem:[#allocation3 + $0xf1] sm:$0xff]
    %v1615 = vld [vmem:[#allocation3 + $0x101] sm:$0xff]
    %v1616 = vld [vmem:[#allocation3 + $0x111] sm:$0xff]
    %1633 = vrot.lane.b32.xlu0 %v1601, 48
    %v1634 = vpop.permute.xlu0 %1633
    %1635 = vrot.lane.b32.xlu0 %v1602, 48
    %v1636 = vpop.permute.xlu0 %1635
    %1637 = vrot.lane.b32.xlu0 %v1603, 48
    %v1638 = vpop.permute.xlu0 %1637
    %1639 = vrot.lane.b32.xlu0 %v1604, 48
    %v1640 = vpop.permute.xlu0 %1639
    %1641 = vrot.lane.b32.xlu0 %v1605, 48
    %v1642 = vpop.permute.xlu0 %1641
    %1643 = vrot.lane.b32.xlu0 %v1606, 48
    %v1644 = vpop.permute.xlu0 %1643
    %1645 = vrot.lane.b32.xlu0 %v1607, 48
    %v1646 = vpop.permute.xlu0 %1645
    %1647 = vrot.lane.b32.xlu0 %v1608, 48
    %v1648 = vpop.permute.xlu0 %1647
    %1649 = vrot.lane.b32.xlu0 %v1609, 48
    %v1650 = vpop.permute.xlu0 %1649
    %1651 = vrot.lane.b32.xlu0 %v1610, 48
    %v1652 = vpop.permute.xlu0 %1651
    %1653 = vrot.lane.b32.xlu0 %v1611, 48
    %v1654 = vpop.permute.xlu0 %1653
    %1655 = vrot.lane.b32.xlu0 %v1612, 48
    %v1656 = vpop.permute.xlu0 %1655
    %1657 = vrot.lane.b32.xlu0 %v1613, 48
    %v1658 = vpop.permute.xlu0 %1657
    %1659 = vrot.lane.b32.xlu0 %v1614, 48
    %v1660 = vpop.permute.xlu0 %1659
    %1661 = vrot.lane.b32.xlu0 %v1615, 48
    %v1662 = vpop.permute.xlu0 %1661
    %1663 = vrot.lane.b32.xlu0 %v1616, 48
    %v1664 = vpop.permute.xlu0 %1663
    %vm1681 = vcmask 785792
    %1682 = vst.msk [vmem:[#allocation4] sm:$0xff] %vm1681, %v1634
    %1683 = vst.msk [vmem:[#allocation4 + $0x20] sm:$0xff] %vm1681, %v1636
    %1684 = vst.msk [vmem:[#allocation4 + $0x40] sm:$0xff] %vm1681, %v1638
    %1685 = vst.msk [vmem:[#allocation4 + $0x60] sm:$0xff] %vm1681, %v1640
    %1686 = vst.msk [vmem:[#allocation4 + $0x80] sm:$0xff] %vm1681, %v1642
    %1687 = vst.msk [vmem:[#allocation4 + $0xa0] sm:$0xff] %vm1681, %v1644
    %1688 = vst.msk [vmem:[#allocation4 + $0xc0] sm:$0xff] %vm1681, %v1646
    %1689 = vst.msk [vmem:[#allocation4 + $0xe0] sm:$0xff] %vm1681, %v1648
    %1690 = vst.msk [vmem:[#allocation4 + $0x100] sm:$0xff] %vm1681, %v1650
    %1691 = vst.msk [vmem:[#allocation4 + $0x120] sm:$0xff] %vm1681, %v1652
    %1692 = vst.msk [vmem:[#allocation4 + $0x140] sm:$0xff] %vm1681, %v1654
    %1693 = vst.msk [vmem:[#allocation4 + $0x160] sm:$0xff] %vm1681, %v1656
    %1694 = vst.msk [vmem:[#allocation4 + $0x180] sm:$0xff] %vm1681, %v1658
    %1695 = vst.msk [vmem:[#allocation4 + $0x1a0] sm:$0xff] %vm1681, %v1660
    %1696 = vst.msk [vmem:[#allocation4 + $0x1c0] sm:$0xff] %vm1681, %v1662
    %1697 = vst.msk [vmem:[#allocation4 + $0x1e0] sm:$0xff] %vm1681, %v1664
    %v1698 = vld [vmem:[#allocation3 + $0x2] sm:$0xff]
    %v1699 = vld [vmem:[#allocation3 + $0x12] sm:$0xff]
    %v1700 = vld [vmem:[#allocation3 + $0x22] sm:$0xff]
    %v1701 = vld [vmem:[#allocation3 + $0x32] sm:$0xff]
    %v1702 = vld [vmem:[#allocation3 + $0x42] sm:$0xff]
    %v1703 = vld [vmem:[#allocation3 + $0x52] sm:$0xff]
    %v1704 = vld [vmem:[#allocation3 + $0x62] sm:$0xff]
    %v1705 = vld [vmem:[#allocation3 + $0x72] sm:$0xff]
    %v1706 = vld [vmem:[#allocation3 + $0xa2] sm:$0xff]
    %v1707 = vld [vmem:[#allocation3 + $0xb2] sm:$0xff]
    %v1708 = vld [vmem:[#allocation3 + $0xc2] sm:$0xff]
    %v1709 = vld [vmem:[#allocation3 + $0xd2] sm:$0xff]
    %v1710 = vld [vmem:[#allocation3 + $0xe2] sm:$0xff]
    %v1711 = vld [vmem:[#allocation3 + $0xf2] sm:$0xff]
    %v1712 = vld [vmem:[#allocation3 + $0x102] sm:$0xff]
    %v1713 = vld [vmem:[#allocation3 + $0x112] sm:$0xff]
    %1730 = vrot.lane.b32.xlu0 %v1698, 96
    %v1731 = vpop.permute.xlu0 %1730
    %1732 = vrot.lane.b32.xlu0 %v1699, 96
    %v1733 = vpop.permute.xlu0 %1732
    %1734 = vrot.lane.b32.xlu0 %v1700, 96
    %v1735 = vpop.permute.xlu0 %1734
    %1736 = vrot.lane.b32.xlu0 %v1701, 96
    %v1737 = vpop.permute.xlu0 %1736
    %1738 = vrot.lane.b32.xlu0 %v1702, 96
    %v1739 = vpop.permute.xlu0 %1738
    %1740 = vrot.lane.b32.xlu0 %v1703, 96
    %v1741 = vpop.permute.xlu0 %1740
    %1742 = vrot.lane.b32.xlu0 %v1704, 96
    %v1743 = vpop.permute.xlu0 %1742
    %1744 = vrot.lane.b32.xlu0 %v1705, 96
    %v1745 = vpop.permute.xlu0 %1744
    %1746 = vrot.lane.b32.xlu0 %v1706, 96
    %v1747 = vpop.permute.xlu0 %1746
    %1748 = vrot.lane.b32.xlu0 %v1707, 96
    %v1749 = vpop.permute.xlu0 %1748
    %1750 = vrot.lane.b32.xlu0 %v1708, 96
    %v1751 = vpop.permute.xlu0 %1750
    %1752 = vrot.lane.b32.xlu0 %v1709, 96
    %v1753 = vpop.permute.xlu0 %1752
    %1754 = vrot.lane.b32.xlu0 %v1710, 96
    %v1755 = vpop.permute.xlu0 %1754
    %1756 = vrot.lane.b32.xlu0 %v1711, 96
    %v1757 = vpop.permute.xlu0 %1756
    %1758 = vrot.lane.b32.xlu0 %v1712, 96
    %v1759 = vpop.permute.xlu0 %1758
    %1760 = vrot.lane.b32.xlu0 %v1713, 96
    %v1761 = vpop.permute.xlu0 %1760
    %1778 = vst.msk [vmem:[#allocation4] sm:$0xff] %vm800, %v1731
    %vm1779 = vcmask 130048
    %1780 = vst.msk [vmem:[#allocation4 + $0x8] sm:$0xff] %vm1779, %v1731
    %1781 = vst.msk [vmem:[#allocation4 + $0x20] sm:$0xff] %vm800, %v1733
    %1782 = vst.msk [vmem:[#allocation4 + $0x28] sm:$0xff] %vm1779, %v1733
    %1783 = vst.msk [vmem:[#allocation4 + $0x40] sm:$0xff] %vm800, %v1735
    %1784 = vst.msk [vmem:[#allocation4 + $0x48] sm:$0xff] %vm1779, %v1735
    %1785 = vst.msk [vmem:[#allocation4 + $0x60] sm:$0xff] %vm800, %v1737
    %1786 = vst.msk [vmem:[#allocation4 + $0x68] sm:$0xff] %vm1779, %v1737
    %1787 = vst.msk [vmem:[#allocation4 + $0x80] sm:$0xff] %vm800, %v1739
    %1788 = vst.msk [vmem:[#allocation4 + $0x88] sm:$0xff] %vm1779, %v1739
    %1789 = vst.msk [vmem:[#allocation4 + $0xa0] sm:$0xff] %vm800, %v1741
    %1790 = vst.msk [vmem:[#allocation4 + $0xa8] sm:$0xff] %vm1779, %v1741
    %1791 = vst.msk [vmem:[#allocation4 + $0xc0] sm:$0xff] %vm800, %v1743
    %1792 = vst.msk [vmem:[#allocation4 + $0xc8] sm:$0xff] %vm1779, %v1743
    %1793 = vst.msk [vmem:[#allocation4 + $0xe0] sm:$0xff] %vm800, %v1745
    %1794 = vst.msk [vmem:[#allocation4 + $0xe8] sm:$0xff] %vm1779, %v1745
    %1795 = vst.msk [vmem:[#allocation4 + $0x100] sm:$0xff] %vm800, %v1747
    %1796 = vst.msk [vmem:[#allocation4 + $0x108] sm:$0xff] %vm1779, %v1747
    %1797 = vst.msk [vmem:[#allocation4 + $0x120] sm:$0xff] %vm800, %v1749
    %1798 = vst.msk [vmem:[#allocation4 + $0x128] sm:$0xff] %vm1779, %v1749
    %1799 = vst.msk [vmem:[#allocation4 + $0x140] sm:$0xff] %vm800, %v1751
    %1800 = vst.msk [vmem:[#allocation4 + $0x148] sm:$0xff] %vm1779, %v1751
    %1801 = vst.msk [vmem:[#allocation4 + $0x160] sm:$0xff] %vm800, %v1753
    %1802 = vst.msk [vmem:[#allocation4 + $0x168] sm:$0xff] %vm1779, %v1753
    %1803 = vst.msk [vmem:[#allocation4 + $0x180] sm:$0xff] %vm800, %v1755
    %1804 = vst.msk [vmem:[#allocation4 + $0x188] sm:$0xff] %vm1779, %v1755
    %1805 = vst.msk [vmem:[#allocation4 + $0x1a0] sm:$0xff] %vm800, %v1757
    %1806 = vst.msk [vmem:[#allocation4 + $0x1a8] sm:$0xff] %vm1779, %v1757
    %1807 = vst.msk [vmem:[#allocation4 + $0x1c0] sm:$0xff] %vm800, %v1759
    %1808 = vst.msk [vmem:[#allocation4 + $0x1c8] sm:$0xff] %vm1779, %v1759
    %1809 = vst.msk [vmem:[#allocation4 + $0x1e0] sm:$0xff] %vm800, %v1761
    %1810 = vst.msk [vmem:[#allocation4 + $0x1e8] sm:$0xff] %vm1779, %v1761
    %v1811 = vld [vmem:[%s476] sm:$0xff]
    %v1812 = vld [vmem:[%s476 + $0x10] sm:$0xff]
    %v1813 = vld [vmem:[%s476 + $0x20] sm:$0xff]
    %v1814 = vld [vmem:[%s476 + $0x30] sm:$0xff]
    %v1815 = vld [vmem:[%s476 + $0x40] sm:$0xff]
    %v1816 = vld [vmem:[%s476 + $0x50] sm:$0xff]
    %v1817 = vld [vmem:[%s476 + $0x60] sm:$0xff]
    %v1818 = vld [vmem:[%s476 + $0x70] sm:$0xff]
    %v1819 = vld [vmem:[%s476 + $0xa0] sm:$0xff]
    %v1820 = vld [vmem:[%s476 + $0xb0] sm:$0xff]
    %v1821 = vld [vmem:[%s476 + $0xc0] sm:$0xff]
    %v1822 = vld [vmem:[%s476 + $0xd0] sm:$0xff]
    %v1823 = vld [vmem:[%s476 + $0xe0] sm:$0xff]
    %v1824 = vld [vmem:[%s476 + $0xf0] sm:$0xff]
    %v1825 = vld [vmem:[%s476 + $0x100] sm:$0xff]
    %v1826 = vld [vmem:[%s476 + $0x110] sm:$0xff]
    %1843 = vrot.lane.b32.xlu0 %v1811, 16
    %v1844 = vpop.permute.xlu0 %1843
    %1845 = vrot.lane.b32.xlu0 %v1812, 16
    %v1846 = vpop.permute.xlu0 %1845
    %1847 = vrot.lane.b32.xlu0 %v1813, 16
    %v1848 = vpop.permute.xlu0 %1847
    %1849 = vrot.lane.b32.xlu0 %v1814, 16
    %v1850 = vpop.permute.xlu0 %1849
    %1851 = vrot.lane.b32.xlu0 %v1815, 16
    %v1852 = vpop.permute.xlu0 %1851
    %1853 = vrot.lane.b32.xlu0 %v1816, 16
    %v1854 = vpop.permute.xlu0 %1853
    %1855 = vrot.lane.b32.xlu0 %v1817, 16
    %v1856 = vpop.permute.xlu0 %1855
    %1857 = vrot.lane.b32.xlu0 %v1818, 16
    %v1858 = vpop.permute.xlu0 %1857
    %1859 = vrot.lane.b32.xlu0 %v1819, 16
    %v1860 = vpop.permute.xlu0 %1859
    %1861 = vrot.lane.b32.xlu0 %v1820, 16
    %v1862 = vpop.permute.xlu0 %1861
    %1863 = vrot.lane.b32.xlu0 %v1821, 16
    %v1864 = vpop.permute.xlu0 %1863
    %1865 = vrot.lane.b32.xlu0 %v1822, 16
    %v1866 = vpop.permute.xlu0 %1865
    %1867 = vrot.lane.b32.xlu0 %v1823, 16
    %v1868 = vpop.permute.xlu0 %1867
    %1869 = vrot.lane.b32.xlu0 %v1824, 16
    %v1870 = vpop.permute.xlu0 %1869
    %1871 = vrot.lane.b32.xlu0 %v1825, 16
    %v1872 = vpop.permute.xlu0 %1871
    %1873 = vrot.lane.b32.xlu0 %v1826, 16
    %v1874 = vpop.permute.xlu0 %1873
    %vm1891 = vcmask 523392
    %1892 = vst.msk [vmem:[#allocation4 + $0x8] sm:$0xff] %vm1891, %v1844
    %1893 = vst.msk [vmem:[#allocation4 + $0x28] sm:$0xff] %vm1891, %v1846
    %1894 = vst.msk [vmem:[#allocation4 + $0x48] sm:$0xff] %vm1891, %v1848
    %1895 = vst.msk [vmem:[#allocation4 + $0x68] sm:$0xff] %vm1891, %v1850
    %1896 = vst.msk [vmem:[#allocation4 + $0x88] sm:$0xff] %vm1891, %v1852
    %1897 = vst.msk [vmem:[#allocation4 + $0xa8] sm:$0xff] %vm1891, %v1854
    %1898 = vst.msk [vmem:[#allocation4 + $0xc8] sm:$0xff] %vm1891, %v1856
    %1899 = vst.msk [vmem:[#allocation4 + $0xe8] sm:$0xff] %vm1891, %v1858
    %1900 = vst.msk [vmem:[#allocation4 + $0x108] sm:$0xff] %vm1891, %v1860
    %1901 = vst.msk [vmem:[#allocation4 + $0x128] sm:$0xff] %vm1891, %v1862
    %1902 = vst.msk [vmem:[#allocation4 + $0x148] sm:$0xff] %vm1891, %v1864
    %1903 = vst.msk [vmem:[#allocation4 + $0x168] sm:$0xff] %vm1891, %v1866
    %1904 = vst.msk [vmem:[#allocation4 + $0x188] sm:$0xff] %vm1891, %v1868
    %1905 = vst.msk [vmem:[#allocation4 + $0x1a8] sm:$0xff] %vm1891, %v1870
    %1906 = vst.msk [vmem:[#allocation4 + $0x1c8] sm:$0xff] %vm1891, %v1872
    %1907 = vst.msk [vmem:[#allocation4 + $0x1e8] sm:$0xff] %vm1891, %v1874
    %v1908 = vld [vmem:[%s476 + $0x1] sm:$0xff]
    %v1909 = vld [vmem:[%s476 + $0x11] sm:$0xff]
    %v1910 = vld [vmem:[%s476 + $0x21] sm:$0xff]
    %v1911 = vld [vmem:[%s476 + $0x31] sm:$0xff]
    %v1912 = vld [vmem:[%s476 + $0x41] sm:$0xff]
    %v1913 = vld [vmem:[%s476 + $0x51] sm:$0xff]
    %v1914 = vld [vmem:[%s476 + $0x61] sm:$0xff]
    %v1915 = vld [vmem:[%s476 + $0x71] sm:$0xff]
    %v1916 = vld [vmem:[%s476 + $0xa1] sm:$0xff]
    %v1917 = vld [vmem:[%s476 + $0xb1] sm:$0xff]
    %v1918 = vld [vmem:[%s476 + $0xc1] sm:$0xff]
    %v1919 = vld [vmem:[%s476 + $0xd1] sm:$0xff]
    %v1920 = vld [vmem:[%s476 + $0xe1] sm:$0xff]
    %v1921 = vld [vmem:[%s476 + $0xf1] sm:$0xff]
    %v1922 = vld [vmem:[%s476 + $0x101] sm:$0xff]
    %v1923 = vld [vmem:[%s476 + $0x111] sm:$0xff]
    %1940 = vrot.lane.b32.xlu0 %v1908, 64
    %v1941 = vpop.permute.xlu0 %1940
    %1942 = vrot.lane.b32.xlu0 %v1909, 64
    %v1943 = vpop.permute.xlu0 %1942
    %1944 = vrot.lane.b32.xlu0 %v1910, 64
    %v1945 = vpop.permute.xlu0 %1944
    %1946 = vrot.lane.b32.xlu0 %v1911, 64
    %v1947 = vpop.permute.xlu0 %1946
    %1948 = vrot.lane.b32.xlu0 %v1912, 64
    %v1949 = vpop.permute.xlu0 %1948
    %1950 = vrot.lane.b32.xlu0 %v1913, 64
    %v1951 = vpop.permute.xlu0 %1950
    %1952 = vrot.lane.b32.xlu0 %v1914, 64
    %v1953 = vpop.permute.xlu0 %1952
    %1954 = vrot.lane.b32.xlu0 %v1915, 64
    %v1955 = vpop.permute.xlu0 %1954
    %1956 = vrot.lane.b32.xlu0 %v1916, 64
    %v1957 = vpop.permute.xlu0 %1956
    %1958 = vrot.lane.b32.xlu0 %v1917, 64
    %v1959 = vpop.permute.xlu0 %1958
    %1960 = vrot.lane.b32.xlu0 %v1918, 64
    %v1961 = vpop.permute.xlu0 %1960
    %1962 = vrot.lane.b32.xlu0 %v1919, 64
    %v1963 = vpop.permute.xlu0 %1962
    %1964 = vrot.lane.b32.xlu0 %v1920, 64
    %v1965 = vpop.permute.xlu0 %1964
    %1966 = vrot.lane.b32.xlu0 %v1921, 64
    %v1967 = vpop.permute.xlu0 %1966
    %1968 = vrot.lane.b32.xlu0 %v1922, 64
    %v1969 = vpop.permute.xlu0 %1968
    %1970 = vrot.lane.b32.xlu0 %v1923, 64
    %v1971 = vpop.permute.xlu0 %1970
    %vm1988 = vcmask 916992
    %1989 = vst.msk [vmem:[#allocation4 + $0x8] sm:$0xff] %vm1988, %v1941
    %1990 = vst.msk [vmem:[#allocation4 + $0x28] sm:$0xff] %vm1988, %v1943
    %1991 = vst.msk [vmem:[#allocation4 + $0x48] sm:$0xff] %vm1988, %v1945
    %1992 = vst.msk [vmem:[#allocation4 + $0x68] sm:$0xff] %vm1988, %v1947
    %1993 = vst.msk [vmem:[#allocation4 + $0x88] sm:$0xff] %vm1988, %v1949
    %1994 = vst.msk [vmem:[#allocation4 + $0xa8] sm:$0xff] %vm1988, %v1951
    %1995 = vst.msk [vmem:[#allocation4 + $0xc8] sm:$0xff] %vm1988, %v1953
    %1996 = vst.msk [vmem:[#allocation4 + $0xe8] sm:$0xff] %vm1988, %v1955
    %1997 = vst.msk [vmem:[#allocation4 + $0x108] sm:$0xff] %vm1988, %v1957
    %1998 = vst.msk [vmem:[#allocation4 + $0x128] sm:$0xff] %vm1988, %v1959
    %1999 = vst.msk [vmem:[#allocation4 + $0x148] sm:$0xff] %vm1988, %v1961
    %2000 = vst.msk [vmem:[#allocation4 + $0x168] sm:$0xff] %vm1988, %v1963
    %2001 = vst.msk [vmem:[#allocation4 + $0x188] sm:$0xff] %vm1988, %v1965
    %2002 = vst.msk [vmem:[#allocation4 + $0x1a8] sm:$0xff] %vm1988, %v1967
    %2003 = vst.msk [vmem:[#allocation4 + $0x1c8] sm:$0xff] %vm1988, %v1969
    %2004 = vst.msk [vmem:[#allocation4 + $0x1e8] sm:$0xff] %vm1988, %v1971
    %v2005 = vld [vmem:[%s476 + $0x2] sm:$0xff]
    %v2006 = vld [vmem:[%s476 + $0x12] sm:$0xff]
    %v2007 = vld [vmem:[%s476 + $0x22] sm:$0xff]
    %v2008 = vld [vmem:[%s476 + $0x32] sm:$0xff]
    %v2009 = vld [vmem:[%s476 + $0x42] sm:$0xff]
    %v2010 = vld [vmem:[%s476 + $0x52] sm:$0xff]
    %v2011 = vld [vmem:[%s476 + $0x62] sm:$0xff]
    %v2012 = vld [vmem:[%s476 + $0x72] sm:$0xff]
    %v2013 = vld [vmem:[%s476 + $0xa2] sm:$0xff]
    %v2014 = vld [vmem:[%s476 + $0xb2] sm:$0xff]
    %v2015 = vld [vmem:[%s476 + $0xc2] sm:$0xff]
    %v2016 = vld [vmem:[%s476 + $0xd2] sm:$0xff]
    %v2017 = vld [vmem:[%s476 + $0xe2] sm:$0xff]
    %v2018 = vld [vmem:[%s476 + $0xf2] sm:$0xff]
    %v2019 = vld [vmem:[%s476 + $0x102] sm:$0xff]
    %v2020 = vld [vmem:[%s476 + $0x112] sm:$0xff]
    %2037 = vrot.lane.b32.xlu0 %v2005, 112
    %v2038 = vpop.permute.xlu0 %2037
    %2039 = vrot.lane.b32.xlu0 %v2006, 112
    %v2040 = vpop.permute.xlu0 %2039
    %2041 = vrot.lane.b32.xlu0 %v2007, 112
    %v2042 = vpop.permute.xlu0 %2041
    %2043 = vrot.lane.b32.xlu0 %v2008, 112
    %v2044 = vpop.permute.xlu0 %2043
    %2045 = vrot.lane.b32.xlu0 %v2009, 112
    %v2046 = vpop.permute.xlu0 %2045
    %2047 = vrot.lane.b32.xlu0 %v2010, 112
    %v2048 = vpop.permute.xlu0 %2047
    %2049 = vrot.lane.b32.xlu0 %v2011, 112
    %v2050 = vpop.permute.xlu0 %2049
    %2051 = vrot.lane.b32.xlu0 %v2012, 112
    %v2052 = vpop.permute.xlu0 %2051
    %2053 = vrot.lane.b32.xlu0 %v2013, 112
    %v2054 = vpop.permute.xlu0 %2053
    %2055 = vrot.lane.b32.xlu0 %v2014, 112
    %v2056 = vpop.permute.xlu0 %2055
    %2057 = vrot.lane.b32.xlu0 %v2015, 112
    %v2058 = vpop.permute.xlu0 %2057
    %2059 = vrot.lane.b32.xlu0 %v2016, 112
    %v2060 = vpop.permute.xlu0 %2059
    %2061 = vrot.lane.b32.xlu0 %v2017, 112
    %v2062 = vpop.permute.xlu0 %2061
    %2063 = vrot.lane.b32.xlu0 %v2018, 112
    %v2064 = vpop.permute.xlu0 %2063
    %2065 = vrot.lane.b32.xlu0 %v2019, 112
    %v2066 = vpop.permute.xlu0 %2065
    %2067 = vrot.lane.b32.xlu0 %v2020, 112
    %v2068 = vpop.permute.xlu0 %2067
    %vm2085 = vcmask 1048448
    %2086 = vst.msk [vmem:[#allocation4 + $0x8] sm:$0xff] %vm2085, %v2038
    %2087 = vst.msk [vmem:[#allocation4 + $0x10] sm:$0xff] %vm477, %v2038
    %2088 = vst.msk [vmem:[#allocation4 + $0x28] sm:$0xff] %vm2085, %v2040
    %2089 = vst.msk [vmem:[#allocation4 + $0x30] sm:$0xff] %vm477, %v2040
    %2090 = vst.msk [vmem:[#allocation4 + $0x48] sm:$0xff] %vm2085, %v2042
    %2091 = vst.msk [vmem:[#allocation4 + $0x50] sm:$0xff] %vm477, %v2042
    %2092 = vst.msk [vmem:[#allocation4 + $0x68] sm:$0xff] %vm2085, %v2044
    %2093 = vst.msk [vmem:[#allocation4 + $0x70] sm:$0xff] %vm477, %v2044
    %2094 = vst.msk [vmem:[#allocation4 + $0x88] sm:$0xff] %vm2085, %v2046
    %2095 = vst.msk [vmem:[#allocation4 + $0x90] sm:$0xff] %vm477, %v2046
    %2096 = vst.msk [vmem:[#allocation4 + $0xa8] sm:$0xff] %vm2085, %v2048
    %2097 = vst.msk [vmem:[#allocation4 + $0xb0] sm:$0xff] %vm477, %v2048
    %2098 = vst.msk [vmem:[#allocation4 + $0xc8] sm:$0xff] %vm2085, %v2050
    %2099 = vst.msk [vmem:[#allocation4 + $0xd0] sm:$0xff] %vm477, %v2050
    %2100 = vst.msk [vmem:[#allocation4 + $0xe8] sm:$0xff] %vm2085, %v2052
    %2101 = vst.msk [vmem:[#allocation4 + $0xf0] sm:$0xff] %vm477, %v2052
    %2102 = vst.msk [vmem:[#allocation4 + $0x108] sm:$0xff] %vm2085, %v2054
    %2103 = vst.msk [vmem:[#allocation4 + $0x110] sm:$0xff] %vm477, %v2054
    %2104 = vst.msk [vmem:[#allocation4 + $0x128] sm:$0xff] %vm2085, %v2056
    %2105 = vst.msk [vmem:[#allocation4 + $0x130] sm:$0xff] %vm477, %v2056
    %2106 = vst.msk [vmem:[#allocation4 + $0x148] sm:$0xff] %vm2085, %v2058
    %2107 = vst.msk [vmem:[#allocation4 + $0x150] sm:$0xff] %vm477, %v2058
    %2108 = vst.msk [vmem:[#allocation4 + $0x168] sm:$0xff] %vm2085, %v2060
    %2109 = vst.msk [vmem:[#allocation4 + $0x170] sm:$0xff] %vm477, %v2060
    %2110 = vst.msk [vmem:[#allocation4 + $0x188] sm:$0xff] %vm2085, %v2062
    %2111 = vst.msk [vmem:[#allocation4 + $0x190] sm:$0xff] %vm477, %v2062
    %2112 = vst.msk [vmem:[#allocation4 + $0x1a8] sm:$0xff] %vm2085, %v2064
    %2113 = vst.msk [vmem:[#allocation4 + $0x1b0] sm:$0xff] %vm477, %v2064
    %2114 = vst.msk [vmem:[#allocation4 + $0x1c8] sm:$0xff] %vm2085, %v2066
    %2115 = vst.msk [vmem:[#allocation4 + $0x1d0] sm:$0xff] %vm477, %v2066
    %2116 = vst.msk [vmem:[#allocation4 + $0x1e8] sm:$0xff] %vm2085, %v2068
    %2117 = vst.msk [vmem:[#allocation4 + $0x1f0] sm:$0xff] %vm477, %v2068
    %v2118 = vld [vmem:[%s945] sm:$0xff]
    %v2119 = vld [vmem:[%s945 + $0x10] sm:$0xff]
    %v2120 = vld [vmem:[%s945 + $0x20] sm:$0xff]
    %v2121 = vld [vmem:[%s945 + $0x30] sm:$0xff]
    %v2122 = vld [vmem:[%s945 + $0x40] sm:$0xff]
    %v2123 = vld [vmem:[%s945 + $0x50] sm:$0xff]
    %v2124 = vld [vmem:[%s945 + $0x60] sm:$0xff]
    %v2125 = vld [vmem:[%s945 + $0x70] sm:$0xff]
    %v2126 = vld [vmem:[%s945 + $0xa0] sm:$0xff]
    %v2127 = vld [vmem:[%s945 + $0xb0] sm:$0xff]
    %v2128 = vld [vmem:[%s945 + $0xc0] sm:$0xff]
    %v2129 = vld [vmem:[%s945 + $0xd0] sm:$0xff]
    %v2130 = vld [vmem:[%s945 + $0xe0] sm:$0xff]
    %v2131 = vld [vmem:[%s945 + $0xf0] sm:$0xff]
    %v2132 = vld [vmem:[%s945 + $0x100] sm:$0xff]
    %v2133 = vld [vmem:[%s945 + $0x110] sm:$0xff]
    %2150 = vrot.lane.b32.xlu0 %v2118, 32
    %v2151 = vpop.permute.xlu0 %2150
    %2152 = vrot.lane.b32.xlu0 %v2119, 32
    %v2153 = vpop.permute.xlu0 %2152
    %2154 = vrot.lane.b32.xlu0 %v2120, 32
    %v2155 = vpop.permute.xlu0 %2154
    %2156 = vrot.lane.b32.xlu0 %v2121, 32
    %v2157 = vpop.permute.xlu0 %2156
    %2158 = vrot.lane.b32.xlu0 %v2122, 32
    %v2159 = vpop.permute.xlu0 %2158
    %2160 = vrot.lane.b32.xlu0 %v2123, 32
    %v2161 = vpop.permute.xlu0 %2160
    %2162 = vrot.lane.b32.xlu0 %v2124, 32
    %v2163 = vpop.permute.xlu0 %2162
    %2164 = vrot.lane.b32.xlu0 %v2125, 32
    %v2165 = vpop.permute.xlu0 %2164
    %2166 = vrot.lane.b32.xlu0 %v2126, 32
    %v2167 = vpop.permute.xlu0 %2166
    %2168 = vrot.lane.b32.xlu0 %v2127, 32
    %v2169 = vpop.permute.xlu0 %2168
    %2170 = vrot.lane.b32.xlu0 %v2128, 32
    %v2171 = vpop.permute.xlu0 %2170
    %2172 = vrot.lane.b32.xlu0 %v2129, 32
    %v2173 = vpop.permute.xlu0 %2172
    %2174 = vrot.lane.b32.xlu0 %v2130, 32
    %v2175 = vpop.permute.xlu0 %2174
    %2176 = vrot.lane.b32.xlu0 %v2131, 32
    %v2177 = vpop.permute.xlu0 %2176
    %2178 = vrot.lane.b32.xlu0 %v2132, 32
    %v2179 = vpop.permute.xlu0 %2178
    %2180 = vrot.lane.b32.xlu0 %v2133, 32
    %v2181 = vpop.permute.xlu0 %2180
    %vm2198 = vcmask 654592
    %2199 = vst.msk [vmem:[#allocation4 + $0x10] sm:$0xff] %vm2198, %v2151
    %2200 = vst.msk [vmem:[#allocation4 + $0x30] sm:$0xff] %vm2198, %v2153
    %2201 = vst.msk [vmem:[#allocation4 + $0x50] sm:$0xff] %vm2198, %v2155
    %2202 = vst.msk [vmem:[#allocation4 + $0x70] sm:$0xff] %vm2198, %v2157
    %2203 = vst.msk [vmem:[#allocation4 + $0x90] sm:$0xff] %vm2198, %v2159
    %2204 = vst.msk [vmem:[#allocation4 + $0xb0] sm:$0xff] %vm2198, %v2161
    %2205 = vst.msk [vmem:[#allocation4 + $0xd0] sm:$0xff] %vm2198, %v2163
    %2206 = vst.msk [vmem:[#allocation4 + $0xf0] sm:$0xff] %vm2198, %v2165
    %2207 = vst.msk [vmem:[#allocation4 + $0x110] sm:$0xff] %vm2198, %v2167
    %2208 = vst.msk [vmem:[#allocation4 + $0x130] sm:$0xff] %vm2198, %v2169
    %2209 = vst.msk [vmem:[#allocation4 + $0x150] sm:$0xff] %vm2198, %v2171
    %2210 = vst.msk [vmem:[#allocation4 + $0x170] sm:$0xff] %vm2198, %v2173
    %2211 = vst.msk [vmem:[#allocation4 + $0x190] sm:$0xff] %vm2198, %v2175
    %2212 = vst.msk [vmem:[#allocation4 + $0x1b0] sm:$0xff] %vm2198, %v2177
    %2213 = vst.msk [vmem:[#allocation4 + $0x1d0] sm:$0xff] %vm2198, %v2179
    %2214 = vst.msk [vmem:[#allocation4 + $0x1f0] sm:$0xff] %vm2198, %v2181
    %v2215 = vld [vmem:[%s945 + $0x1] sm:$0xff]
    %v2216 = vld [vmem:[%s945 + $0x11] sm:$0xff]
    %v2217 = vld [vmem:[%s945 + $0x21] sm:$0xff]
    %v2218 = vld [vmem:[%s945 + $0x31] sm:$0xff]
    %v2219 = vld [vmem:[%s945 + $0x41] sm:$0xff]
    %v2220 = vld [vmem:[%s945 + $0x51] sm:$0xff]
    %v2221 = vld [vmem:[%s945 + $0x61] sm:$0xff]
    %v2222 = vld [vmem:[%s945 + $0x71] sm:$0xff]
    %v2223 = vld [vmem:[%s945 + $0xa1] sm:$0xff]
    %v2224 = vld [vmem:[%s945 + $0xb1] sm:$0xff]
    %v2225 = vld [vmem:[%s945 + $0xc1] sm:$0xff]
    %v2226 = vld [vmem:[%s945 + $0xd1] sm:$0xff]
    %v2227 = vld [vmem:[%s945 + $0xe1] sm:$0xff]
    %v2228 = vld [vmem:[%s945 + $0xf1] sm:$0xff]
    %v2229 = vld [vmem:[%s945 + $0x101] sm:$0xff]
    %v2230 = vld [vmem:[%s945 + $0x111] sm:$0xff]
    %2247 = vrot.lane.b32.xlu0 %v2215, 80
    %v2248 = vpop.permute.xlu0 %2247
    %2249 = vrot.lane.b32.xlu0 %v2216, 80
    %v2250 = vpop.permute.xlu0 %2249
    %2251 = vrot.lane.b32.xlu0 %v2217, 80
    %v2252 = vpop.permute.xlu0 %2251
    %2253 = vrot.lane.b32.xlu0 %v2218, 80
    %v2254 = vpop.permute.xlu0 %2253
    %2255 = vrot.lane.b32.xlu0 %v2219, 80
    %v2256 = vpop.permute.xlu0 %2255
    %2257 = vrot.lane.b32.xlu0 %v2220, 80
    %v2258 = vpop.permute.xlu0 %2257
    %2259 = vrot.lane.b32.xlu0 %v2221, 80
    %v2260 = vpop.permute.xlu0 %2259
    %2261 = vrot.lane.b32.xlu0 %v2222, 80
    %v2262 = vpop.permute.xlu0 %2261
    %2263 = vrot.lane.b32.xlu0 %v2223, 80
    %v2264 = vpop.permute.xlu0 %2263
    %2265 = vrot.lane.b32.xlu0 %v2224, 80
    %v2266 = vpop.permute.xlu0 %2265
    %2267 = vrot.lane.b32.xlu0 %v2225, 80
    %v2268 = vpop.permute.xlu0 %2267
    %2269 = vrot.lane.b32.xlu0 %v2226, 80
    %v2270 = vpop.permute.xlu0 %2269
    %2271 = vrot.lane.b32.xlu0 %v2227, 80
    %v2272 = vpop.permute.xlu0 %2271
    %2273 = vrot.lane.b32.xlu0 %v2228, 80
    %v2274 = vpop.permute.xlu0 %2273
    %2275 = vrot.lane.b32.xlu0 %v2229, 80
    %v2276 = vpop.permute.xlu0 %2275
    %2277 = vrot.lane.b32.xlu0 %v2230, 80
    %v2278 = vpop.permute.xlu0 %2277
    %vm2295 = vcmask 1048192
    %2296 = vst.msk [vmem:[#allocation4 + $0x10] sm:$0xff] %vm2295, %v2248
    %2297 = vst.msk [vmem:[#allocation4 + $0x30] sm:$0xff] %vm2295, %v2250
    %2298 = vst.msk [vmem:[#allocation4 + $0x50] sm:$0xff] %vm2295, %v2252
    %2299 = vst.msk [vmem:[#allocation4 + $0x70] sm:$0xff] %vm2295, %v2254
    %2300 = vst.msk [vmem:[#allocation4 + $0x90] sm:$0xff] %vm2295, %v2256
    %2301 = vst.msk [vmem:[#allocation4 + $0xb0] sm:$0xff] %vm2295, %v2258
    %2302 = vst.msk [vmem:[#allocation4 + $0xd0] sm:$0xff] %vm2295, %v2260
    %2303 = vst.msk [vmem:[#allocation4 + $0xf0] sm:$0xff] %vm2295, %v2262
    %2304 = vst.msk [vmem:[#allocation4 + $0x110] sm:$0xff] %vm2295, %v2264
    %2305 = vst.msk [vmem:[#allocation4 + $0x130] sm:$0xff] %vm2295, %v2266
    %2306 = vst.msk [vmem:[#allocation4 + $0x150] sm:$0xff] %vm2295, %v2268
    %2307 = vst.msk [vmem:[#allocation4 + $0x170] sm:$0xff] %vm2295, %v2270
    %2308 = vst.msk [vmem:[#allocation4 + $0x190] sm:$0xff] %vm2295, %v2272
    %2309 = vst.msk [vmem:[#allocation4 + $0x1b0] sm:$0xff] %vm2295, %v2274
    %2310 = vst.msk [vmem:[#allocation4 + $0x1d0] sm:$0xff] %vm2295, %v2276
    %2311 = vst.msk [vmem:[#allocation4 + $0x1f0] sm:$0xff] %vm2295, %v2278
    %v2312 = vld [vmem:[%s945 + $0x2] sm:$0xff]
    %v2313 = vld [vmem:[%s945 + $0x12] sm:$0xff]
    %v2314 = vld [vmem:[%s945 + $0x22] sm:$0xff]
    %v2315 = vld [vmem:[%s945 + $0x32] sm:$0xff]
    %v2316 = vld [vmem:[%s945 + $0x42] sm:$0xff]
    %v2317 = vld [vmem:[%s945 + $0x52] sm:$0xff]
    %v2318 = vld [vmem:[%s945 + $0x62] sm:$0xff]
    %v2319 = vld [vmem:[%s945 + $0x72] sm:$0xff]
    %v2320 = vld [vmem:[%s945 + $0xa2] sm:$0xff]
    %v2321 = vld [vmem:[%s945 + $0xb2] sm:$0xff]
    %v2322 = vld [vmem:[%s945 + $0xc2] sm:$0xff]
    %v2323 = vld [vmem:[%s945 + $0xd2] sm:$0xff]
    %v2324 = vld [vmem:[%s945 + $0xe2] sm:$0xff]
    %v2325 = vld [vmem:[%s945 + $0xf2] sm:$0xff]
    %v2326 = vld [vmem:[%s945 + $0x102] sm:$0xff]
    %v2327 = vld [vmem:[%s945 + $0x112] sm:$0xff]
    %2328 = vst.msk [vmem:[#allocation4 + $0x18] sm:$0xff] %vm54, %v2312
    %2329 = vst.msk [vmem:[#allocation4 + $0x38] sm:$0xff] %vm54, %v2313
    %2330 = vst.msk [vmem:[#allocation4 + $0x58] sm:$0xff] %vm54, %v2314
    %2331 = vst.msk [vmem:[#allocation4 + $0x78] sm:$0xff] %vm54, %v2315
    %2332 = vst.msk [vmem:[#allocation4 + $0x98] sm:$0xff] %vm54, %v2316
    %2333 = vst.msk [vmem:[#allocation4 + $0xb8] sm:$0xff] %vm54, %v2317
    %2334 = vst.msk [vmem:[#allocation4 + $0xd8] sm:$0xff] %vm54, %v2318
    %2335 = vst.msk [vmem:[#allocation4 + $0xf8] sm:$0xff] %vm54, %v2319
    %2336 = vst.msk [vmem:[#allocation4 + $0x118] sm:$0xff] %vm54, %v2320
    %2337 = vst.msk [vmem:[#allocation4 + $0x138] sm:$0xff] %vm54, %v2321
    %2338 = vst.msk [vmem:[#allocation4 + $0x158] sm:$0xff] %vm54, %v2322
    %2339 = vst.msk [vmem:[#allocation4 + $0x178] sm:$0xff] %vm54, %v2323
    %2340 = vst.msk [vmem:[#allocation4 + $0x198] sm:$0xff] %vm54, %v2324
    %2341 = vst.msk [vmem:[#allocation4 + $0x1b8] sm:$0xff] %vm54, %v2325
    %2342 = vst.msk [vmem:[#allocation4 + $0x1d8] sm:$0xff] %vm54, %v2326
    %2343 = vst.msk [vmem:[#allocation4 + $0x1f8] sm:$0xff] %vm54, %v2327
    %v2344 = vld [vmem:[#allocation4] sm:$0xff]
    %v2345 = vld [vmem:[#allocation4 + $0x8] sm:$0xff]
    %v2346 = vld [vmem:[#allocation4 + $0x10] sm:$0xff]
    %v2347 = vld [vmem:[#allocation4 + $0x18] sm:$0xff]
    %v2348 = vld [vmem:[#allocation4 + $0x20] sm:$0xff]
    %v2349 = vld [vmem:[#allocation4 + $0x28] sm:$0xff]
    %v2350 = vld [vmem:[#allocation4 + $0x30] sm:$0xff]
    %v2351 = vld [vmem:[#allocation4 + $0x38] sm:$0xff]
    %v2352 = vld [vmem:[#allocation4 + $0x40] sm:$0xff]
    %v2353 = vld [vmem:[#allocation4 + $0x48] sm:$0xff]
    %v2354 = vld [vmem:[#allocation4 + $0x50] sm:$0xff]
    %v2355 = vld [vmem:[#allocation4 + $0x58] sm:$0xff]
    %v2356 = vld [vmem:[#allocation4 + $0x60] sm:$0xff]
    %v2357 = vld [vmem:[#allocation4 + $0x68] sm:$0xff]
    %v2358 = vld [vmem:[#allocation4 + $0x70] sm:$0xff]
    %v2359 = vld [vmem:[#allocation4 + $0x78] sm:$0xff]
    %v2360 = vld [vmem:[#allocation4 + $0x80] sm:$0xff]
    %v2361 = vld [vmem:[#allocation4 + $0x88] sm:$0xff]
    %v2362 = vld [vmem:[#allocation4 + $0x90] sm:$0xff]
    %v2363 = vld [vmem:[#allocation4 + $0x98] sm:$0xff]
    %v2364 = vld [vmem:[#allocation4 + $0xa0] sm:$0xff]
    %v2365 = vld [vmem:[#allocation4 + $0xa8] sm:$0xff]
    %v2366 = vld [vmem:[#allocation4 + $0xb0] sm:$0xff]
    %v2367 = vld [vmem:[#allocation4 + $0xb8] sm:$0xff]
    %v2368 = vld [vmem:[#allocation4 + $0xc0] sm:$0xff]
    %v2369 = vld [vmem:[#allocation4 + $0xc8] sm:$0xff]
    %v2370 = vld [vmem:[#allocation4 + $0xd0] sm:$0xff]
    %v2371 = vld [vmem:[#allocation4 + $0xd8] sm:$0xff]
    %v2372 = vld [vmem:[#allocation4 + $0xe0] sm:$0xff]
    %v2373 = vld [vmem:[#allocation4 + $0xe8] sm:$0xff]
    %v2374 = vld [vmem:[#allocation4 + $0xf0] sm:$0xff]
    %v2375 = vld [vmem:[#allocation4 + $0xf8] sm:$0xff]
    %v2376 = vld [vmem:[#allocation4 + $0x100] sm:$0xff]
    %v2377 = vld [vmem:[#allocation4 + $0x108] sm:$0xff]
    %v2378 = vld [vmem:[#allocation4 + $0x110] sm:$0xff]
    %v2379 = vld [vmem:[#allocation4 + $0x118] sm:$0xff]
    %v2380 = vld [vmem:[#allocation4 + $0x120] sm:$0xff]
    %v2381 = vld [vmem:[#allocation4 + $0x128] sm:$0xff]
    %v2382 = vld [vmem:[#allocation4 + $0x130] sm:$0xff]
    %v2383 = vld [vmem:[#allocation4 + $0x138] sm:$0xff]
    %v2384 = vld [vmem:[#allocation4 + $0x140] sm:$0xff]
    %v2385 = vld [vmem:[#allocation4 + $0x148] sm:$0xff]
    %v2386 = vld [vmem:[#allocation4 + $0x150] sm:$0xff]
    %v2387 = vld [vmem:[#allocation4 + $0x158] sm:$0xff]
    %v2388 = vld [vmem:[#allocation4 + $0x160] sm:$0xff]
    %v2389 = vld [vmem:[#allocation4 + $0x168] sm:$0xff]
    %v2390 = vld [vmem:[#allocation4 + $0x170] sm:$0xff]
    %v2391 = vld [vmem:[#allocation4 + $0x178] sm:$0xff]
    %v2392 = vld [vmem:[#allocation4 + $0x180] sm:$0xff]
    %v2393 = vld [vmem:[#allocation4 + $0x188] sm:$0xff]
    %v2394 = vld [vmem:[#allocation4 + $0x190] sm:$0xff]
    %v2395 = vld [vmem:[#allocation4 + $0x198] sm:$0xff]
    %v2396 = vld [vmem:[#allocation4 + $0x1a0] sm:$0xff]
    %v2397 = vld [vmem:[#allocation4 + $0x1a8] sm:$0xff]
    %v2398 = vld [vmem:[#allocation4 + $0x1b0] sm:$0xff]
    %v2399 = vld [vmem:[#allocation4 + $0x1b8] sm:$0xff]
    %v2400 = vld [vmem:[#allocation4 + $0x1c0] sm:$0xff]
    %v2401 = vld [vmem:[#allocation4 + $0x1c8] sm:$0xff]
    %v2402 = vld [vmem:[#allocation4 + $0x1d0] sm:$0xff]
    %v2403 = vld [vmem:[#allocation4 + $0x1d8] sm:$0xff]
    %v2404 = vld [vmem:[#allocation4 + $0x1e0] sm:$0xff]
    %v2405 = vld [vmem:[#allocation4 + $0x1e8] sm:$0xff]
    %v2406 = vld [vmem:[#allocation4 + $0x1f0] sm:$0xff]
    %v2407 = vld [vmem:[#allocation4 + $0x1f8] sm:$0xff]
    %v2408 = vld [vmem:[%s7] sm:$0xff]
    %v2409 = vld [vmem:[%s7 + $0x8] sm:$0xff]
    %v2410 = vld [vmem:[%s7 + $0x10] sm:$0xff]
    %v2411 = vld [vmem:[%s7 + $0x18] sm:$0xff]
    %v2412 = vld [vmem:[%s7 + $0x20] sm:$0xff]
    %v2413 = vld [vmem:[%s7 + $0x28] sm:$0xff]
    %v2414 = vld [vmem:[%s7 + $0x30] sm:$0xff]
    %v2415 = vld [vmem:[%s7 + $0x38] sm:$0xff]
    %v2416 = vld [vmem:[%s7 + $0x40] sm:$0xff]
    %v2417 = vld [vmem:[%s7 + $0x48] sm:$0xff]
    %v2418 = vld [vmem:[%s7 + $0x50] sm:$0xff]
    %v2419 = vld [vmem:[%s7 + $0x58] sm:$0xff]
    %v2420 = vld [vmem:[%s7 + $0x60] sm:$0xff]
    %v2421 = vld [vmem:[%s7 + $0x68] sm:$0xff]
    %v2422 = vld [vmem:[%s7 + $0x70] sm:$0xff]
    %v2423 = vld [vmem:[%s7 + $0x78] sm:$0xff]
    %v2424 = vld [vmem:[%s7 + $0x80] sm:$0xff]
    %v2425 = vld [vmem:[%s7 + $0x88] sm:$0xff]
    %v2426 = vld [vmem:[%s7 + $0x90] sm:$0xff]
    %v2427 = vld [vmem:[%s7 + $0x98] sm:$0xff]
    %v2428 = vld [vmem:[%s7 + $0xa0] sm:$0xff]
    %v2429 = vld [vmem:[%s7 + $0xa8] sm:$0xff]
    %v2430 = vld [vmem:[%s7 + $0xb0] sm:$0xff]
    %v2431 = vld [vmem:[%s7 + $0xb8] sm:$0xff]
    %v2432 = vld [vmem:[%s7 + $0xc0] sm:$0xff]
    %v2433 = vld [vmem:[%s7 + $0xc8] sm:$0xff]
    %v2434 = vld [vmem:[%s7 + $0xd0] sm:$0xff]
    %v2435 = vld [vmem:[%s7 + $0xd8] sm:$0xff]
    %v2436 = vld [vmem:[%s7 + $0xe0] sm:$0xff]
    %v2437 = vld [vmem:[%s7 + $0xe8] sm:$0xff]
    %v2438 = vld [vmem:[%s7 + $0xf0] sm:$0xff]
    %v2439 = vld [vmem:[%s7 + $0xf8] sm:$0xff]
    %v2440 = vld [vmem:[%s7 + $0x100] sm:$0xff]
    %v2441 = vld [vmem:[%s7 + $0x108] sm:$0xff]
    %v2442 = vld [vmem:[%s7 + $0x110] sm:$0xff]
    %v2443 = vld [vmem:[%s7 + $0x118] sm:$0xff]
    %v2444 = vld [vmem:[%s7 + $0x120] sm:$0xff]
    %v2445 = vld [vmem:[%s7 + $0x128] sm:$0xff]
    %v2446 = vld [vmem:[%s7 + $0x130] sm:$0xff]
    %v2447 = vld [vmem:[%s7 + $0x138] sm:$0xff]
    %v2448 = vld [vmem:[%s7 + $0x140] sm:$0xff]
    %v2449 = vld [vmem:[%s7 + $0x148] sm:$0xff]
    %v2450 = vld [vmem:[%s7 + $0x150] sm:$0xff]
    %v2451 = vld [vmem:[%s7 + $0x158] sm:$0xff]
    %v2452 = vld [vmem:[%s7 + $0x160] sm:$0xff]
    %v2453 = vld [vmem:[%s7 + $0x168] sm:$0xff]
    %v2454 = vld [vmem:[%s7 + $0x170] sm:$0xff]
    %v2455 = vld [vmem:[%s7 + $0x178] sm:$0xff]
    %v2456 = vld [vmem:[%s7 + $0x180] sm:$0xff]
    %v2457 = vld [vmem:[%s7 + $0x188] sm:$0xff]
    %v2458 = vld [vmem:[%s7 + $0x190] sm:$0xff]
    %v2459 = vld [vmem:[%s7 + $0x198] sm:$0xff]
    %v2460 = vld [vmem:[%s7 + $0x1a0] sm:$0xff]
    %v2461 = vld [vmem:[%s7 + $0x1a8] sm:$0xff]
    %v2463 = vsel %vm54, %v2347, 0
    %v2466 = vsel %vm54, %v2351, 0
    %v2469 = vsel %vm54, %v2355, 0
    %v2472 = vsel %vm54, %v2359, 0
    %v2475 = vsel %vm54, %v2363, 0
    %v2478 = vsel %vm54, %v2367, 0
    %v2481 = vsel %vm54, %v2371, 0
    %v2484 = vsel %vm54, %v2375, 0
    %v2487 = vsel %vm54, %v2379, 0
    %v2490 = vsel %vm54, %v2383, 0
    %v2493 = vsel %vm54, %v2387, 0
    %v2496 = vsel %vm54, %v2391, 0
    %v2499 = vsel %vm54, %v2395, 0
    %v2502 = vsel %vm54, %v2399, 0
    %v2505 = vsel %vm54, %v2403, 0
    %v2508 = vsel %vm54, %v2407, 0
    %2510 = vmatpush.msra.mxu0 %v2423
    %2511 = vmatpush.msra.mxu0 %v2422
    %2512 = vmatpush.msra.mxu0 %v2421
    %2513 = vmatpush.msra.mxu0 %v2420
    %2514 = vmatpush.msra.mxu0 %v2419
    %2515 = vmatpush.msra.mxu0 %v2418
    %2516 = vmatpush.msra.mxu0 %v2417
    %2517 = vmatpush.msra.mxu0 %v2416
    %2518 = vmatpush.msra.mxu0 %v2415
    %2519 = vmatpush.msra.mxu0 %v2414
    %2520 = vmatpush.msra.mxu0 %v2413
    %2521 = vmatpush.msra.mxu0 %v2412
    %2522 = vmatpush.msra.mxu0 %v2411
    %2523 = vmatpush.msra.mxu0 %v2410
    %2524 = vmatpush.msra.mxu0 %v2409
    %2525 = vmatpush.msra.mxu0 %v2408
    %2526 = vmatmul.f32.gmra.mxu0 %v2344
    %v2527 = vpop.f32.mrf.mxu0
    %v2528 = vadd.f32 0.0, %v2527
    %2529 = vmatmul.f32.gmra.mxu0 %v2348
    %v2530 = vpop.f32.mrf.mxu0
    %v2531 = vadd.f32 0.0, %v2530
    %2532 = vmatmul.f32.gmra.mxu0 %v2352
    %v2533 = vpop.f32.mrf.mxu0
    %v2534 = vadd.f32 0.0, %v2533
    %2535 = vmatmul.f32.gmra.mxu0 %v2356
    %v2536 = vpop.f32.mrf.mxu0
    %v2537 = vadd.f32 0.0, %v2536
    %2538 = vmatmul.f32.gmra.mxu0 %v2360
    %v2539 = vpop.f32.mrf.mxu0
    %v2540 = vadd.f32 0.0, %v2539
    %2541 = vmatmul.f32.gmra.mxu0 %v2364
    %v2542 = vpop.f32.mrf.mxu0
    %v2543 = vadd.f32 0.0, %v2542
    %2544 = vmatmul.f32.gmra.mxu0 %v2368
    %v2545 = vpop.f32.mrf.mxu0
    %v2546 = vadd.f32 0.0, %v2545
    %2547 = vmatmul.f32.gmra.mxu0 %v2372
    %v2548 = vpop.f32.mrf.mxu0
    %v2549 = vadd.f32 0.0, %v2548
    %2550 = vmatmul.f32.gmra.mxu0 %v2376
    %v2551 = vpop.f32.mrf.mxu0
    %v2552 = vadd.f32 0.0, %v2551
    %2553 = vmatmul.f32.gmra.mxu0 %v2380
    %v2554 = vpop.f32.mrf.mxu0
    %v2555 = vadd.f32 0.0, %v2554
    %2556 = vmatmul.f32.gmra.mxu0 %v2384
    %v2557 = vpop.f32.mrf.mxu0
    %v2558 = vadd.f32 0.0, %v2557
    %2559 = vmatmul.f32.gmra.mxu0 %v2388
    %v2560 = vpop.f32.mrf.mxu0
    %v2561 = vadd.f32 0.0, %v2560
    %2562 = vmatmul.f32.gmra.mxu0 %v2392
    %v2563 = vpop.f32.mrf.mxu0
    %v2564 = vadd.f32 0.0, %v2563
    %2565 = vmatmul.f32.gmra.mxu0 %v2396
    %v2566 = vpop.f32.mrf.mxu0
    %v2567 = vadd.f32 0.0, %v2566
    %2568 = vmatmul.f32.gmra.mxu0 %v2400
    %v2569 = vpop.f32.mrf.mxu0
    %v2570 = vadd.f32 0.0, %v2569
    %2571 = vmatmul.f32.gmra.mxu0 %v2404
    %v2572 = vpop.f32.mrf.mxu0
    %v2573 = vadd.f32 0.0, %v2572
    %2574 = vdwg.mxu0
    %2575 = vmatpush.msra.mxu0 %v2439
    %2576 = vmatpush.msra.mxu0 %v2438
    %2577 = vmatpush.msra.mxu0 %v2437
    %2578 = vmatpush.msra.mxu0 %v2436
    %2579 = vmatpush.msra.mxu0 %v2435
    %2580 = vmatpush.msra.mxu0 %v2434
    %2581 = vmatpush.msra.mxu0 %v2433
    %2582 = vmatpush.msra.mxu0 %v2432
    %2583 = vmatpush.msra.mxu0 %v2431
    %2584 = vmatpush.msra.mxu0 %v2430
    %2585 = vmatpush.msra.mxu0 %v2429
    %2586 = vmatpush.msra.mxu0 %v2428
    %2587 = vmatpush.msra.mxu0 %v2427
    %2588 = vmatpush.msra.mxu0 %v2426
    %2589 = vmatpush.msra.mxu0 %v2425
    %2590 = vmatpush.msra.mxu0 %v2424
    %2591 = vmatmul.f32.gmra.mxu0 %v2345
    %v2592 = vpop.f32.mrf.mxu0
    %v2593 = vadd.f32 %v2528, %v2592
    %2594 = vmatmul.f32.gmra.mxu0 %v2349
    %v2595 = vpop.f32.mrf.mxu0
    %v2596 = vadd.f32 %v2531, %v2595
    %2597 = vmatmul.f32.gmra.mxu0 %v2353
    %v2598 = vpop.f32.mrf.mxu0
    %v2599 = vadd.f32 %v2534, %v2598
    %2600 = vmatmul.f32.gmra.mxu0 %v2357
    %v2601 = vpop.f32.mrf.mxu0
    %v2602 = vadd.f32 %v2537, %v2601
    %2603 = vmatmul.f32.gmra.mxu0 %v2361
    %v2604 = vpop.f32.mrf.mxu0
    %v2605 = vadd.f32 %v2540, %v2604
    %2606 = vmatmul.f32.gmra.mxu0 %v2365
    %v2607 = vpop.f32.mrf.mxu0
    %v2608 = vadd.f32 %v2543, %v2607
    %2609 = vmatmul.f32.gmra.mxu0 %v2369
    %v2610 = vpop.f32.mrf.mxu0
    %v2611 = vadd.f32 %v2546, %v2610
    %2612 = vmatmul.f32.gmra.mxu0 %v2373
    %v2613 = vpop.f32.mrf.mxu0
    %v2614 = vadd.f32 %v2549, %v2613
    %2615 = vmatmul.f32.gmra.mxu0 %v2377
    %v2616 = vpop.f32.mrf.mxu0
    %v2617 = vadd.f32 %v2552, %v2616
    %2618 = vmatmul.f32.gmra.mxu0 %v2381
    %v2619 = vpop.f32.mrf.mxu0
    %v2620 = vadd.f32 %v2555, %v2619
    %2621 = vmatmul.f32.gmra.mxu0 %v2385
    %v2622 = vpop.f32.mrf.mxu0
    %v2623 = vadd.f32 %v2558, %v2622
    %2624 = vmatmul.f32.gmra.mxu0 %v2389
    %v2625 = vpop.f32.mrf.mxu0
    %v2626 = vadd.f32 %v2561, %v2625
    %2627 = vmatmul.f32.gmra.mxu0 %v2393
    %v2628 = vpop.f32.mrf.mxu0
    %v2629 = vadd.f32 %v2564, %v2628
    %2630 = vmatmul.f32.gmra.mxu0 %v2397
    %v2631 = vpop.f32.mrf.mxu0
    %v2632 = vadd.f32 %v2567, %v2631
    %2633 = vmatmul.f32.gmra.mxu0 %v2401
    %v2634 = vpop.f32.mrf.mxu0
    %v2635 = vadd.f32 %v2570, %v2634
    %2636 = vmatmul.f32.gmra.mxu0 %v2405
    %v2637 = vpop.f32.mrf.mxu0
    %v2638 = vadd.f32 %v2573, %v2637
    %2639 = vdwg.mxu0
    %2640 = vmatpush.msra.mxu0 %v2455
    %2641 = vmatpush.msra.mxu0 %v2454
    %2642 = vmatpush.msra.mxu0 %v2453
    %2643 = vmatpush.msra.mxu0 %v2452
    %2644 = vmatpush.msra.mxu0 %v2451
    %2645 = vmatpush.msra.mxu0 %v2450
    %2646 = vmatpush.msra.mxu0 %v2449
    %2647 = vmatpush.msra.mxu0 %v2448
    %2648 = vmatpush.msra.mxu0 %v2447
    %2649 = vmatpush.msra.mxu0 %v2446
    %2650 = vmatpush.msra.mxu0 %v2445
    %2651 = vmatpush.msra.mxu0 %v2444
    %2652 = vmatpush.msra.mxu0 %v2443
    %2653 = vmatpush.msra.mxu0 %v2442
    %2654 = vmatpush.msra.mxu0 %v2441
    %2655 = vmatpush.msra.mxu0 %v2440
    %2656 = vmatmul.f32.gmra.mxu0 %v2346
    %v2657 = vpop.f32.mrf.mxu0
    %v2658 = vadd.f32 %v2593, %v2657
    %2659 = vmatmul.f32.gmra.mxu0 %v2350
    %v2660 = vpop.f32.mrf.mxu0
    %v2661 = vadd.f32 %v2596, %v2660
    %2662 = vmatmul.f32.gmra.mxu0 %v2354
    %v2663 = vpop.f32.mrf.mxu0
    %v2664 = vadd.f32 %v2599, %v2663
    %2665 = vmatmul.f32.gmra.mxu0 %v2358
    %v2666 = vpop.f32.mrf.mxu0
    %v2667 = vadd.f32 %v2602, %v2666
    %2668 = vmatmul.f32.gmra.mxu0 %v2362
    %v2669 = vpop.f32.mrf.mxu0
    %v2670 = vadd.f32 %v2605, %v2669
    %2671 = vmatmul.f32.gmra.mxu0 %v2366
    %v2672 = vpop.f32.mrf.mxu0
    %v2673 = vadd.f32 %v2608, %v2672
    %2674 = vmatmul.f32.gmra.mxu0 %v2370
    %v2675 = vpop.f32.mrf.mxu0
    %v2676 = vadd.f32 %v2611, %v2675
    %2677 = vmatmul.f32.gmra.mxu0 %v2374
    %v2678 = vpop.f32.mrf.mxu0
    %v2679 = vadd.f32 %v2614, %v2678
    %2680 = vmatmul.f32.gmra.mxu0 %v2378
    %v2681 = vpop.f32.mrf.mxu0
    %v2682 = vadd.f32 %v2617, %v2681
    %2683 = vmatmul.f32.gmra.mxu0 %v2382
    %v2684 = vpop.f32.mrf.mxu0
    %v2685 = vadd.f32 %v2620, %v2684
    %2686 = vmatmul.f32.gmra.mxu0 %v2386
    %v2687 = vpop.f32.mrf.mxu0
    %v2688 = vadd.f32 %v2623, %v2687
    %2689 = vmatmul.f32.gmra.mxu0 %v2390
    %v2690 = vpop.f32.mrf.mxu0
    %v2691 = vadd.f32 %v2626, %v2690
    %2692 = vmatmul.f32.gmra.mxu0 %v2394
    %v2693 = vpop.f32.mrf.mxu0
    %v2694 = vadd.f32 %v2629, %v2693
    %2695 = vmatmul.f32.gmra.mxu0 %v2398
    %v2696 = vpop.f32.mrf.mxu0
    %v2697 = vadd.f32 %v2632, %v2696
    %2698 = vmatmul.f32.gmra.mxu0 %v2402
    %v2699 = vpop.f32.mrf.mxu0
    %v2700 = vadd.f32 %v2635, %v2699
    %2701 = vmatmul.f32.gmra.mxu0 %v2406
    %v2702 = vpop.f32.mrf.mxu0
    %v2703 = vadd.f32 %v2638, %v2702
    %2704 = vdwg.mxu0
    %2705 = vmatpush.msra.mxu0 0.0
    %2706 = vmatpush.msra.mxu0 0.0
    %2707 = vmatpush.msra.mxu0 0.0
    %2708 = vmatpush.msra.mxu0 0.0
    %2709 = vmatpush.msra.mxu0 0.0
    %2710 = vmatpush.msra.mxu0 0.0
    %2711 = vmatpush.msra.mxu0 0.0
    %2712 = vmatpush.msra.mxu0 0.0
    %2713 = vmatpush.msra.mxu0 0.0
    %2714 = vmatpush.msra.mxu0 0.0
    %2715 = vmatpush.msra.mxu0 %v2461
    %2716 = vmatpush.msra.mxu0 %v2460
    %2717 = vmatpush.msra.mxu0 %v2459
    %2718 = vmatpush.msra.mxu0 %v2458
    %2719 = vmatpush.msra.mxu0 %v2457
    %2720 = vmatpush.msra.mxu0 %v2456
    %2721 = vmatmul.f32.gmra.mxu0 %v2463
    %v2722 = vpop.f32.mrf.mxu0
    %v2723 = vadd.f32 %v2658, %v2722
    %2724 = vmatmul.f32.gmra.mxu0 %v2466
    %v2725 = vpop.f32.mrf.mxu0
    %v2726 = vadd.f32 %v2661, %v2725
    %2727 = vmatmul.f32.gmra.mxu0 %v2469
    %v2728 = vpop.f32.mrf.mxu0
    %v2729 = vadd.f32 %v2664, %v2728
    %2730 = vmatmul.f32.gmra.mxu0 %v2472
    %v2731 = vpop.f32.mrf.mxu0
    %v2732 = vadd.f32 %v2667, %v2731
    %2733 = vmatmul.f32.gmra.mxu0 %v2475
    %v2734 = vpop.f32.mrf.mxu0
    %v2735 = vadd.f32 %v2670, %v2734
    %2736 = vmatmul.f32.gmra.mxu0 %v2478
    %v2737 = vpop.f32.mrf.mxu0
    %v2738 = vadd.f32 %v2673, %v2737
    %2739 = vmatmul.f32.gmra.mxu0 %v2481
    %v2740 = vpop.f32.mrf.mxu0
    %v2741 = vadd.f32 %v2676, %v2740
    %2742 = vmatmul.f32.gmra.mxu0 %v2484
    %v2743 = vpop.f32.mrf.mxu0
    %v2744 = vadd.f32 %v2679, %v2743
    %2745 = vmatmul.f32.gmra.mxu0 %v2487
    %v2746 = vpop.f32.mrf.mxu0
    %v2747 = vadd.f32 %v2682, %v2746
    %2748 = vmatmul.f32.gmra.mxu0 %v2490
    %v2749 = vpop.f32.mrf.mxu0
    %v2750 = vadd.f32 %v2685, %v2749
    %2751 = vmatmul.f32.gmra.mxu0 %v2493
    %v2752 = vpop.f32.mrf.mxu0
    %v2753 = vadd.f32 %v2688, %v2752
    %2754 = vmatmul.f32.gmra.mxu0 %v2496
    %v2755 = vpop.f32.mrf.mxu0
    %v2756 = vadd.f32 %v2691, %v2755
    %2757 = vmatmul.f32.gmra.mxu0 %v2499
    %v2758 = vpop.f32.mrf.mxu0
    %v2759 = vadd.f32 %v2694, %v2758
    %2760 = vmatmul.f32.gmra.mxu0 %v2502
    %v2761 = vpop.f32.mrf.mxu0
    %v2762 = vadd.f32 %v2697, %v2761
    %2763 = vmatmul.f32.gmra.mxu0 %v2505
    %v2764 = vpop.f32.mrf.mxu0
    %v2765 = vadd.f32 %v2700, %v2764
    %2766 = vmatmul.f32.gmra.mxu0 %v2508
    %v2767 = vpop.f32.mrf.mxu0
    %v2768 = vadd.f32 %v2703, %v2767
    %2769 = vdwg.mxu0
    %v2770 = vld [vmem:[%s8] sm:$0x1]
    %v2772 = vperm.slane %v2770, 0
    %v2774 = vmul.f32 %v2723, %v2772
    %v2775 = vmul.f32 %v2726, %v2772
    %v2776 = vmul.f32 %v2729, %v2772
    %v2777 = vmul.f32 %v2732, %v2772
    %v2778 = vmul.f32 %v2735, %v2772
    %v2779 = vmul.f32 %v2738, %v2772
    %v2780 = vmul.f32 %v2741, %v2772
    %v2781 = vmul.f32 %v2744, %v2772
    %v2782 = vmul.f32 %v2747, %v2772
    %v2783 = vmul.f32 %v2750, %v2772
    %v2784 = vmul.f32 %v2753, %v2772
    %v2785 = vmul.f32 %v2756, %v2772
    %v2786 = vmul.f32 %v2759, %v2772
    %v2787 = vmul.f32 %v2762, %v2772
    %v2788 = vmul.f32 %v2765, %v2772
    %v2789 = vmul.f32 %v2768, %v2772
    %v2790 = vld [vmem:[%s9] sm:$0x1]
    %v2792 = vperm.slane %v2790, 0
    %v2794 = vadd.f32 %v2774, %v2792
    %v2795 = vadd.f32 %v2775, %v2792
    %v2796 = vadd.f32 %v2776, %v2792
    %v2797 = vadd.f32 %v2777, %v2792
    %v2798 = vadd.f32 %v2778, %v2792
    %v2799 = vadd.f32 %v2779, %v2792
    %v2800 = vadd.f32 %v2780, %v2792
    %v2801 = vadd.f32 %v2781, %v2792
    %v2802 = vadd.f32 %v2782, %v2792
    %v2803 = vadd.f32 %v2783, %v2792
    %v2804 = vadd.f32 %v2784, %v2792
    %v2805 = vadd.f32 %v2785, %v2792
    %v2806 = vadd.f32 %v2786, %v2792
    %v2807 = vadd.f32 %v2787, %v2792
    %v2808 = vadd.f32 %v2788, %v2792
    %v2809 = vadd.f32 %v2789, %v2792
    %v2810 = vmax.f32 %v2794, 0.0
    %v2811 = vmax.f32 %v2795, 0.0
    %v2812 = vmax.f32 %v2796, 0.0
    %v2813 = vmax.f32 %v2797, 0.0
    %v2814 = vmax.f32 %v2798, 0.0
    %v2815 = vmax.f32 %v2799, 0.0
    %v2816 = vmax.f32 %v2800, 0.0
    %v2817 = vmax.f32 %v2801, 0.0
    %v2818 = vmax.f32 %v2802, 0.0
    %v2819 = vmax.f32 %v2803, 0.0
    %v2820 = vmax.f32 %v2804, 0.0
    %v2821 = vmax.f32 %v2805, 0.0
    %v2822 = vmax.f32 %v2806, 0.0
    %v2823 = vmax.f32 %v2807, 0.0
    %v2824 = vmax.f32 %v2808, 0.0
    %v2825 = vmax.f32 %v2809, 0.0
    %2842 = vrot.lane.b32.xlu0 %v460, 96
    %v2843 = vpop.permute.xlu0 %2842
    %2844 = vrot.lane.b32.xlu0 %v461, 96
    %v2845 = vpop.permute.xlu0 %2844
    %2846 = vrot.lane.b32.xlu0 %v462, 96
    %v2847 = vpop.permute.xlu0 %2846
    %2848 = vrot.lane.b32.xlu0 %v463, 96
    %v2849 = vpop.permute.xlu0 %2848
    %2850 = vrot.lane.b32.xlu0 %v464, 96
    %v2851 = vpop.permute.xlu0 %2850
    %2852 = vrot.lane.b32.xlu0 %v465, 96
    %v2853 = vpop.permute.xlu0 %2852
    %2854 = vrot.lane.b32.xlu0 %v466, 96
    %v2855 = vpop.permute.xlu0 %2854
    %2856 = vrot.lane.b32.xlu0 %v467, 96
    %v2857 = vpop.permute.xlu0 %2856
    %2858 = vrot.lane.b32.xlu0 %v468, 96
    %v2859 = vpop.permute.xlu0 %2858
    %2860 = vrot.lane.b32.xlu0 %v469, 96
    %v2861 = vpop.permute.xlu0 %2860
    %2862 = vrot.lane.b32.xlu0 %v470, 96
    %v2863 = vpop.permute.xlu0 %2862
    %2864 = vrot.lane.b32.xlu0 %v471, 96
    %v2865 = vpop.permute.xlu0 %2864
    %2866 = vrot.lane.b32.xlu0 %v472, 96
    %v2867 = vpop.permute.xlu0 %2866
    %2868 = vrot.lane.b32.xlu0 %v473, 96
    %v2869 = vpop.permute.xlu0 %2868
    %2870 = vrot.lane.b32.xlu0 %v474, 96
    %v2871 = vpop.permute.xlu0 %2870
    %2872 = vrot.lane.b32.xlu0 %v475, 96
    %v2873 = vpop.permute.xlu0 %2872
    %2890 = vst.msk [vmem:[%s476 + $0x1] sm:$0xff] %vm477, %v2843
    %2891 = vst.msk [vmem:[%s476 + $0x11] sm:$0xff] %vm477, %v2845
    %2892 = vst.msk [vmem:[%s476 + $0x21] sm:$0xff] %vm477, %v2847
    %2893 = vst.msk [vmem:[%s476 + $0x31] sm:$0xff] %vm477, %v2849
    %2894 = vst.msk [vmem:[%s476 + $0x41] sm:$0xff] %vm477, %v2851
    %2895 = vst.msk [vmem:[%s476 + $0x51] sm:$0xff] %vm477, %v2853
    %2896 = vst.msk [vmem:[%s476 + $0x61] sm:$0xff] %vm477, %v2855
    %2897 = vst.msk [vmem:[%s476 + $0x71] sm:$0xff] %vm477, %v2857
    %2898 = vst.msk [vmem:[%s476 + $0xa1] sm:$0xff] %vm477, %v2859
    %2899 = vst.msk [vmem:[%s476 + $0xb1] sm:$0xff] %vm477, %v2861
    %2900 = vst.msk [vmem:[%s476 + $0xc1] sm:$0xff] %vm477, %v2863
    %2901 = vst.msk [vmem:[%s476 + $0xd1] sm:$0xff] %vm477, %v2865
    %2902 = vst.msk [vmem:[%s476 + $0xe1] sm:$0xff] %vm477, %v2867
    %2903 = vst.msk [vmem:[%s476 + $0xf1] sm:$0xff] %vm477, %v2869
    %2904 = vst.msk [vmem:[%s476 + $0x101] sm:$0xff] %vm477, %v2871
    %2905 = vst.msk [vmem:[%s476 + $0x111] sm:$0xff] %vm477, %v2873
    %v2906 = vld [vmem:[#allocation3] sm:$0xff]
    %v2907 = vld [vmem:[#allocation3 + $0x10] sm:$0xff]
    %v2908 = vld [vmem:[#allocation3 + $0x20] sm:$0xff]
    %v2909 = vld [vmem:[#allocation3 + $0x30] sm:$0xff]
    %v2910 = vld [vmem:[#allocation3 + $0x40] sm:$0xff]
    %v2911 = vld [vmem:[#allocation3 + $0x50] sm:$0xff]
    %v2912 = vld [vmem:[#allocation3 + $0x60] sm:$0xff]
    %v2913 = vld [vmem:[#allocation3 + $0x70] sm:$0xff]
    %v2914 = vld [vmem:[#allocation3 + $0xa0] sm:$0xff]
    %v2915 = vld [vmem:[#allocation3 + $0xb0] sm:$0xff]
    %v2916 = vld [vmem:[#allocation3 + $0xc0] sm:$0xff]
    %v2917 = vld [vmem:[#allocation3 + $0xd0] sm:$0xff]
    %v2918 = vld [vmem:[#allocation3 + $0xe0] sm:$0xff]
    %v2919 = vld [vmem:[#allocation3 + $0xf0] sm:$0xff]
    %v2920 = vld [vmem:[#allocation3 + $0x100] sm:$0xff]
    %v2921 = vld [vmem:[#allocation3 + $0x110] sm:$0xff]
    %2922 = vst.msk [vmem:[#allocation4] sm:$0xff] %vm477, %v2906
    %2923 = vst.msk [vmem:[#allocation4 + $0x20] sm:$0xff] %vm477, %v2907
    %2924 = vst.msk [vmem:[#allocation4 + $0x40] sm:$0xff] %vm477, %v2908
    %2925 = vst.msk [vmem:[#allocation4 + $0x60] sm:$0xff] %vm477, %v2909
    %2926 = vst.msk [vmem:[#allocation4 + $0x80] sm:$0xff] %vm477, %v2910
    %2927 = vst.msk [vmem:[#allocation4 + $0xa0] sm:$0xff] %vm477, %v2911
    %2928 = vst.msk [vmem:[#allocation4 + $0xc0] sm:$0xff] %vm477, %v2912
    %2929 = vst.msk [vmem:[#allocation4 + $0xe0] sm:$0xff] %vm477, %v2913
    %2930 = vst.msk [vmem:[#allocation4 + $0x100] sm:$0xff] %vm477, %v2914
    %2931 = vst.msk [vmem:[#allocation4 + $0x120] sm:$0xff] %vm477, %v2915
    %2932 = vst.msk [vmem:[#allocation4 + $0x140] sm:$0xff] %vm477, %v2916
    %2933 = vst.msk [vmem:[#allocation4 + $0x160] sm:$0xff] %vm477, %v2917
    %2934 = vst.msk [vmem:[#allocation4 + $0x180] sm:$0xff] %vm477, %v2918
    %2935 = vst.msk [vmem:[#allocation4 + $0x1a0] sm:$0xff] %vm477, %v2919
    %2936 = vst.msk [vmem:[#allocation4 + $0x1c0] sm:$0xff] %vm477, %v2920
    %2937 = vst.msk [vmem:[#allocation4 + $0x1e0] sm:$0xff] %vm477, %v2921
    %v2938 = vld [vmem:[#allocation3 + $0x1] sm:$0xff]
    %v2939 = vld [vmem:[#allocation3 + $0x11] sm:$0xff]
    %v2940 = vld [vmem:[#allocation3 + $0x21] sm:$0xff]
    %v2941 = vld [vmem:[#allocation3 + $0x31] sm:$0xff]
    %v2942 = vld [vmem:[#allocation3 + $0x41] sm:$0xff]
    %v2943 = vld [vmem:[#allocation3 + $0x51] sm:$0xff]
    %v2944 = vld [vmem:[#allocation3 + $0x61] sm:$0xff]
    %v2945 = vld [vmem:[#allocation3 + $0x71] sm:$0xff]
    %v2946 = vld [vmem:[#allocation3 + $0xa1] sm:$0xff]
    %v2947 = vld [vmem:[#allocation3 + $0xb1] sm:$0xff]
    %v2948 = vld [vmem:[#allocation3 + $0xc1] sm:$0xff]
    %v2949 = vld [vmem:[#allocation3 + $0xd1] sm:$0xff]
    %v2950 = vld [vmem:[#allocation3 + $0xe1] sm:$0xff]
    %v2951 = vld [vmem:[#allocation3 + $0xf1] sm:$0xff]
    %v2952 = vld [vmem:[#allocation3 + $0x101] sm:$0xff]
    %v2953 = vld [vmem:[#allocation3 + $0x111] sm:$0xff]
    %2970 = vrot.lane.b32.xlu0 %v2938, 32
    %v2971 = vpop.permute.xlu0 %2970
    %2972 = vrot.lane.b32.xlu0 %v2939, 32
    %v2973 = vpop.permute.xlu0 %2972
    %2974 = vrot.lane.b32.xlu0 %v2940, 32
    %v2975 = vpop.permute.xlu0 %2974
    %2976 = vrot.lane.b32.xlu0 %v2941, 32
    %v2977 = vpop.permute.xlu0 %2976
    %2978 = vrot.lane.b32.xlu0 %v2942, 32
    %v2979 = vpop.permute.xlu0 %2978
    %2980 = vrot.lane.b32.xlu0 %v2943, 32
    %v2981 = vpop.permute.xlu0 %2980
    %2982 = vrot.lane.b32.xlu0 %v2944, 32
    %v2983 = vpop.permute.xlu0 %2982
    %2984 = vrot.lane.b32.xlu0 %v2945, 32
    %v2985 = vpop.permute.xlu0 %2984
    %2986 = vrot.lane.b32.xlu0 %v2946, 32
    %v2987 = vpop.permute.xlu0 %2986
    %2988 = vrot.lane.b32.xlu0 %v2947, 32
    %v2989 = vpop.permute.xlu0 %2988
    %2990 = vrot.lane.b32.xlu0 %v2948, 32
    %v2991 = vpop.permute.xlu0 %2990
    %2992 = vrot.lane.b32.xlu0 %v2949, 32
    %v2993 = vpop.permute.xlu0 %2992
    %2994 = vrot.lane.b32.xlu0 %v2950, 32
    %v2995 = vpop.permute.xlu0 %2994
    %2996 = vrot.lane.b32.xlu0 %v2951, 32
    %v2997 = vpop.permute.xlu0 %2996
    %2998 = vrot.lane.b32.xlu0 %v2952, 32
    %v2999 = vpop.permute.xlu0 %2998
    %3000 = vrot.lane.b32.xlu0 %v2953, 32
    %v3001 = vpop.permute.xlu0 %3000
    %3018 = vst.msk [vmem:[#allocation4] sm:$0xff] %vm606, %v2971
    %3019 = vst.msk [vmem:[#allocation4 + $0x20] sm:$0xff] %vm606, %v2973
    %3020 = vst.msk [vmem:[#allocation4 + $0x40] sm:$0xff] %vm606, %v2975
    %3021 = vst.msk [vmem:[#allocation4 + $0x60] sm:$0xff] %vm606, %v2977
    %3022 = vst.msk [vmem:[#allocation4 + $0x80] sm:$0xff] %vm606, %v2979
    %3023 = vst.msk [vmem:[#allocation4 + $0xa0] sm:$0xff] %vm606, %v2981
    %3024 = vst.msk [vmem:[#allocation4 + $0xc0] sm:$0xff] %vm606, %v2983
    %3025 = vst.msk [vmem:[#allocation4 + $0xe0] sm:$0xff] %vm606, %v2985
    %3026 = vst.msk [vmem:[#allocation4 + $0x100] sm:$0xff] %vm606, %v2987
    %3027 = vst.msk [vmem:[#allocation4 + $0x120] sm:$0xff] %vm606, %v2989
    %3028 = vst.msk [vmem:[#allocation4 + $0x140] sm:$0xff] %vm606, %v2991
    %3029 = vst.msk [vmem:[#allocation4 + $0x160] sm:$0xff] %vm606, %v2993
    %3030 = vst.msk [vmem:[#allocation4 + $0x180] sm:$0xff] %vm606, %v2995
    %3031 = vst.msk [vmem:[#allocation4 + $0x1a0] sm:$0xff] %vm606, %v2997
    %3032 = vst.msk [vmem:[#allocation4 + $0x1c0] sm:$0xff] %vm606, %v2999
    %3033 = vst.msk [vmem:[#allocation4 + $0x1e0] sm:$0xff] %vm606, %v3001
    %v3034 = vld [vmem:[#allocation3 + $0x2] sm:$0xff]
    %v3035 = vld [vmem:[#allocation3 + $0x12] sm:$0xff]
    %v3036 = vld [vmem:[#allocation3 + $0x22] sm:$0xff]
    %v3037 = vld [vmem:[#allocation3 + $0x32] sm:$0xff]
    %v3038 = vld [vmem:[#allocation3 + $0x42] sm:$0xff]
    %v3039 = vld [vmem:[#allocation3 + $0x52] sm:$0xff]
    %v3040 = vld [vmem:[#allocation3 + $0x62] sm:$0xff]
    %v3041 = vld [vmem:[#allocation3 + $0x72] sm:$0xff]
    %v3042 = vld [vmem:[#allocation3 + $0xa2] sm:$0xff]
    %v3043 = vld [vmem:[#allocation3 + $0xb2] sm:$0xff]
    %v3044 = vld [vmem:[#allocation3 + $0xc2] sm:$0xff]
    %v3045 = vld [vmem:[#allocation3 + $0xd2] sm:$0xff]
    %v3046 = vld [vmem:[#allocation3 + $0xe2] sm:$0xff]
    %v3047 = vld [vmem:[#allocation3 + $0xf2] sm:$0xff]
    %v3048 = vld [vmem:[#allocation3 + $0x102] sm:$0xff]
    %v3049 = vld [vmem:[#allocation3 + $0x112] sm:$0xff]
    %3066 = vrot.lane.b32.xlu0 %v3034, 64
    %v3067 = vpop.permute.xlu0 %3066
    %3068 = vrot.lane.b32.xlu0 %v3035, 64
    %v3069 = vpop.permute.xlu0 %3068
    %3070 = vrot.lane.b32.xlu0 %v3036, 64
    %v3071 = vpop.permute.xlu0 %3070
    %3072 = vrot.lane.b32.xlu0 %v3037, 64
    %v3073 = vpop.permute.xlu0 %3072
    %3074 = vrot.lane.b32.xlu0 %v3038, 64
    %v3075 = vpop.permute.xlu0 %3074
    %3076 = vrot.lane.b32.xlu0 %v3039, 64
    %v3077 = vpop.permute.xlu0 %3076
    %3078 = vrot.lane.b32.xlu0 %v3040, 64
    %v3079 = vpop.permute.xlu0 %3078
    %3080 = vrot.lane.b32.xlu0 %v3041, 64
    %v3081 = vpop.permute.xlu0 %3080
    %3082 = vrot.lane.b32.xlu0 %v3042, 64
    %v3083 = vpop.permute.xlu0 %3082
    %3084 = vrot.lane.b32.xlu0 %v3043, 64
    %v3085 = vpop.permute.xlu0 %3084
    %3086 = vrot.lane.b32.xlu0 %v3044, 64
    %v3087 = vpop.permute.xlu0 %3086
    %3088 = vrot.lane.b32.xlu0 %v3045, 64
    %v3089 = vpop.permute.xlu0 %3088
    %3090 = vrot.lane.b32.xlu0 %v3046, 64
    %v3091 = vpop.permute.xlu0 %3090
    %3092 = vrot.lane.b32.xlu0 %v3047, 64
    %v3093 = vpop.permute.xlu0 %3092
    %3094 = vrot.lane.b32.xlu0 %v3048, 64
    %v3095 = vpop.permute.xlu0 %3094
    %3096 = vrot.lane.b32.xlu0 %v3049, 64
    %v3097 = vpop.permute.xlu0 %3096
    %3114 = vst.msk [vmem:[#allocation4] sm:$0xff] %vm703, %v3067
    %3115 = vst.msk [vmem:[#allocation4 + $0x20] sm:$0xff] %vm703, %v3069
    %3116 = vst.msk [vmem:[#allocation4 + $0x40] sm:$0xff] %vm703, %v3071
    %3117 = vst.msk [vmem:[#allocation4 + $0x60] sm:$0xff] %vm703, %v3073
    %3118 = vst.msk [vmem:[#allocation4 + $0x80] sm:$0xff] %vm703, %v3075
    %3119 = vst.msk [vmem:[#allocation4 + $0xa0] sm:$0xff] %vm703, %v3077
    %3120 = vst.msk [vmem:[#allocation4 + $0xc0] sm:$0xff] %vm703, %v3079
    %3121 = vst.msk [vmem:[#allocation4 + $0xe0] sm:$0xff] %vm703, %v3081
    %3122 = vst.msk [vmem:[#allocation4 + $0x100] sm:$0xff] %vm703, %v3083
    %3123 = vst.msk [vmem:[#allocation4 + $0x120] sm:$0xff] %vm703, %v3085
    %3124 = vst.msk [vmem:[#allocation4 + $0x140] sm:$0xff] %vm703, %v3087
    %3125 = vst.msk [vmem:[#allocation4 + $0x160] sm:$0xff] %vm703, %v3089
    %3126 = vst.msk [vmem:[#allocation4 + $0x180] sm:$0xff] %vm703, %v3091
    %3127 = vst.msk [vmem:[#allocation4 + $0x1a0] sm:$0xff] %vm703, %v3093
    %3128 = vst.msk [vmem:[#allocation4 + $0x1c0] sm:$0xff] %vm703, %v3095
    %3129 = vst.msk [vmem:[#allocation4 + $0x1e0] sm:$0xff] %vm703, %v3097
    %v3130 = vld [vmem:[%s476] sm:$0xff]
    %v3131 = vld [vmem:[%s476 + $0x10] sm:$0xff]
    %v3132 = vld [vmem:[%s476 + $0x20] sm:$0xff]
    %v3133 = vld [vmem:[%s476 + $0x30] sm:$0xff]
    %v3134 = vld [vmem:[%s476 + $0x40] sm:$0xff]
    %v3135 = vld [vmem:[%s476 + $0x50] sm:$0xff]
    %v3136 = vld [vmem:[%s476 + $0x60] sm:$0xff]
    %v3137 = vld [vmem:[%s476 + $0x70] sm:$0xff]
    %v3138 = vld [vmem:[%s476 + $0xa0] sm:$0xff]
    %v3139 = vld [vmem:[%s476 + $0xb0] sm:$0xff]
    %v3140 = vld [vmem:[%s476 + $0xc0] sm:$0xff]
    %v3141 = vld [vmem:[%s476 + $0xd0] sm:$0xff]
    %v3142 = vld [vmem:[%s476 + $0xe0] sm:$0xff]
    %v3143 = vld [vmem:[%s476 + $0xf0] sm:$0xff]
    %v3144 = vld [vmem:[%s476 + $0x100] sm:$0xff]
    %v3145 = vld [vmem:[%s476 + $0x110] sm:$0xff]
    %3162 = vrot.lane.b32.xlu0 %v3130, 96
    %v3163 = vpop.permute.xlu0 %3162
    %3164 = vrot.lane.b32.xlu0 %v3131, 96
    %v3165 = vpop.permute.xlu0 %3164
    %3166 = vrot.lane.b32.xlu0 %v3132, 96
    %v3167 = vpop.permute.xlu0 %3166
    %3168 = vrot.lane.b32.xlu0 %v3133, 96
    %v3169 = vpop.permute.xlu0 %3168
    %3170 = vrot.lane.b32.xlu0 %v3134, 96
    %v3171 = vpop.permute.xlu0 %3170
    %3172 = vrot.lane.b32.xlu0 %v3135, 96
    %v3173 = vpop.permute.xlu0 %3172
    %3174 = vrot.lane.b32.xlu0 %v3136, 96
    %v3175 = vpop.permute.xlu0 %3174
    %3176 = vrot.lane.b32.xlu0 %v3137, 96
    %v3177 = vpop.permute.xlu0 %3176
    %3178 = vrot.lane.b32.xlu0 %v3138, 96
    %v3179 = vpop.permute.xlu0 %3178
    %3180 = vrot.lane.b32.xlu0 %v3139, 96
    %v3181 = vpop.permute.xlu0 %3180
    %3182 = vrot.lane.b32.xlu0 %v3140, 96
    %v3183 = vpop.permute.xlu0 %3182
    %3184 = vrot.lane.b32.xlu0 %v3141, 96
    %v3185 = vpop.permute.xlu0 %3184
    %3186 = vrot.lane.b32.xlu0 %v3142, 96
    %v3187 = vpop.permute.xlu0 %3186
    %3188 = vrot.lane.b32.xlu0 %v3143, 96
    %v3189 = vpop.permute.xlu0 %3188
    %3190 = vrot.lane.b32.xlu0 %v3144, 96
    %v3191 = vpop.permute.xlu0 %3190
    %3192 = vrot.lane.b32.xlu0 %v3145, 96
    %v3193 = vpop.permute.xlu0 %3192
    %3210 = vst.msk [vmem:[#allocation4] sm:$0xff] %vm800, %v3163
    %3211 = vst.msk [vmem:[#allocation4 + $0x20] sm:$0xff] %vm800, %v3165
    %3212 = vst.msk [vmem:[#allocation4 + $0x40] sm:$0xff] %vm800, %v3167
    %3213 = vst.msk [vmem:[#allocation4 + $0x60] sm:$0xff] %vm800, %v3169
    %3214 = vst.msk [vmem:[#allocation4 + $0x80] sm:$0xff] %vm800, %v3171
    %3215 = vst.msk [vmem:[#allocation4 + $0xa0] sm:$0xff] %vm800, %v3173
    %3216 = vst.msk [vmem:[#allocation4 + $0xc0] sm:$0xff] %vm800, %v3175
    %3217 = vst.msk [vmem:[#allocation4 + $0xe0] sm:$0xff] %vm800, %v3177
    %3218 = vst.msk [vmem:[#allocation4 + $0x100] sm:$0xff] %vm800, %v3179
    %3219 = vst.msk [vmem:[#allocation4 + $0x120] sm:$0xff] %vm800, %v3181
    %3220 = vst.msk [vmem:[#allocation4 + $0x140] sm:$0xff] %vm800, %v3183
    %3221 = vst.msk [vmem:[#allocation4 + $0x160] sm:$0xff] %vm800, %v3185
    %3222 = vst.msk [vmem:[#allocation4 + $0x180] sm:$0xff] %vm800, %v3187
    %3223 = vst.msk [vmem:[#allocation4 + $0x1a0] sm:$0xff] %vm800, %v3189
    %3224 = vst.msk [vmem:[#allocation4 + $0x1c0] sm:$0xff] %vm800, %v3191
    %3225 = vst.msk [vmem:[#allocation4 + $0x1e0] sm:$0xff] %vm800, %v3193
    %v3226 = vld [vmem:[%s476 + $0x1] sm:$0xff]
    %v3227 = vld [vmem:[%s476 + $0x11] sm:$0xff]
    %v3228 = vld [vmem:[%s476 + $0x21] sm:$0xff]
    %v3229 = vld [vmem:[%s476 + $0x31] sm:$0xff]
    %v3230 = vld [vmem:[%s476 + $0x41] sm:$0xff]
    %v3231 = vld [vmem:[%s476 + $0x51] sm:$0xff]
    %v3232 = vld [vmem:[%s476 + $0x61] sm:$0xff]
    %v3233 = vld [vmem:[%s476 + $0x71] sm:$0xff]
    %v3234 = vld [vmem:[%s476 + $0xa1] sm:$0xff]
    %v3235 = vld [vmem:[%s476 + $0xb1] sm:$0xff]
    %v3236 = vld [vmem:[%s476 + $0xc1] sm:$0xff]
    %v3237 = vld [vmem:[%s476 + $0xd1] sm:$0xff]
    %v3238 = vld [vmem:[%s476 + $0xe1] sm:$0xff]
    %v3239 = vld [vmem:[%s476 + $0xf1] sm:$0xff]
    %v3240 = vld [vmem:[%s476 + $0x101] sm:$0xff]
    %v3241 = vld [vmem:[%s476 + $0x111] sm:$0xff]
    %3242 = vst.msk [vmem:[#allocation4 + $0x8] sm:$0xff] %vm477, %v3226
    %3243 = vst.msk [vmem:[#allocation4 + $0x28] sm:$0xff] %vm477, %v3227
    %3244 = vst.msk [vmem:[#allocation4 + $0x48] sm:$0xff] %vm477, %v3228
    %3245 = vst.msk [vmem:[#allocation4 + $0x68] sm:$0xff] %vm477, %v3229
    %3246 = vst.msk [vmem:[#allocation4 + $0x88] sm:$0xff] %vm477, %v3230
    %3247 = vst.msk [vmem:[#allocation4 + $0xa8] sm:$0xff] %vm477, %v3231
    %3248 = vst.msk [vmem:[#allocation4 + $0xc8] sm:$0xff] %vm477, %v3232
    %3249 = vst.msk [vmem:[#allocation4 + $0xe8] sm:$0xff] %vm477, %v3233
    %3250 = vst.msk [vmem:[#allocation4 + $0x108] sm:$0xff] %vm477, %v3234
    %3251 = vst.msk [vmem:[#allocation4 + $0x128] sm:$0xff] %vm477, %v3235
    %3252 = vst.msk [vmem:[#allocation4 + $0x148] sm:$0xff] %vm477, %v3236
    %3253 = vst.msk [vmem:[#allocation4 + $0x168] sm:$0xff] %vm477, %v3237
    %3254 = vst.msk [vmem:[#allocation4 + $0x188] sm:$0xff] %vm477, %v3238
    %3255 = vst.msk [vmem:[#allocation4 + $0x1a8] sm:$0xff] %vm477, %v3239
    %3256 = vst.msk [vmem:[#allocation4 + $0x1c8] sm:$0xff] %vm477, %v3240
    %3257 = vst.msk [vmem:[#allocation4 + $0x1e8] sm:$0xff] %vm477, %v3241
    %v3258 = vld [vmem:[%s476 + $0x2] sm:$0xff]
    %v3259 = vld [vmem:[%s476 + $0x12] sm:$0xff]
    %v3260 = vld [vmem:[%s476 + $0x22] sm:$0xff]
    %v3261 = vld [vmem:[%s476 + $0x32] sm:$0xff]
    %v3262 = vld [vmem:[%s476 + $0x42] sm:$0xff]
    %v3263 = vld [vmem:[%s476 + $0x52] sm:$0xff]
    %v3264 = vld [vmem:[%s476 + $0x62] sm:$0xff]
    %v3265 = vld [vmem:[%s476 + $0x72] sm:$0xff]
    %v3266 = vld [vmem:[%s476 + $0xa2] sm:$0xff]
    %v3267 = vld [vmem:[%s476 + $0xb2] sm:$0xff]
    %v3268 = vld [vmem:[%s476 + $0xc2] sm:$0xff]
    %v3269 = vld [vmem:[%s476 + $0xd2] sm:$0xff]
    %v3270 = vld [vmem:[%s476 + $0xe2] sm:$0xff]
    %v3271 = vld [vmem:[%s476 + $0xf2] sm:$0xff]
    %v3272 = vld [vmem:[%s476 + $0x102] sm:$0xff]
    %v3273 = vld [vmem:[%s476 + $0x112] sm:$0xff]
    %3290 = vrot.lane.b32.xlu0 %v3258, 32
    %v3291 = vpop.permute.xlu0 %3290
    %3292 = vrot.lane.b32.xlu0 %v3259, 32
    %v3293 = vpop.permute.xlu0 %3292
    %3294 = vrot.lane.b32.xlu0 %v3260, 32
    %v3295 = vpop.permute.xlu0 %3294
    %3296 = vrot.lane.b32.xlu0 %v3261, 32
    %v3297 = vpop.permute.xlu0 %3296
    %3298 = vrot.lane.b32.xlu0 %v3262, 32
    %v3299 = vpop.permute.xlu0 %3298
    %3300 = vrot.lane.b32.xlu0 %v3263, 32
    %v3301 = vpop.permute.xlu0 %3300
    %3302 = vrot.lane.b32.xlu0 %v3264, 32
    %v3303 = vpop.permute.xlu0 %3302
    %3304 = vrot.lane.b32.xlu0 %v3265, 32
    %v3305 = vpop.permute.xlu0 %3304
    %3306 = vrot.lane.b32.xlu0 %v3266, 32
    %v3307 = vpop.permute.xlu0 %3306
    %3308 = vrot.lane.b32.xlu0 %v3267, 32
    %v3309 = vpop.permute.xlu0 %3308
    %3310 = vrot.lane.b32.xlu0 %v3268, 32
    %v3311 = vpop.permute.xlu0 %3310
    %3312 = vrot.lane.b32.xlu0 %v3269, 32
    %v3313 = vpop.permute.xlu0 %3312
    %3314 = vrot.lane.b32.xlu0 %v3270, 32
    %v3315 = vpop.permute.xlu0 %3314
    %3316 = vrot.lane.b32.xlu0 %v3271, 32
    %v3317 = vpop.permute.xlu0 %3316
    %3318 = vrot.lane.b32.xlu0 %v3272, 32
    %v3319 = vpop.permute.xlu0 %3318
    %3320 = vrot.lane.b32.xlu0 %v3273, 32
    %v3321 = vpop.permute.xlu0 %3320
    %3338 = vst.msk [vmem:[#allocation4 + $0x8] sm:$0xff] %vm606, %v3291
    %3339 = vst.msk [vmem:[#allocation4 + $0x28] sm:$0xff] %vm606, %v3293
    %3340 = vst.msk [vmem:[#allocation4 + $0x48] sm:$0xff] %vm606, %v3295
    %3341 = vst.msk [vmem:[#allocation4 + $0x68] sm:$0xff] %vm606, %v3297
    %3342 = vst.msk [vmem:[#allocation4 + $0x88] sm:$0xff] %vm606, %v3299
    %3343 = vst.msk [vmem:[#allocation4 + $0xa8] sm:$0xff] %vm606, %v3301
    %3344 = vst.msk [vmem:[#allocation4 + $0xc8] sm:$0xff] %vm606, %v3303
    %3345 = vst.msk [vmem:[#allocation4 + $0xe8] sm:$0xff] %vm606, %v3305
    %3346 = vst.msk [vmem:[#allocation4 + $0x108] sm:$0xff] %vm606, %v3307
    %3347 = vst.msk [vmem:[#allocation4 + $0x128] sm:$0xff] %vm606, %v3309
    %3348 = vst.msk [vmem:[#allocation4 + $0x148] sm:$0xff] %vm606, %v3311
    %3349 = vst.msk [vmem:[#allocation4 + $0x168] sm:$0xff] %vm606, %v3313
    %3350 = vst.msk [vmem:[#allocation4 + $0x188] sm:$0xff] %vm606, %v3315
    %3351 = vst.msk [vmem:[#allocation4 + $0x1a8] sm:$0xff] %vm606, %v3317
    %3352 = vst.msk [vmem:[#allocation4 + $0x1c8] sm:$0xff] %vm606, %v3319
    %3353 = vst.msk [vmem:[#allocation4 + $0x1e8] sm:$0xff] %vm606, %v3321
    %v3354 = vld [vmem:[%s945] sm:$0xff]
    %v3355 = vld [vmem:[%s945 + $0x10] sm:$0xff]
    %v3356 = vld [vmem:[%s945 + $0x20] sm:$0xff]
    %v3357 = vld [vmem:[%s945 + $0x30] sm:$0xff]
    %v3358 = vld [vmem:[%s945 + $0x40] sm:$0xff]
    %v3359 = vld [vmem:[%s945 + $0x50] sm:$0xff]
    %v3360 = vld [vmem:[%s945 + $0x60] sm:$0xff]
    %v3361 = vld [vmem:[%s945 + $0x70] sm:$0xff]
    %v3362 = vld [vmem:[%s945 + $0xa0] sm:$0xff]
    %v3363 = vld [vmem:[%s945 + $0xb0] sm:$0xff]
    %v3364 = vld [vmem:[%s945 + $0xc0] sm:$0xff]
    %v3365 = vld [vmem:[%s945 + $0xd0] sm:$0xff]
    %v3366 = vld [vmem:[%s945 + $0xe0] sm:$0xff]
    %v3367 = vld [vmem:[%s945 + $0xf0] sm:$0xff]
    %v3368 = vld [vmem:[%s945 + $0x100] sm:$0xff]
    %v3369 = vld [vmem:[%s945 + $0x110] sm:$0xff]
    %3386 = vrot.lane.b32.xlu0 %v3354, 64
    %v3387 = vpop.permute.xlu0 %3386
    %3388 = vrot.lane.b32.xlu0 %v3355, 64
    %v3389 = vpop.permute.xlu0 %3388
    %3390 = vrot.lane.b32.xlu0 %v3356, 64
    %v3391 = vpop.permute.xlu0 %3390
    %3392 = vrot.lane.b32.xlu0 %v3357, 64
    %v3393 = vpop.permute.xlu0 %3392
    %3394 = vrot.lane.b32.xlu0 %v3358, 64
    %v3395 = vpop.permute.xlu0 %3394
    %3396 = vrot.lane.b32.xlu0 %v3359, 64
    %v3397 = vpop.permute.xlu0 %3396
    %3398 = vrot.lane.b32.xlu0 %v3360, 64
    %v3399 = vpop.permute.xlu0 %3398
    %3400 = vrot.lane.b32.xlu0 %v3361, 64
    %v3401 = vpop.permute.xlu0 %3400
    %3402 = vrot.lane.b32.xlu0 %v3362, 64
    %v3403 = vpop.permute.xlu0 %3402
    %3404 = vrot.lane.b32.xlu0 %v3363, 64
    %v3405 = vpop.permute.xlu0 %3404
    %3406 = vrot.lane.b32.xlu0 %v3364, 64
    %v3407 = vpop.permute.xlu0 %3406
    %3408 = vrot.lane.b32.xlu0 %v3365, 64
    %v3409 = vpop.permute.xlu0 %3408
    %3410 = vrot.lane.b32.xlu0 %v3366, 64
    %v3411 = vpop.permute.xlu0 %3410
    %3412 = vrot.lane.b32.xlu0 %v3367, 64
    %v3413 = vpop.permute.xlu0 %3412
    %3414 = vrot.lane.b32.xlu0 %v3368, 64
    %v3415 = vpop.permute.xlu0 %3414
    %3416 = vrot.lane.b32.xlu0 %v3369, 64
    %v3417 = vpop.permute.xlu0 %3416
    %3434 = vst.msk [vmem:[#allocation4 + $0x8] sm:$0xff] %vm703, %v3387
    %3435 = vst.msk [vmem:[#allocation4 + $0x28] sm:$0xff] %vm703, %v3389
    %3436 = vst.msk [vmem:[#allocation4 + $0x48] sm:$0xff] %vm703, %v3391
    %3437 = vst.msk [vmem:[#allocation4 + $0x68] sm:$0xff] %vm703, %v3393
    %3438 = vst.msk [vmem:[#allocation4 + $0x88] sm:$0xff] %vm703, %v3395
    %3439 = vst.msk [vmem:[#allocation4 + $0xa8] sm:$0xff] %vm703, %v3397
    %3440 = vst.msk [vmem:[#allocation4 + $0xc8] sm:$0xff] %vm703, %v3399
    %3441 = vst.msk [vmem:[#allocation4 + $0xe8] sm:$0xff] %vm703, %v3401
    %3442 = vst.msk [vmem:[#allocation4 + $0x108] sm:$0xff] %vm703, %v3403
    %3443 = vst.msk [vmem:[#allocation4 + $0x128] sm:$0xff] %vm703, %v3405
    %3444 = vst.msk [vmem:[#allocation4 + $0x148] sm:$0xff] %vm703, %v3407
    %3445 = vst.msk [vmem:[#allocation4 + $0x168] sm:$0xff] %vm703, %v3409
    %3446 = vst.msk [vmem:[#allocation4 + $0x188] sm:$0xff] %vm703, %v3411
    %3447 = vst.msk [vmem:[#allocation4 + $0x1a8] sm:$0xff] %vm703, %v3413
    %3448 = vst.msk [vmem:[#allocation4 + $0x1c8] sm:$0xff] %vm703, %v3415
    %3449 = vst.msk [vmem:[#allocation4 + $0x1e8] sm:$0xff] %vm703, %v3417
    %v3450 = vld [vmem:[%s945 + $0x1] sm:$0xff]
    %v3451 = vld [vmem:[%s945 + $0x11] sm:$0xff]
    %v3452 = vld [vmem:[%s945 + $0x21] sm:$0xff]
    %v3453 = vld [vmem:[%s945 + $0x31] sm:$0xff]
    %v3454 = vld [vmem:[%s945 + $0x41] sm:$0xff]
    %v3455 = vld [vmem:[%s945 + $0x51] sm:$0xff]
    %v3456 = vld [vmem:[%s945 + $0x61] sm:$0xff]
    %v3457 = vld [vmem:[%s945 + $0x71] sm:$0xff]
    %v3458 = vld [vmem:[%s945 + $0xa1] sm:$0xff]
    %v3459 = vld [vmem:[%s945 + $0xb1] sm:$0xff]
    %v3460 = vld [vmem:[%s945 + $0xc1] sm:$0xff]
    %v3461 = vld [vmem:[%s945 + $0xd1] sm:$0xff]
    %v3462 = vld [vmem:[%s945 + $0xe1] sm:$0xff]
    %v3463 = vld [vmem:[%s945 + $0xf1] sm:$0xff]
    %v3464 = vld [vmem:[%s945 + $0x101] sm:$0xff]
    %v3465 = vld [vmem:[%s945 + $0x111] sm:$0xff]
    %3482 = vrot.lane.b32.xlu0 %v3450, 96
    %v3483 = vpop.permute.xlu0 %3482
    %3484 = vrot.lane.b32.xlu0 %v3451, 96
    %v3485 = vpop.permute.xlu0 %3484
    %3486 = vrot.lane.b32.xlu0 %v3452, 96
    %v3487 = vpop.permute.xlu0 %3486
    %3488 = vrot.lane.b32.xlu0 %v3453, 96
    %v3489 = vpop.permute.xlu0 %3488
    %3490 = vrot.lane.b32.xlu0 %v3454, 96
    %v3491 = vpop.permute.xlu0 %3490
    %3492 = vrot.lane.b32.xlu0 %v3455, 96
    %v3493 = vpop.permute.xlu0 %3492
    %3494 = vrot.lane.b32.xlu0 %v3456, 96
    %v3495 = vpop.permute.xlu0 %3494
    %3496 = vrot.lane.b32.xlu0 %v3457, 96
    %v3497 = vpop.permute.xlu0 %3496
    %3498 = vrot.lane.b32.xlu0 %v3458, 96
    %v3499 = vpop.permute.xlu0 %3498
    %3500 = vrot.lane.b32.xlu0 %v3459, 96
    %v3501 = vpop.permute.xlu0 %3500
    %3502 = vrot.lane.b32.xlu0 %v3460, 96
    %v3503 = vpop.permute.xlu0 %3502
    %3504 = vrot.lane.b32.xlu0 %v3461, 96
    %v3505 = vpop.permute.xlu0 %3504
    %3506 = vrot.lane.b32.xlu0 %v3462, 96
    %v3507 = vpop.permute.xlu0 %3506
    %3508 = vrot.lane.b32.xlu0 %v3463, 96
    %v3509 = vpop.permute.xlu0 %3508
    %3510 = vrot.lane.b32.xlu0 %v3464, 96
    %v3511 = vpop.permute.xlu0 %3510
    %3512 = vrot.lane.b32.xlu0 %v3465, 96
    %v3513 = vpop.permute.xlu0 %3512
    %3530 = vst.msk [vmem:[#allocation4 + $0x8] sm:$0xff] %vm800, %v3483
    %3531 = vst.msk [vmem:[#allocation4 + $0x28] sm:$0xff] %vm800, %v3485
    %3532 = vst.msk [vmem:[#allocation4 + $0x48] sm:$0xff] %vm800, %v3487
    %3533 = vst.msk [vmem:[#allocation4 + $0x68] sm:$0xff] %vm800, %v3489
    %3534 = vst.msk [vmem:[#allocation4 + $0x88] sm:$0xff] %vm800, %v3491
    %3535 = vst.msk [vmem:[#allocation4 + $0xa8] sm:$0xff] %vm800, %v3493
    %3536 = vst.msk [vmem:[#allocation4 + $0xc8] sm:$0xff] %vm800, %v3495
    %3537 = vst.msk [vmem:[#allocation4 + $0xe8] sm:$0xff] %vm800, %v3497
    %3538 = vst.msk [vmem:[#allocation4 + $0x108] sm:$0xff] %vm800, %v3499
    %3539 = vst.msk [vmem:[#allocation4 + $0x128] sm:$0xff] %vm800, %v3501
    %3540 = vst.msk [vmem:[#allocation4 + $0x148] sm:$0xff] %vm800, %v3503
    %3541 = vst.msk [vmem:[#allocation4 + $0x168] sm:$0xff] %vm800, %v3505
    %3542 = vst.msk [vmem:[#allocation4 + $0x188] sm:$0xff] %vm800, %v3507
    %3543 = vst.msk [vmem:[#allocation4 + $0x1a8] sm:$0xff] %vm800, %v3509
    %3544 = vst.msk [vmem:[#allocation4 + $0x1c8] sm:$0xff] %vm800, %v3511
    %3545 = vst.msk [vmem:[#allocation4 + $0x1e8] sm:$0xff] %vm800, %v3513
    %v3546 = vld [vmem:[%s945 + $0x2] sm:$0xff]
    %v3547 = vld [vmem:[%s945 + $0x12] sm:$0xff]
    %v3548 = vld [vmem:[%s945 + $0x22] sm:$0xff]
    %v3549 = vld [vmem:[%s945 + $0x32] sm:$0xff]
    %v3550 = vld [vmem:[%s945 + $0x42] sm:$0xff]
    %v3551 = vld [vmem:[%s945 + $0x52] sm:$0xff]
    %v3552 = vld [vmem:[%s945 + $0x62] sm:$0xff]
    %v3553 = vld [vmem:[%s945 + $0x72] sm:$0xff]
    %v3554 = vld [vmem:[%s945 + $0xa2] sm:$0xff]
    %v3555 = vld [vmem:[%s945 + $0xb2] sm:$0xff]
    %v3556 = vld [vmem:[%s945 + $0xc2] sm:$0xff]
    %v3557 = vld [vmem:[%s945 + $0xd2] sm:$0xff]
    %v3558 = vld [vmem:[%s945 + $0xe2] sm:$0xff]
    %v3559 = vld [vmem:[%s945 + $0xf2] sm:$0xff]
    %v3560 = vld [vmem:[%s945 + $0x102] sm:$0xff]
    %v3561 = vld [vmem:[%s945 + $0x112] sm:$0xff]
    %3562 = vst.msk [vmem:[#allocation4 + $0x10] sm:$0xff] %vm477, %v3546
    %3563 = vst.msk [vmem:[#allocation4 + $0x30] sm:$0xff] %vm477, %v3547
    %3564 = vst.msk [vmem:[#allocation4 + $0x50] sm:$0xff] %vm477, %v3548
    %3565 = vst.msk [vmem:[#allocation4 + $0x70] sm:$0xff] %vm477, %v3549
    %3566 = vst.msk [vmem:[#allocation4 + $0x90] sm:$0xff] %vm477, %v3550
    %3567 = vst.msk [vmem:[#allocation4 + $0xb0] sm:$0xff] %vm477, %v3551
    %3568 = vst.msk [vmem:[#allocation4 + $0xd0] sm:$0xff] %vm477, %v3552
    %3569 = vst.msk [vmem:[#allocation4 + $0xf0] sm:$0xff] %vm477, %v3553
    %3570 = vst.msk [vmem:[#allocation4 + $0x110] sm:$0xff] %vm477, %v3554
    %3571 = vst.msk [vmem:[#allocation4 + $0x130] sm:$0xff] %vm477, %v3555
    %3572 = vst.msk [vmem:[#allocation4 + $0x150] sm:$0xff] %vm477, %v3556
    %3573 = vst.msk [vmem:[#allocation4 + $0x170] sm:$0xff] %vm477, %v3557
    %3574 = vst.msk [vmem:[#allocation4 + $0x190] sm:$0xff] %vm477, %v3558
    %3575 = vst.msk [vmem:[#allocation4 + $0x1b0] sm:$0xff] %vm477, %v3559
    %3576 = vst.msk [vmem:[#allocation4 + $0x1d0] sm:$0xff] %vm477, %v3560
    %3577 = vst.msk [vmem:[#allocation4 + $0x1f0] sm:$0xff] %vm477, %v3561
    %v3578 = vld [vmem:[#allocation4] sm:$0xff]
    %v3579 = vld [vmem:[#allocation4 + $0x8] sm:$0xff]
    %v3580 = vld [vmem:[#allocation4 + $0x10] sm:$0xff]
    %v3581 = vld [vmem:[#allocation4 + $0x20] sm:$0xff]
    %v3582 = vld [vmem:[#allocation4 + $0x28] sm:$0xff]
    %v3583 = vld [vmem:[#allocation4 + $0x30] sm:$0xff]
    %v3584 = vld [vmem:[#allocation4 + $0x40] sm:$0xff]
    %v3585 = vld [vmem:[#allocation4 + $0x48] sm:$0xff]
    %v3586 = vld [vmem:[#allocation4 + $0x50] sm:$0xff]
    %v3587 = vld [vmem:[#allocation4 + $0x60] sm:$0xff]
    %v3588 = vld [vmem:[#allocation4 + $0x68] sm:$0xff]
    %v3589 = vld [vmem:[#allocation4 + $0x70] sm:$0xff]
    %v3590 = vld [vmem:[#allocation4 + $0x80] sm:$0xff]
    %v3591 = vld [vmem:[#allocation4 + $0x88] sm:$0xff]
    %v3592 = vld [vmem:[#allocation4 + $0x90] sm:$0xff]
    %v3593 = vld [vmem:[#allocation4 + $0xa0] sm:$0xff]
    %v3594 = vld [vmem:[#allocation4 + $0xa8] sm:$0xff]
    %v3595 = vld [vmem:[#allocation4 + $0xb0] sm:$0xff]
    %v3596 = vld [vmem:[#allocation4 + $0xc0] sm:$0xff]
    %v3597 = vld [vmem:[#allocation4 + $0xc8] sm:$0xff]
    %v3598 = vld [vmem:[#allocation4 + $0xd0] sm:$0xff]
    %v3599 = vld [vmem:[#allocation4 + $0xe0] sm:$0xff]
    %v3600 = vld [vmem:[#allocation4 + $0xe8] sm:$0xff]
    %v3601 = vld [vmem:[#allocation4 + $0xf0] sm:$0xff]
    %v3602 = vld [vmem:[#allocation4 + $0x100] sm:$0xff]
    %v3603 = vld [vmem:[#allocation4 + $0x108] sm:$0xff]
    %v3604 = vld [vmem:[#allocation4 + $0x110] sm:$0xff]
    %v3605 = vld [vmem:[#allocation4 + $0x120] sm:$0xff]
    %v3606 = vld [vmem:[#allocation4 + $0x128] sm:$0xff]
    %v3607 = vld [vmem:[#allocation4 + $0x130] sm:$0xff]
    %v3608 = vld [vmem:[#allocation4 + $0x140] sm:$0xff]
    %v3609 = vld [vmem:[#allocation4 + $0x148] sm:$0xff]
    %v3610 = vld [vmem:[#allocation4 + $0x150] sm:$0xff]
    %v3611 = vld [vmem:[#allocation4 + $0x160] sm:$0xff]
    %v3612 = vld [vmem:[#allocation4 + $0x168] sm:$0xff]
    %v3613 = vld [vmem:[#allocation4 + $0x170] sm:$0xff]
    %v3614 = vld [vmem:[#allocation4 + $0x180] sm:$0xff]
    %v3615 = vld [vmem:[#allocation4 + $0x188] sm:$0xff]
    %v3616 = vld [vmem:[#allocation4 + $0x190] sm:$0xff]
    %v3617 = vld [vmem:[#allocation4 + $0x1a0] sm:$0xff]
    %v3618 = vld [vmem:[#allocation4 + $0x1a8] sm:$0xff]
    %v3619 = vld [vmem:[#allocation4 + $0x1b0] sm:$0xff]
    %v3620 = vld [vmem:[#allocation4 + $0x1c0] sm:$0xff]
    %v3621 = vld [vmem:[#allocation4 + $0x1c8] sm:$0xff]
    %v3622 = vld [vmem:[#allocation4 + $0x1d0] sm:$0xff]
    %v3623 = vld [vmem:[#allocation4 + $0x1e0] sm:$0xff]
    %v3624 = vld [vmem:[#allocation4 + $0x1e8] sm:$0xff]
    %v3625 = vld [vmem:[#allocation4 + $0x1f0] sm:$0xff]
    %v3626 = vld [vmem:[%s10] sm:$0xff]
    %v3627 = vld [vmem:[%s10 + $0x8] sm:$0xff]
    %v3628 = vld [vmem:[%s10 + $0x10] sm:$0xff]
    %v3629 = vld [vmem:[%s10 + $0x18] sm:$0xff]
    %v3630 = vld [vmem:[%s10 + $0x20] sm:$0xff]
    %v3631 = vld [vmem:[%s10 + $0x28] sm:$0xff]
    %v3632 = vld [vmem:[%s10 + $0x30] sm:$0xff]
    %v3633 = vld [vmem:[%s10 + $0x38] sm:$0xff]
    %v3634 = vld [vmem:[%s10 + $0x40] sm:$0xff]
    %v3635 = vld [vmem:[%s10 + $0x48] sm:$0xff]
    %v3636 = vld [vmem:[%s10 + $0x50] sm:$0xff]
    %v3637 = vld [vmem:[%s10 + $0x58] sm:$0xff]
    %v3638 = vld [vmem:[%s10 + $0x60] sm:$0xff]
    %v3639 = vld [vmem:[%s10 + $0x68] sm:$0xff]
    %v3640 = vld [vmem:[%s10 + $0x70] sm:$0xff]
    %v3641 = vld [vmem:[%s10 + $0x78] sm:$0xff]
    %v3642 = vld [vmem:[%s10 + $0x80] sm:$0xff]
    %v3643 = vld [vmem:[%s10 + $0x88] sm:$0xff]
    %v3644 = vld [vmem:[%s10 + $0x90] sm:$0xff]
    %v3645 = vld [vmem:[%s10 + $0x98] sm:$0xff]
    %v3646 = vld [vmem:[%s10 + $0xa0] sm:$0xff]
    %v3647 = vld [vmem:[%s10 + $0xa8] sm:$0xff]
    %v3648 = vld [vmem:[%s10 + $0xb0] sm:$0xff]
    %v3649 = vld [vmem:[%s10 + $0xb8] sm:$0xff]
    %v3650 = vld [vmem:[%s10 + $0xc0] sm:$0xff]
    %v3651 = vld [vmem:[%s10 + $0xc8] sm:$0xff]
    %v3652 = vld [vmem:[%s10 + $0xd0] sm:$0xff]
    %v3653 = vld [vmem:[%s10 + $0xd8] sm:$0xff]
    %v3654 = vld [vmem:[%s10 + $0xe0] sm:$0xff]
    %v3655 = vld [vmem:[%s10 + $0xe8] sm:$0xff]
    %v3656 = vld [vmem:[%s10 + $0xf0] sm:$0xff]
    %v3657 = vld [vmem:[%s10 + $0xf8] sm:$0xff]
    %v3658 = vld [vmem:[%s10 + $0x100] sm:$0xff]
    %v3659 = vld [vmem:[%s10 + $0x108] sm:$0xff]
    %v3660 = vld [vmem:[%s10 + $0x110] sm:$0xff]
    %v3661 = vld [vmem:[%s10 + $0x118] sm:$0xff]
    %v3663 = vsel %vm477, %v3580, 0
    %v3666 = vsel %vm477, %v3583, 0
    %v3669 = vsel %vm477, %v3586, 0
    %v3672 = vsel %vm477, %v3589, 0
    %v3675 = vsel %vm477, %v3592, 0
    %v3678 = vsel %vm477, %v3595, 0
    %v3681 = vsel %vm477, %v3598, 0
    %v3684 = vsel %vm477, %v3601, 0
    %v3687 = vsel %vm477, %v3604, 0
    %v3690 = vsel %vm477, %v3607, 0
    %v3693 = vsel %vm477, %v3610, 0
    %v3696 = vsel %vm477, %v3613, 0
    %v3699 = vsel %vm477, %v3616, 0
    %v3702 = vsel %vm477, %v3619, 0
    %v3705 = vsel %vm477, %v3622, 0
    %v3708 = vsel %vm477, %v3625, 0
    %3710 = vmatpush.msra.mxu0 %v3641
    %3711 = vmatpush.msra.mxu0 %v3640
    %3712 = vmatpush.msra.mxu0 %v3639
    %3713 = vmatpush.msra.mxu0 %v3638
    %3714 = vmatpush.msra.mxu0 %v3637
    %3715 = vmatpush.msra.mxu0 %v3636
    %3716 = vmatpush.msra.mxu0 %v3635
    %3717 = vmatpush.msra.mxu0 %v3634
    %3718 = vmatpush.msra.mxu0 %v3633
    %3719 = vmatpush.msra.mxu0 %v3632
    %3720 = vmatpush.msra.mxu0 %v3631
    %3721 = vmatpush.msra.mxu0 %v3630
    %3722 = vmatpush.msra.mxu0 %v3629
    %3723 = vmatpush.msra.mxu0 %v3628
    %3724 = vmatpush.msra.mxu0 %v3627
    %3725 = vmatpush.msra.mxu0 %v3626
    %3726 = vmatmul.f32.gmra.mxu0 %v3578
    %v3727 = vpop.f32.mrf.mxu0
    %v3728 = vadd.f32 0.0, %v3727
    %3729 = vmatmul.f32.gmra.mxu0 %v3581
    %v3730 = vpop.f32.mrf.mxu0
    %v3731 = vadd.f32 0.0, %v3730
    %3732 = vmatmul.f32.gmra.mxu0 %v3584
    %v3733 = vpop.f32.mrf.mxu0
    %v3734 = vadd.f32 0.0, %v3733
    %3735 = vmatmul.f32.gmra.mxu0 %v3587
    %v3736 = vpop.f32.mrf.mxu0
    %v3737 = vadd.f32 0.0, %v3736
    %3738 = vmatmul.f32.gmra.mxu0 %v3590
    %v3739 = vpop.f32.mrf.mxu0
    %v3740 = vadd.f32 0.0, %v3739
    %3741 = vmatmul.f32.gmra.mxu0 %v3593
    %v3742 = vpop.f32.mrf.mxu0
    %v3743 = vadd.f32 0.0, %v3742
    %3744 = vmatmul.f32.gmra.mxu0 %v3596
    %v3745 = vpop.f32.mrf.mxu0
    %v3746 = vadd.f32 0.0, %v3745
    %3747 = vmatmul.f32.gmra.mxu0 %v3599
    %v3748 = vpop.f32.mrf.mxu0
    %v3749 = vadd.f32 0.0, %v3748
    %3750 = vmatmul.f32.gmra.mxu0 %v3602
    %v3751 = vpop.f32.mrf.mxu0
    %v3752 = vadd.f32 0.0, %v3751
    %3753 = vmatmul.f32.gmra.mxu0 %v3605
    %v3754 = vpop.f32.mrf.mxu0
    %v3755 = vadd.f32 0.0, %v3754
    %3756 = vmatmul.f32.gmra.mxu0 %v3608
    %v3757 = vpop.f32.mrf.mxu0
    %v3758 = vadd.f32 0.0, %v3757
    %3759 = vmatmul.f32.gmra.mxu0 %v3611
    %v3760 = vpop.f32.mrf.mxu0
    %v3761 = vadd.f32 0.0, %v3760
    %3762 = vmatmul.f32.gmra.mxu0 %v3614
    %v3763 = vpop.f32.mrf.mxu0
    %v3764 = vadd.f32 0.0, %v3763
    %3765 = vmatmul.f32.gmra.mxu0 %v3617
    %v3766 = vpop.f32.mrf.mxu0
    %v3767 = vadd.f32 0.0, %v3766
    %3768 = vmatmul.f32.gmra.mxu0 %v3620
    %v3769 = vpop.f32.mrf.mxu0
    %v3770 = vadd.f32 0.0, %v3769
    %3771 = vmatmul.f32.gmra.mxu0 %v3623
    %v3772 = vpop.f32.mrf.mxu0
    %v3773 = vadd.f32 0.0, %v3772
    %3774 = vdwg.mxu0
    %3775 = vmatpush.msra.mxu0 %v3657
    %3776 = vmatpush.msra.mxu0 %v3656
    %3777 = vmatpush.msra.mxu0 %v3655
    %3778 = vmatpush.msra.mxu0 %v3654
    %3779 = vmatpush.msra.mxu0 %v3653
    %3780 = vmatpush.msra.mxu0 %v3652
    %3781 = vmatpush.msra.mxu0 %v3651
    %3782 = vmatpush.msra.mxu0 %v3650
    %3783 = vmatpush.msra.mxu0 %v3649
    %3784 = vmatpush.msra.mxu0 %v3648
    %3785 = vmatpush.msra.mxu0 %v3647
    %3786 = vmatpush.msra.mxu0 %v3646
    %3787 = vmatpush.msra.mxu0 %v3645
    %3788 = vmatpush.msra.mxu0 %v3644
    %3789 = vmatpush.msra.mxu0 %v3643
    %3790 = vmatpush.msra.mxu0 %v3642
    %3791 = vmatmul.f32.gmra.mxu0 %v3579
    %v3792 = vpop.f32.mrf.mxu0
    %v3793 = vadd.f32 %v3728, %v3792
    %3794 = vmatmul.f32.gmra.mxu0 %v3582
    %v3795 = vpop.f32.mrf.mxu0
    %v3796 = vadd.f32 %v3731, %v3795
    %3797 = vmatmul.f32.gmra.mxu0 %v3585
    %v3798 = vpop.f32.mrf.mxu0
    %v3799 = vadd.f32 %v3734, %v3798
    %3800 = vmatmul.f32.gmra.mxu0 %v3588
    %v3801 = vpop.f32.mrf.mxu0
    %v3802 = vadd.f32 %v3737, %v3801
    %3803 = vmatmul.f32.gmra.mxu0 %v3591
    %v3804 = vpop.f32.mrf.mxu0
    %v3805 = vadd.f32 %v3740, %v3804
    %3806 = vmatmul.f32.gmra.mxu0 %v3594
    %v3807 = vpop.f32.mrf.mxu0
    %v3808 = vadd.f32 %v3743, %v3807
    %3809 = vmatmul.f32.gmra.mxu0 %v3597
    %v3810 = vpop.f32.mrf.mxu0
    %v3811 = vadd.f32 %v3746, %v3810
    %3812 = vmatmul.f32.gmra.mxu0 %v3600
    %v3813 = vpop.f32.mrf.mxu0
    %v3814 = vadd.f32 %v3749, %v3813
    %3815 = vmatmul.f32.gmra.mxu0 %v3603
    %v3816 = vpop.f32.mrf.mxu0
    %v3817 = vadd.f32 %v3752, %v3816
    %3818 = vmatmul.f32.gmra.mxu0 %v3606
    %v3819 = vpop.f32.mrf.mxu0
    %v3820 = vadd.f32 %v3755, %v3819
    %3821 = vmatmul.f32.gmra.mxu0 %v3609
    %v3822 = vpop.f32.mrf.mxu0
    %v3823 = vadd.f32 %v3758, %v3822
    %3824 = vmatmul.f32.gmra.mxu0 %v3612
    %v3825 = vpop.f32.mrf.mxu0
    %v3826 = vadd.f32 %v3761, %v3825
    %3827 = vmatmul.f32.gmra.mxu0 %v3615
    %v3828 = vpop.f32.mrf.mxu0
    %v3829 = vadd.f32 %v3764, %v3828
    %3830 = vmatmul.f32.gmra.mxu0 %v3618
    %v3831 = vpop.f32.mrf.mxu0
    %v3832 = vadd.f32 %v3767, %v3831
    %3833 = vmatmul.f32.gmra.mxu0 %v3621
    %v3834 = vpop.f32.mrf.mxu0
    %v3835 = vadd.f32 %v3770, %v3834
    %3836 = vmatmul.f32.gmra.mxu0 %v3624
    %v3837 = vpop.f32.mrf.mxu0
    %v3838 = vadd.f32 %v3773, %v3837
    %3839 = vdwg.mxu0
    %3840 = vmatpush.msra.mxu0 0.0
    %3841 = vmatpush.msra.mxu0 0.0
    %3842 = vmatpush.msra.mxu0 0.0
    %3843 = vmatpush.msra.mxu0 0.0
    %3844 = vmatpush.msra.mxu0 0.0
    %3845 = vmatpush.msra.mxu0 0.0
    %3846 = vmatpush.msra.mxu0 0.0
    %3847 = vmatpush.msra.mxu0 0.0
    %3848 = vmatpush.msra.mxu0 0.0
    %3849 = vmatpush.msra.mxu0 0.0
    %3850 = vmatpush.msra.mxu0 0.0
    %3851 = vmatpush.msra.mxu0 0.0
    %3852 = vmatpush.msra.mxu0 %v3661
    %3853 = vmatpush.msra.mxu0 %v3660
    %3854 = vmatpush.msra.mxu0 %v3659
    %3855 = vmatpush.msra.mxu0 %v3658
    %3856 = vmatmul.f32.gmra.mxu0 %v3663
    %v3857 = vpop.f32.mrf.mxu0
    %v3858 = vadd.f32 %v3793, %v3857
    %3859 = vmatmul.f32.gmra.mxu0 %v3666
    %v3860 = vpop.f32.mrf.mxu0
    %v3861 = vadd.f32 %v3796, %v3860
    %3862 = vmatmul.f32.gmra.mxu0 %v3669
    %v3863 = vpop.f32.mrf.mxu0
    %v3864 = vadd.f32 %v3799, %v3863
    %3865 = vmatmul.f32.gmra.mxu0 %v3672
    %v3866 = vpop.f32.mrf.mxu0
    %v3867 = vadd.f32 %v3802, %v3866
    %3868 = vmatmul.f32.gmra.mxu0 %v3675
    %v3869 = vpop.f32.mrf.mxu0
    %v3870 = vadd.f32 %v3805, %v3869
    %3871 = vmatmul.f32.gmra.mxu0 %v3678
    %v3872 = vpop.f32.mrf.mxu0
    %v3873 = vadd.f32 %v3808, %v3872
    %3874 = vmatmul.f32.gmra.mxu0 %v3681
    %v3875 = vpop.f32.mrf.mxu0
    %v3876 = vadd.f32 %v3811, %v3875
    %3877 = vmatmul.f32.gmra.mxu0 %v3684
    %v3878 = vpop.f32.mrf.mxu0
    %v3879 = vadd.f32 %v3814, %v3878
    %3880 = vmatmul.f32.gmra.mxu0 %v3687
    %v3881 = vpop.f32.mrf.mxu0
    %v3882 = vadd.f32 %v3817, %v3881
    %3883 = vmatmul.f32.gmra.mxu0 %v3690
    %v3884 = vpop.f32.mrf.mxu0
    %v3885 = vadd.f32 %v3820, %v3884
    %3886 = vmatmul.f32.gmra.mxu0 %v3693
    %v3887 = vpop.f32.mrf.mxu0
    %v3888 = vadd.f32 %v3823, %v3887
    %3889 = vmatmul.f32.gmra.mxu0 %v3696
    %v3890 = vpop.f32.mrf.mxu0
    %v3891 = vadd.f32 %v3826, %v3890
    %3892 = vmatmul.f32.gmra.mxu0 %v3699
    %v3893 = vpop.f32.mrf.mxu0
    %v3894 = vadd.f32 %v3829, %v3893
    %3895 = vmatmul.f32.gmra.mxu0 %v3702
    %v3896 = vpop.f32.mrf.mxu0
    %v3897 = vadd.f32 %v3832, %v3896
    %3898 = vmatmul.f32.gmra.mxu0 %v3705
    %v3899 = vpop.f32.mrf.mxu0
    %v3900 = vadd.f32 %v3835, %v3899
    %3901 = vmatmul.f32.gmra.mxu0 %v3708
    %v3902 = vpop.f32.mrf.mxu0
    %v3903 = vadd.f32 %v3838, %v3902
    %3904 = vdwg.mxu0
    %v3905 = vld [vmem:[%s11] sm:$0x1]
    %v3907 = vperm.slane %v3905, 0
    %v3909 = vmul.f32 %v3858, %v3907
    %v3910 = vmul.f32 %v3861, %v3907
    %v3911 = vmul.f32 %v3864, %v3907
    %v3912 = vmul.f32 %v3867, %v3907
    %v3913 = vmul.f32 %v3870, %v3907
    %v3914 = vmul.f32 %v3873, %v3907
    %v3915 = vmul.f32 %v3876, %v3907
    %v3916 = vmul.f32 %v3879, %v3907
    %v3917 = vmul.f32 %v3882, %v3907
    %v3918 = vmul.f32 %v3885, %v3907
    %v3919 = vmul.f32 %v3888, %v3907
    %v3920 = vmul.f32 %v3891, %v3907
    %v3921 = vmul.f32 %v3894, %v3907
    %v3922 = vmul.f32 %v3897, %v3907
    %v3923 = vmul.f32 %v3900, %v3907
    %v3924 = vmul.f32 %v3903, %v3907
    %v3925 = vld [vmem:[%s12] sm:$0x1]
    %v3927 = vperm.slane %v3925, 0
    %v3929 = vadd.f32 %v3909, %v3927
    %v3930 = vadd.f32 %v3910, %v3927
    %v3931 = vadd.f32 %v3911, %v3927
    %v3932 = vadd.f32 %v3912, %v3927
    %v3933 = vadd.f32 %v3913, %v3927
    %v3934 = vadd.f32 %v3914, %v3927
    %v3935 = vadd.f32 %v3915, %v3927
    %v3936 = vadd.f32 %v3916, %v3927
    %v3937 = vadd.f32 %v3917, %v3927
    %v3938 = vadd.f32 %v3918, %v3927
    %v3939 = vadd.f32 %v3919, %v3927
    %v3940 = vadd.f32 %v3920, %v3927
    %v3941 = vadd.f32 %v3921, %v3927
    %v3942 = vadd.f32 %v3922, %v3927
    %v3943 = vadd.f32 %v3923, %v3927
    %v3944 = vadd.f32 %v3924, %v3927
    %v3945 = vmax.f32 %v3929, 0.0
    %v3946 = vmax.f32 %v3930, 0.0
    %v3947 = vmax.f32 %v3931, 0.0
    %v3948 = vmax.f32 %v3932, 0.0
    %v3949 = vmax.f32 %v3933, 0.0
    %v3950 = vmax.f32 %v3934, 0.0
    %v3951 = vmax.f32 %v3935, 0.0
    %v3952 = vmax.f32 %v3936, 0.0
    %v3953 = vmax.f32 %v3937, 0.0
    %v3954 = vmax.f32 %v3938, 0.0
    %v3955 = vmax.f32 %v3939, 0.0
    %v3956 = vmax.f32 %v3940, 0.0
    %v3957 = vmax.f32 %v3941, 0.0
    %v3958 = vmax.f32 %v3942, 0.0
    %v3959 = vmax.f32 %v3943, 0.0
    %v3960 = vmax.f32 %v3944, 0.0
    %vm3961 = vcmask 523264
    %3962 = vst.msk [vmem:[#allocation5] sm:$0xff] %vm3961, %v2810
    %3963 = vst.msk [vmem:[#allocation5 + $0x8] sm:$0xff] %vm3961, %v2811
    %3964 = vst.msk [vmem:[#allocation5 + $0x10] sm:$0xff] %vm3961, %v2812
    %3965 = vst.msk [vmem:[#allocation5 + $0x18] sm:$0xff] %vm3961, %v2813
    %3966 = vst.msk [vmem:[#allocation5 + $0x20] sm:$0xff] %vm3961, %v2814
    %3967 = vst.msk [vmem:[#allocation5 + $0x28] sm:$0xff] %vm3961, %v2815
    %3968 = vst.msk [vmem:[#allocation5 + $0x30] sm:$0xff] %vm3961, %v2816
    %3969 = vst.msk [vmem:[#allocation5 + $0x38] sm:$0xff] %vm3961, %v2817
    %3970 = vst.msk [vmem:[#allocation5 + $0x40] sm:$0xff] %vm3961, %v2818
    %3971 = vst.msk [vmem:[#allocation5 + $0x48] sm:$0xff] %vm3961, %v2819
    %3972 = vst.msk [vmem:[#allocation5 + $0x50] sm:$0xff] %vm3961, %v2820
    %3973 = vst.msk [vmem:[#allocation5 + $0x58] sm:$0xff] %vm3961, %v2821
    %3974 = vst.msk [vmem:[#allocation5 + $0x60] sm:$0xff] %vm3961, %v2822
    %3975 = vst.msk [vmem:[#allocation5 + $0x68] sm:$0xff] %vm3961, %v2823
    %3976 = vst.msk [vmem:[#allocation5 + $0x70] sm:$0xff] %vm3961, %v2824
    %3977 = vst.msk [vmem:[#allocation5 + $0x78] sm:$0xff] %vm3961, %v2825
    %3994 = vrot.lane.b32.xlu0 %v3945, 64
    %v3995 = vpop.permute.xlu0 %3994
    %3996 = vrot.lane.b32.xlu0 %v3946, 64
    %v3997 = vpop.permute.xlu0 %3996
    %3998 = vrot.lane.b32.xlu0 %v3947, 64
    %v3999 = vpop.permute.xlu0 %3998
    %4000 = vrot.lane.b32.xlu0 %v3948, 64
    %v4001 = vpop.permute.xlu0 %4000
    %4002 = vrot.lane.b32.xlu0 %v3949, 64
    %v4003 = vpop.permute.xlu0 %4002
    %4004 = vrot.lane.b32.xlu0 %v3950, 64
    %v4005 = vpop.permute.xlu0 %4004
    %4006 = vrot.lane.b32.xlu0 %v3951, 64
    %v4007 = vpop.permute.xlu0 %4006
    %4008 = vrot.lane.b32.xlu0 %v3952, 64
    %v4009 = vpop.permute.xlu0 %4008
    %4010 = vrot.lane.b32.xlu0 %v3953, 64
    %v4011 = vpop.permute.xlu0 %4010
    %4012 = vrot.lane.b32.xlu0 %v3954, 64
    %v4013 = vpop.permute.xlu0 %4012
    %4014 = vrot.lane.b32.xlu0 %v3955, 64
    %v4015 = vpop.permute.xlu0 %4014
    %4016 = vrot.lane.b32.xlu0 %v3956, 64
    %v4017 = vpop.permute.xlu0 %4016
    %4018 = vrot.lane.b32.xlu0 %v3957, 64
    %v4019 = vpop.permute.xlu0 %4018
    %4020 = vrot.lane.b32.xlu0 %v3958, 64
    %v4021 = vpop.permute.xlu0 %4020
    %4022 = vrot.lane.b32.xlu0 %v3959, 64
    %v4023 = vpop.permute.xlu0 %4022
    %4024 = vrot.lane.b32.xlu0 %v3960, 64
    %v4025 = vpop.permute.xlu0 %4024
    %4042 = vst.msk [vmem:[#allocation5] sm:$0xff] %vm703, %v3995
    %4043 = vst.msk [vmem:[#allocation5 + $0x8] sm:$0xff] %vm703, %v3997
    %4044 = vst.msk [vmem:[#allocation5 + $0x10] sm:$0xff] %vm703, %v3999
    %4045 = vst.msk [vmem:[#allocation5 + $0x18] sm:$0xff] %vm703, %v4001
    %4046 = vst.msk [vmem:[#allocation5 + $0x20] sm:$0xff] %vm703, %v4003
    %4047 = vst.msk [vmem:[#allocation5 + $0x28] sm:$0xff] %vm703, %v4005
    %4048 = vst.msk [vmem:[#allocation5 + $0x30] sm:$0xff] %vm703, %v4007
    %4049 = vst.msk [vmem:[#allocation5 + $0x38] sm:$0xff] %vm703, %v4009
    %4050 = vst.msk [vmem:[#allocation5 + $0x40] sm:$0xff] %vm703, %v4011
    %4051 = vst.msk [vmem:[#allocation5 + $0x48] sm:$0xff] %vm703, %v4013
    %4052 = vst.msk [vmem:[#allocation5 + $0x50] sm:$0xff] %vm703, %v4015
    %4053 = vst.msk [vmem:[#allocation5 + $0x58] sm:$0xff] %vm703, %v4017
    %4054 = vst.msk [vmem:[#allocation5 + $0x60] sm:$0xff] %vm703, %v4019
    %4055 = vst.msk [vmem:[#allocation5 + $0x68] sm:$0xff] %vm703, %v4021
    %4056 = vst.msk [vmem:[#allocation5 + $0x70] sm:$0xff] %vm703, %v4023
    %4057 = vst.msk [vmem:[#allocation5 + $0x78] sm:$0xff] %vm703, %v4025
    %4058 = vrot.lane.b32.xlu0 %v460, 32
    %v4059 = vpop.permute.xlu0 %4058
    %4060 = vrot.lane.b32.xlu0 %v461, 32
    %v4061 = vpop.permute.xlu0 %4060
    %4062 = vrot.lane.b32.xlu0 %v462, 32
    %v4063 = vpop.permute.xlu0 %4062
    %4064 = vrot.lane.b32.xlu0 %v463, 32
    %v4065 = vpop.permute.xlu0 %4064
    %4066 = vrot.lane.b32.xlu0 %v464, 32
    %v4067 = vpop.permute.xlu0 %4066
    %4068 = vrot.lane.b32.xlu0 %v465, 32
    %v4069 = vpop.permute.xlu0 %4068
    %4070 = vrot.lane.b32.xlu0 %v466, 32
    %v4071 = vpop.permute.xlu0 %4070
    %4072 = vrot.lane.b32.xlu0 %v467, 32
    %v4073 = vpop.permute.xlu0 %4072
    %4074 = vrot.lane.b32.xlu0 %v468, 32
    %v4075 = vpop.permute.xlu0 %4074
    %4076 = vrot.lane.b32.xlu0 %v469, 32
    %v4077 = vpop.permute.xlu0 %4076
    %4078 = vrot.lane.b32.xlu0 %v470, 32
    %v4079 = vpop.permute.xlu0 %4078
    %4080 = vrot.lane.b32.xlu0 %v471, 32
    %v4081 = vpop.permute.xlu0 %4080
    %4082 = vrot.lane.b32.xlu0 %v472, 32
    %v4083 = vpop.permute.xlu0 %4082
    %4084 = vrot.lane.b32.xlu0 %v473, 32
    %v4085 = vpop.permute.xlu0 %4084
    %4086 = vrot.lane.b32.xlu0 %v474, 32
    %v4087 = vpop.permute.xlu0 %4086
    %4088 = vrot.lane.b32.xlu0 %v475, 32
    %v4089 = vpop.permute.xlu0 %4088
    %4106 = vst.msk [vmem:[#allocation5] sm:$0xff] %vm800, %v4059
    %4107 = vst.msk [vmem:[#allocation5 + $0x8] sm:$0xff] %vm800, %v4061
    %4108 = vst.msk [vmem:[#allocation5 + $0x10] sm:$0xff] %vm800, %v4063
    %4109 = vst.msk [vmem:[#allocation5 + $0x18] sm:$0xff] %vm800, %v4065
    %4110 = vst.msk [vmem:[#allocation5 + $0x20] sm:$0xff] %vm800, %v4067
    %4111 = vst.msk [vmem:[#allocation5 + $0x28] sm:$0xff] %vm800, %v4069
    %4112 = vst.msk [vmem:[#allocation5 + $0x30] sm:$0xff] %vm800, %v4071
    %4113 = vst.msk [vmem:[#allocation5 + $0x38] sm:$0xff] %vm800, %v4073
    %4114 = vst.msk [vmem:[#allocation5 + $0x40] sm:$0xff] %vm800, %v4075
    %4115 = vst.msk [vmem:[#allocation5 + $0x48] sm:$0xff] %vm800, %v4077
    %4116 = vst.msk [vmem:[#allocation5 + $0x50] sm:$0xff] %vm800, %v4079
    %4117 = vst.msk [vmem:[#allocation5 + $0x58] sm:$0xff] %vm800, %v4081
    %4118 = vst.msk [vmem:[#allocation5 + $0x60] sm:$0xff] %vm800, %v4083
    %4119 = vst.msk [vmem:[#allocation5 + $0x68] sm:$0xff] %vm800, %v4085
    %4120 = vst.msk [vmem:[#allocation5 + $0x70] sm:$0xff] %vm800, %v4087
    %4121 = vst.msk [vmem:[#allocation5 + $0x78] sm:$0xff] %vm800, %v4089
    %v4122 = vld [vmem:[#allocation5] sm:$0xff]
    %v4123 = vld [vmem:[#allocation5 + $0x8] sm:$0xff]
    %v4124 = vld [vmem:[#allocation5 + $0x10] sm:$0xff]
    %v4125 = vld [vmem:[#allocation5 + $0x18] sm:$0xff]
    %v4126 = vld [vmem:[#allocation5 + $0x20] sm:$0xff]
    %v4127 = vld [vmem:[#allocation5 + $0x28] sm:$0xff]
    %v4128 = vld [vmem:[#allocation5 + $0x30] sm:$0xff]
    %v4129 = vld [vmem:[#allocation5 + $0x38] sm:$0xff]
    %v4130 = vld [vmem:[#allocation5 + $0x40] sm:$0xff]
    %v4131 = vld [vmem:[#allocation5 + $0x48] sm:$0xff]
    %v4132 = vld [vmem:[#allocation5 + $0x50] sm:$0xff]
    %v4133 = vld [vmem:[#allocation5 + $0x58] sm:$0xff]
    %v4134 = vld [vmem:[#allocation5 + $0x60] sm:$0xff]
    %v4135 = vld [vmem:[#allocation5 + $0x68] sm:$0xff]
    %v4136 = vld [vmem:[#allocation5 + $0x70] sm:$0xff]
    %v4137 = vld [vmem:[#allocation5 + $0x78] sm:$0xff]
    %v4138 = vld [vmem:[%s13] sm:$0xff]
    %v4139 = vld [vmem:[%s13 + $0x8] sm:$0xff]
    %v4140 = vld [vmem:[%s13 + $0x10] sm:$0xff]
    %v4141 = vld [vmem:[%s13 + $0x18] sm:$0xff]
    %v4142 = vld [vmem:[%s13 + $0x20] sm:$0xff]
    %v4143 = vld [vmem:[%s13 + $0x28] sm:$0xff]
    %v4144 = vld [vmem:[%s13 + $0x30] sm:$0xff]
    %v4145 = vld [vmem:[%s13 + $0x38] sm:$0xff]
    %v4146 = vld [vmem:[%s13 + $0x40] sm:$0xff]
    %v4147 = vld [vmem:[%s13 + $0x48] sm:$0xff]
    %v4148 = vld [vmem:[%s13 + $0x50] sm:$0xff]
    %v4149 = vld [vmem:[%s13 + $0x58] sm:$0xff]
    %v4150 = vld [vmem:[%s13 + $0x60] sm:$0xff]
    %v4151 = vld [vmem:[%s13 + $0x68] sm:$0xff]
    %v4152 = vld [vmem:[%s13 + $0x70] sm:$0xff]
    %v4153 = vld [vmem:[%s13 + $0x78] sm:$0xff]
    %v4154 = vld [vmem:[%s13 + $0x80] sm:$0xff]
    %v4155 = vld [vmem:[%s13 + $0x88] sm:$0xff]
    %v4156 = vld [vmem:[%s13 + $0x90] sm:$0xff]
    %v4157 = vld [vmem:[%s13 + $0x98] sm:$0xff]
    %v4158 = vld [vmem:[%s13 + $0xa0] sm:$0xff]
    %v4159 = vld [vmem:[%s13 + $0xa8] sm:$0xff]
    %v4160 = vld [vmem:[%s13 + $0xb0] sm:$0xff]
    %v4161 = vld [vmem:[%s13 + $0xb8] sm:$0xff]
    %v4162 = vld [vmem:[%s13 + $0xc0] sm:$0xff]
    %v4163 = vld [vmem:[%s13 + $0xc8] sm:$0xff]
    %v4164 = vld [vmem:[%s13 + $0xd0] sm:$0xff]
    %v4165 = vld [vmem:[%s13 + $0xd8] sm:$0xff]
    %v4166 = vld [vmem:[%s13 + $0xe0] sm:$0xff]
    %v4167 = vld [vmem:[%s13 + $0xe8] sm:$0xff]
    %v4168 = vld [vmem:[%s13 + $0xf0] sm:$0xff]
    %v4169 = vld [vmem:[%s13 + $0xf8] sm:$0xff]
    %v4170 = vld [vmem:[%s13 + $0x100] sm:$0xff]
    %v4171 = vld [vmem:[%s13 + $0x108] sm:$0xff]
    %v4172 = vld [vmem:[%s13 + $0x110] sm:$0xff]
    %v4173 = vld [vmem:[%s13 + $0x118] sm:$0xff]
    %v4174 = vld [vmem:[%s13 + $0x120] sm:$0xff]
    %v4175 = vld [vmem:[%s13 + $0x128] sm:$0xff]
    %v4176 = vld [vmem:[%s13 + $0x130] sm:$0xff]
    %v4177 = vld [vmem:[%s13 + $0x138] sm:$0xff]
    %v4178 = vld [vmem:[%s13 + $0x140] sm:$0xff]
    %v4179 = vld [vmem:[%s13 + $0x148] sm:$0xff]
    %v4180 = vld [vmem:[%s13 + $0x150] sm:$0xff]
    %v4181 = vld [vmem:[%s13 + $0x158] sm:$0xff]
    %v4182 = vld [vmem:[%s13 + $0x160] sm:$0xff]
    %v4183 = vld [vmem:[%s13 + $0x168] sm:$0xff]
    %v4184 = vld [vmem:[%s13 + $0x170] sm:$0xff]
    %v4185 = vld [vmem:[%s13 + $0x178] sm:$0xff]
    %4186 = vmatpush.msra.mxu0 %v4183
    %4187 = vmatpush.msra.mxu0 %v4180
    %4188 = vmatpush.msra.mxu0 %v4177
    %4189 = vmatpush.msra.mxu0 %v4174
    %4190 = vmatpush.msra.mxu0 %v4171
    %4191 = vmatpush.msra.mxu0 %v4168
    %4192 = vmatpush.msra.mxu0 %v4165
    %4193 = vmatpush.msra.mxu0 %v4162
    %4194 = vmatpush.msra.mxu0 %v4159
    %4195 = vmatpush.msra.mxu0 %v4156
    %4196 = vmatpush.msra.mxu0 %v4153
    %4197 = vmatpush.msra.mxu0 %v4150
    %4198 = vmatpush.msra.mxu0 %v4147
    %4199 = vmatpush.msra.mxu0 %v4144
    %4200 = vmatpush.msra.mxu0 %v4141
    %4201 = vmatpush.msra.mxu0 %v4138
    %4202 = vmatmul.f32.gmra.mxu0 %v4122
    %v4203 = vpop.f32.mrf.mxu0
    %v4204 = vadd.f32 0.0, %v4203
    %4205 = vmatmul.f32.gmra.mxu0 %v4123
    %v4206 = vpop.f32.mrf.mxu0
    %v4207 = vadd.f32 0.0, %v4206
    %4208 = vmatmul.f32.gmra.mxu0 %v4124
    %v4209 = vpop.f32.mrf.mxu0
    %v4210 = vadd.f32 0.0, %v4209
    %4211 = vmatmul.f32.gmra.mxu0 %v4125
    %v4212 = vpop.f32.mrf.mxu0
    %v4213 = vadd.f32 0.0, %v4212
    %4214 = vmatmul.f32.gmra.mxu0 %v4126
    %v4215 = vpop.f32.mrf.mxu0
    %v4216 = vadd.f32 0.0, %v4215
    %4217 = vmatmul.f32.gmra.mxu0 %v4127
    %v4218 = vpop.f32.mrf.mxu0
    %v4219 = vadd.f32 0.0, %v4218
    %4220 = vmatmul.f32.gmra.mxu0 %v4128
    %v4221 = vpop.f32.mrf.mxu0
    %v4222 = vadd.f32 0.0, %v4221
    %4223 = vmatmul.f32.gmra.mxu0 %v4129
    %v4224 = vpop.f32.mrf.mxu0
    %v4225 = vadd.f32 0.0, %v4224
    %4226 = vmatmul.f32.gmra.mxu0 %v4130
    %v4227 = vpop.f32.mrf.mxu0
    %v4228 = vadd.f32 0.0, %v4227
    %4229 = vmatmul.f32.gmra.mxu0 %v4131
    %v4230 = vpop.f32.mrf.mxu0
    %v4231 = vadd.f32 0.0, %v4230
    %4232 = vmatmul.f32.gmra.mxu0 %v4132
    %v4233 = vpop.f32.mrf.mxu0
    %v4234 = vadd.f32 0.0, %v4233
    %4235 = vmatmul.f32.gmra.mxu0 %v4133
    %v4236 = vpop.f32.mrf.mxu0
    %v4237 = vadd.f32 0.0, %v4236
    %4238 = vmatmul.f32.gmra.mxu0 %v4134
    %v4239 = vpop.f32.mrf.mxu0
    %v4240 = vadd.f32 0.0, %v4239
    %4241 = vmatmul.f32.gmra.mxu0 %v4135
    %v4242 = vpop.f32.mrf.mxu0
    %v4243 = vadd.f32 0.0, %v4242
    %4244 = vmatmul.f32.gmra.mxu0 %v4136
    %v4245 = vpop.f32.mrf.mxu0
    %v4246 = vadd.f32 0.0, %v4245
    %4247 = vmatmul.f32.gmra.mxu0 %v4137
    %v4248 = vpop.f32.mrf.mxu0
    %v4249 = vadd.f32 0.0, %v4248
    %4250 = vdwg.mxu0
    %4251 = vmatpush.msra.mxu0 %v4184
    %4252 = vmatpush.msra.mxu0 %v4181
    %4253 = vmatpush.msra.mxu0 %v4178
    %4254 = vmatpush.msra.mxu0 %v4175
    %4255 = vmatpush.msra.mxu0 %v4172
    %4256 = vmatpush.msra.mxu0 %v4169
    %4257 = vmatpush.msra.mxu0 %v4166
    %4258 = vmatpush.msra.mxu0 %v4163
    %4259 = vmatpush.msra.mxu0 %v4160
    %4260 = vmatpush.msra.mxu0 %v4157
    %4261 = vmatpush.msra.mxu0 %v4154
    %4262 = vmatpush.msra.mxu0 %v4151
    %4263 = vmatpush.msra.mxu0 %v4148
    %4264 = vmatpush.msra.mxu0 %v4145
    %4265 = vmatpush.msra.mxu0 %v4142
    %4266 = vmatpush.msra.mxu0 %v4139
    %4267 = vmatmul.f32.gmra.mxu0 %v4122
    %v4268 = vpop.f32.mrf.mxu0
    %v4269 = vadd.f32 0.0, %v4268
    %4270 = vmatmul.f32.gmra.mxu0 %v4123
    %v4271 = vpop.f32.mrf.mxu0
    %v4272 = vadd.f32 0.0, %v4271
    %4273 = vmatmul.f32.gmra.mxu0 %v4124
    %v4274 = vpop.f32.mrf.mxu0
    %v4275 = vadd.f32 0.0, %v4274
    %4276 = vmatmul.f32.gmra.mxu0 %v4125
    %v4277 = vpop.f32.mrf.mxu0
    %v4278 = vadd.f32 0.0, %v4277
    %4279 = vmatmul.f32.gmra.mxu0 %v4126
    %v4280 = vpop.f32.mrf.mxu0
    %v4281 = vadd.f32 0.0, %v4280
    %4282 = vmatmul.f32.gmra.mxu0 %v4127
    %v4283 = vpop.f32.mrf.mxu0
    %v4284 = vadd.f32 0.0, %v4283
    %4285 = vmatmul.f32.gmra.mxu0 %v4128
    %v4286 = vpop.f32.mrf.mxu0
    %v4287 = vadd.f32 0.0, %v4286
    %4288 = vmatmul.f32.gmra.mxu0 %v4129
    %v4289 = vpop.f32.mrf.mxu0
    %v4290 = vadd.f32 0.0, %v4289
    %4291 = vmatmul.f32.gmra.mxu0 %v4130
    %v4292 = vpop.f32.mrf.mxu0
    %v4293 = vadd.f32 0.0, %v4292
    %4294 = vmatmul.f32.gmra.mxu0 %v4131
    %v4295 = vpop.f32.mrf.mxu0
    %v4296 = vadd.f32 0.0, %v4295
    %4297 = vmatmul.f32.gmra.mxu0 %v4132
    %v4298 = vpop.f32.mrf.mxu0
    %v4299 = vadd.f32 0.0, %v4298
    %4300 = vmatmul.f32.gmra.mxu0 %v4133
    %v4301 = vpop.f32.mrf.mxu0
    %v4302 = vadd.f32 0.0, %v4301
    %4303 = vmatmul.f32.gmra.mxu0 %v4134
    %v4304 = vpop.f32.mrf.mxu0
    %v4305 = vadd.f32 0.0, %v4304
    %4306 = vmatmul.f32.gmra.mxu0 %v4135
    %v4307 = vpop.f32.mrf.mxu0
    %v4308 = vadd.f32 0.0, %v4307
    %4309 = vmatmul.f32.gmra.mxu0 %v4136
    %v4310 = vpop.f32.mrf.mxu0
    %v4311 = vadd.f32 0.0, %v4310
    %4312 = vmatmul.f32.gmra.mxu0 %v4137
    %v4313 = vpop.f32.mrf.mxu0
    %v4314 = vadd.f32 0.0, %v4313
    %4315 = vdwg.mxu0
    %4316 = vmatpush.msra.mxu0 %v4185
    %4317 = vmatpush.msra.mxu0 %v4182
    %4318 = vmatpush.msra.mxu0 %v4179
    %4319 = vmatpush.msra.mxu0 %v4176
    %4320 = vmatpush.msra.mxu0 %v4173
    %4321 = vmatpush.msra.mxu0 %v4170
    %4322 = vmatpush.msra.mxu0 %v4167
    %4323 = vmatpush.msra.mxu0 %v4164
    %4324 = vmatpush.msra.mxu0 %v4161
    %4325 = vmatpush.msra.mxu0 %v4158
    %4326 = vmatpush.msra.mxu0 %v4155
    %4327 = vmatpush.msra.mxu0 %v4152
    %4328 = vmatpush.msra.mxu0 %v4149
    %4329 = vmatpush.msra.mxu0 %v4146
    %4330 = vmatpush.msra.mxu0 %v4143
    %4331 = vmatpush.msra.mxu0 %v4140
    %4332 = vmatmul.f32.gmra.mxu0 %v4122
    %v4333 = vpop.f32.mrf.mxu0
    %v4334 = vadd.f32 0.0, %v4333
    %4335 = vmatmul.f32.gmra.mxu0 %v4123
    %v4336 = vpop.f32.mrf.mxu0
    %v4337 = vadd.f32 0.0, %v4336
    %4338 = vmatmul.f32.gmra.mxu0 %v4124
    %v4339 = vpop.f32.mrf.mxu0
    %v4340 = vadd.f32 0.0, %v4339
    %4341 = vmatmul.f32.gmra.mxu0 %v4125
    %v4342 = vpop.f32.mrf.mxu0
    %v4343 = vadd.f32 0.0, %v4342
    %4344 = vmatmul.f32.gmra.mxu0 %v4126
    %v4345 = vpop.f32.mrf.mxu0
    %v4346 = vadd.f32 0.0, %v4345
    %4347 = vmatmul.f32.gmra.mxu0 %v4127
    %v4348 = vpop.f32.mrf.mxu0
    %v4349 = vadd.f32 0.0, %v4348
    %4350 = vmatmul.f32.gmra.mxu0 %v4128
    %v4351 = vpop.f32.mrf.mxu0
    %v4352 = vadd.f32 0.0, %v4351
    %4353 = vmatmul.f32.gmra.mxu0 %v4129
    %v4354 = vpop.f32.mrf.mxu0
    %v4355 = vadd.f32 0.0, %v4354
    %4356 = vmatmul.f32.gmra.mxu0 %v4130
    %v4357 = vpop.f32.mrf.mxu0
    %v4358 = vadd.f32 0.0, %v4357
    %4359 = vmatmul.f32.gmra.mxu0 %v4131
    %v4360 = vpop.f32.mrf.mxu0
    %v4361 = vadd.f32 0.0, %v4360
    %4362 = vmatmul.f32.gmra.mxu0 %v4132
    %v4363 = vpop.f32.mrf.mxu0
    %v4364 = vadd.f32 0.0, %v4363
    %4365 = vmatmul.f32.gmra.mxu0 %v4133
    %v4366 = vpop.f32.mrf.mxu0
    %v4367 = vadd.f32 0.0, %v4366
    %4368 = vmatmul.f32.gmra.mxu0 %v4134
    %v4369 = vpop.f32.mrf.mxu0
    %v4370 = vadd.f32 0.0, %v4369
    %4371 = vmatmul.f32.gmra.mxu0 %v4135
    %v4372 = vpop.f32.mrf.mxu0
    %v4373 = vadd.f32 0.0, %v4372
    %4374 = vmatmul.f32.gmra.mxu0 %v4136
    %v4375 = vpop.f32.mrf.mxu0
    %v4376 = vadd.f32 0.0, %v4375
    %4377 = vmatmul.f32.gmra.mxu0 %v4137
    %v4378 = vpop.f32.mrf.mxu0
    %v4379 = vadd.f32 0.0, %v4378
    %4380 = vdwg.mxu0
    %v4381 = vld [vmem:[%s14] sm:$0x7]
    %v4383 = vperm.slane %v4381, 0
    %v4384 = vperm.slane %v4381, 1
    %v4385 = vperm.slane %v4381, 2
    %v4389 = vmul.f32 %v4204, %v4383
    %v4390 = vmul.f32 %v4269, %v4384
    %v4391 = vmul.f32 %v4334, %v4385
    %v4392 = vmul.f32 %v4207, %v4383
    %v4393 = vmul.f32 %v4272, %v4384
    %v4394 = vmul.f32 %v4337, %v4385
    %v4395 = vmul.f32 %v4210, %v4383
    %v4396 = vmul.f32 %v4275, %v4384
    %v4397 = vmul.f32 %v4340, %v4385
    %v4398 = vmul.f32 %v4213, %v4383
    %v4399 = vmul.f32 %v4278, %v4384
    %v4400 = vmul.f32 %v4343, %v4385
    %v4401 = vmul.f32 %v4216, %v4383
    %v4402 = vmul.f32 %v4281, %v4384
    %v4403 = vmul.f32 %v4346, %v4385
    %v4404 = vmul.f32 %v4219, %v4383
    %v4405 = vmul.f32 %v4284, %v4384
    %v4406 = vmul.f32 %v4349, %v4385
    %v4407 = vmul.f32 %v4222, %v4383
    %v4408 = vmul.f32 %v4287, %v4384
    %v4409 = vmul.f32 %v4352, %v4385
    %v4410 = vmul.f32 %v4225, %v4383
    %v4411 = vmul.f32 %v4290, %v4384
    %v4412 = vmul.f32 %v4355, %v4385
    %v4413 = vmul.f32 %v4228, %v4383
    %v4414 = vmul.f32 %v4293, %v4384
    %v4415 = vmul.f32 %v4358, %v4385
    %v4416 = vmul.f32 %v4231, %v4383
    %v4417 = vmul.f32 %v4296, %v4384
    %v4418 = vmul.f32 %v4361, %v4385
    %v4419 = vmul.f32 %v4234, %v4383
    %v4420 = vmul.f32 %v4299, %v4384
    %v4421 = vmul.f32 %v4364, %v4385
    %v4422 = vmul.f32 %v4237, %v4383
    %v4423 = vmul.f32 %v4302, %v4384
    %v4424 = vmul.f32 %v4367, %v4385
    %v4425 = vmul.f32 %v4240, %v4383
    %v4426 = vmul.f32 %v4305, %v4384
    %v4427 = vmul.f32 %v4370, %v4385
    %v4428 = vmul.f32 %v4243, %v4383
    %v4429 = vmul.f32 %v4308, %v4384
    %v4430 = vmul.f32 %v4373, %v4385
    %v4431 = vmul.f32 %v4246, %v4383
    %v4432 = vmul.f32 %v4311, %v4384
    %v4433 = vmul.f32 %v4376, %v4385
    %v4434 = vmul.f32 %v4249, %v4383
    %v4435 = vmul.f32 %v4314, %v4384
    %v4436 = vmul.f32 %v4379, %v4385
    %v4437 = vld [vmem:[%s15] sm:$0x7]
    %v4439 = vperm.slane %v4437, 0
    %v4440 = vperm.slane %v4437, 1
    %v4441 = vperm.slane %v4437, 2
    %v4445 = vadd.f32 %v4389, %v4439
    %v4446 = vadd.f32 %v4390, %v4440
    %v4447 = vadd.f32 %v4391, %v4441
    %v4448 = vadd.f32 %v4392, %v4439
    %v4449 = vadd.f32 %v4393, %v4440
    %v4450 = vadd.f32 %v4394, %v4441
    %v4451 = vadd.f32 %v4395, %v4439
    %v4452 = vadd.f32 %v4396, %v4440
    %v4453 = vadd.f32 %v4397, %v4441
    %v4454 = vadd.f32 %v4398, %v4439
    %v4455 = vadd.f32 %v4399, %v4440
    %v4456 = vadd.f32 %v4400, %v4441
    %v4457 = vadd.f32 %v4401, %v4439
    %v4458 = vadd.f32 %v4402, %v4440
    %v4459 = vadd.f32 %v4403, %v4441
    %v4460 = vadd.f32 %v4404, %v4439
    %v4461 = vadd.f32 %v4405, %v4440
    %v4462 = vadd.f32 %v4406, %v4441
    %v4463 = vadd.f32 %v4407, %v4439
    %v4464 = vadd.f32 %v4408, %v4440
    %v4465 = vadd.f32 %v4409, %v4441
    %v4466 = vadd.f32 %v4410, %v4439
    %v4467 = vadd.f32 %v4411, %v4440
    %v4468 = vadd.f32 %v4412, %v4441
    %v4469 = vadd.f32 %v4413, %v4439
    %v4470 = vadd.f32 %v4414, %v4440
    %v4471 = vadd.f32 %v4415, %v4441
    %v4472 = vadd.f32 %v4416, %v4439
    %v4473 = vadd.f32 %v4417, %v4440
    %v4474 = vadd.f32 %v4418, %v4441
    %v4475 = vadd.f32 %v4419, %v4439
    %v4476 = vadd.f32 %v4420, %v4440
    %v4477 = vadd.f32 %v4421, %v4441
    %v4478 = vadd.f32 %v4422, %v4439
    %v4479 = vadd.f32 %v4423, %v4440
    %v4480 = vadd.f32 %v4424, %v4441
    %v4481 = vadd.f32 %v4425, %v4439
    %v4482 = vadd.f32 %v4426, %v4440
    %v4483 = vadd.f32 %v4427, %v4441
    %v4484 = vadd.f32 %v4428, %v4439
    %v4485 = vadd.f32 %v4429, %v4440
    %v4486 = vadd.f32 %v4430, %v4441
    %v4487 = vadd.f32 %v4431, %v4439
    %v4488 = vadd.f32 %v4432, %v4440
    %v4489 = vadd.f32 %v4433, %v4441
    %v4490 = vadd.f32 %v4434, %v4439
    %v4491 = vadd.f32 %v4435, %v4440
    %v4492 = vadd.f32 %v4436, %v4441
    %4493 = vst [vmem:[#allocation6] sm:$0xff] %v4445
    %4494 = vst [vmem:[#allocation6 + $0x8] sm:$0xff] %v4446
    %4495 = vst [vmem:[#allocation6 + $0x10] sm:$0xff] %v4447
    %4496 = vst [vmem:[#allocation6 + $0x18] sm:$0xff] %v4448
    %4497 = vst [vmem:[#allocation6 + $0x20] sm:$0xff] %v4449
    %4498 = vst [vmem:[#allocation6 + $0x28] sm:$0xff] %v4450
    %4499 = vst [vmem:[#allocation6 + $0x30] sm:$0xff] %v4451
    %4500 = vst [vmem:[#allocation6 + $0x38] sm:$0xff] %v4452
    %4501 = vst [vmem:[#allocation6 + $0x40] sm:$0xff] %v4453
    %4502 = vst [vmem:[#allocation6 + $0x48] sm:$0xff] %v4454
    %4503 = vst [vmem:[#allocation6 + $0x50] sm:$0xff] %v4455
    %4504 = vst [vmem:[#allocation6 + $0x58] sm:$0xff] %v4456
    %4505 = vst [vmem:[#allocation6 + $0x60] sm:$0xff] %v4457
    %4506 = vst [vmem:[#allocation6 + $0x68] sm:$0xff] %v4458
    %4507 = vst [vmem:[#allocation6 + $0x70] sm:$0xff] %v4459
    %4508 = vst [vmem:[#allocation6 + $0x78] sm:$0xff] %v4460
    %4509 = vst [vmem:[#allocation6 + $0x80] sm:$0xff] %v4461
    %4510 = vst [vmem:[#allocation6 + $0x88] sm:$0xff] %v4462
    %4511 = vst [vmem:[#allocation6 + $0x90] sm:$0xff] %v4463
    %4512 = vst [vmem:[#allocation6 + $0x98] sm:$0xff] %v4464
    %4513 = vst [vmem:[#allocation6 + $0xa0] sm:$0xff] %v4465
    %4514 = vst [vmem:[#allocation6 + $0xa8] sm:$0xff] %v4466
    %4515 = vst [vmem:[#allocation6 + $0xb0] sm:$0xff] %v4467
    %4516 = vst [vmem:[#allocation6 + $0xb8] sm:$0xff] %v4468
    %4517 = vst [vmem:[#allocation6 + $0xc0] sm:$0xff] %v4469
    %4518 = vst [vmem:[#allocation6 + $0xc8] sm:$0xff] %v4470
    %4519 = vst [vmem:[#allocation6 + $0xd0] sm:$0xff] %v4471
    %4520 = vst [vmem:[#allocation6 + $0xd8] sm:$0xff] %v4472
    %4521 = vst [vmem:[#allocation6 + $0xe0] sm:$0xff] %v4473
    %4522 = vst [vmem:[#allocation6 + $0xe8] sm:$0xff] %v4474
    %4523 = vst [vmem:[#allocation6 + $0xf0] sm:$0xff] %v4475
    %4524 = vst [vmem:[#allocation6 + $0xf8] sm:$0xff] %v4476
    %4525 = vst [vmem:[#allocation6 + $0x100] sm:$0xff] %v4477
    %4526 = vst [vmem:[#allocation6 + $0x108] sm:$0xff] %v4478
    %4527 = vst [vmem:[#allocation6 + $0x110] sm:$0xff] %v4479
    %4528 = vst [vmem:[#allocation6 + $0x118] sm:$0xff] %v4480
    %4529 = vst [vmem:[#allocation6 + $0x120] sm:$0xff] %v4481
    %4530 = vst [vmem:[#allocation6 + $0x128] sm:$0xff] %v4482
    %4531 = vst [vmem:[#allocation6 + $0x130] sm:$0xff] %v4483
    %4532 = vst [vmem:[#allocation6 + $0x138] sm:$0xff] %v4484
    %4533 = vst [vmem:[#allocation6 + $0x140] sm:$0xff] %v4485
    %4534 = vst [vmem:[#allocation6 + $0x148] sm:$0xff] %v4486
    %4535 = vst [vmem:[#allocation6 + $0x150] sm:$0xff] %v4487
    %4536 = vst [vmem:[#allocation6 + $0x158] sm:$0xff] %v4488
    %4537 = vst [vmem:[#allocation6 + $0x160] sm:$0xff] %v4489
    %4538 = vst [vmem:[#allocation6 + $0x168] sm:$0xff] %v4490
    %4539 = vst [vmem:[#allocation6 + $0x170] sm:$0xff] %v4491
    %4540 = vst [vmem:[#allocation6 + $0x178] sm:$0xff] %v4492
    // Predicated region
    $region66: #{tpu_custom_call.1} parent=1 // pred_check
      _
    $region67: #{tpu_custom_call.1} parent=1 // pred_check_branch
      %4542 = sbr.rel (0) target = $region69
    $region68: #{tpu_custom_call.1} parent=1 // pred_region
      %4544 = vsyncadd [#allocation7], 0
      %s4545 = sshll.u32 [#allocation6], 4
      %s4546 = int_to_ptr.vmem [resolvable:$true] %s4545
      %s4547 = sshll.u32 %s16, 4
      %s4548 = int_to_ptr.hbm [resolvable:$true] %s4547
      %4553 = dma.vmem_to_hbm [thread:$0]  %s4546, 6144, %s4548, [#allocation7], 384, 384, 24
    $region69: #{tpu_custom_call.1} parent=1 // pred_fallthru
      _
    // Predicated region
    $region70: #{tpu_custom_call.1} parent=1 // pred_check
      _
    $region71: #{tpu_custom_call.1} parent=1 // pred_check_branch
      %4555 = sbr.rel (0) target = $region73
    $region72: #{tpu_custom_call.1} parent=1 // pred_region
      %4557 = dma.done [#allocation7], 6144
    $region73: #{tpu_custom_call.1} parent=1 // pred_fallthru
      _
    %4558 = vsyncpa [#allocation7], 1

</llo_original>
